<compile_context>
chip_gen: v7x
topology: tpu7x:2x2x1
jax: 0.10.0
libtpu: 0.0.40
codegen_flags: <defaults>
</compile_context>

<pallas_src>
import jax
import jax.numpy as jnp
from jax.experimental import pallas as pl
from jax.experimental.pallas import tpu as pltpu

NUM_CLASSES = 10
CONV_CH = 30          # convLayerSize
HIDDEN = 100
EPS = 1e-5            # BatchNorm2d default eps
LEAK = 0.001          # LeakyReLU negative_slope (explicit in the module)


def _leaky(x):
    return jnp.where(x > 0, x, LEAK * x)


def _round_up(n, m):
    return ((n + m - 1) // m) * m


# --------------------- single fused forward kernel ---------------------
def _make_kernel(n_real, n_pad):
    """Fused kernel for a (static) real batch `n_real` zero-padded to `n_pad`."""
    inv_cnt = 1.0 / float(4 * 49 * n_real)      # BN count = N * 14 * 14 per channel

    def kernel(patches_ref, mask_ref, wcbd_ref, bc_ref, gamma_ref, beta_ref,
               w1_ref, b1_ref, w2_ref, b2_ref, out_ref):
        C = CONV_CH

        # ---- Conv 5x5 / stride 2 as ONE im2col matmul (block-diagonal weight).
        # patches rows are (pos=(ph,pw), n); columns are (pool-elem e, tap).
        # wcbd is block-diagonal, so lanes [30e:30e+30] of y hold the conv
        # output of pool element e for every (pos, n) row.
        y = jnp.dot(patches_ref[...], wcbd_ref[...],
                    preferred_element_type=jnp.float32)            # (49*Npad, 120)
        y = _leaky(y + bc_ref[...])                                 # bias + LeakyReLU
        mask = mask_ref[...]                                        # (49*Npad, 1) 0/1

        # ---- BatchNorm2d (training mode): masked batch stats over 196*N entries.
        # Two wide row reductions; centered variance for numerical robustness.
        ssum_f = jnp.sum(y * mask, axis=0, keepdims=True)           # (1, 120)
        ssum = (ssum_f[:, 0:C] + ssum_f[:, C:2 * C]
                + ssum_f[:, 2 * C:3 * C] + ssum_f[:, 3 * C:4 * C])  # (1, 30)
        mean = ssum * inv_cnt
        mean_f = jnp.concatenate([mean, mean, mean, mean], axis=1)  # (1, 120)
        d = (y - mean_f) * mask
        ssq_f = jnp.sum(d * d, axis=0, keepdims=True)
        ssq = (ssq_f[:, 0:C] + ssq_f[:, C:2 * C]
               + ssq_f[:, 2 * C:3 * C] + ssq_f[:, 3 * C:4 * C])
        var = ssq * inv_cnt                                         # biased variance
        scale = gamma_ref[...] * jax.lax.rsqrt(var + EPS)
        shift = beta_ref[...] - mean * scale

        # ---- BN affine + MaxPool2d(2,2): max over the 4 lane groups ----
        pooled = y[:, 0:C] * scale + shift
        for e in range(1, 4):
            pooled = jnp.maximum(pooled, y[:, e * C:(e + 1) * C] * scale + shift)
        # pooled: (49*Npad, 30) f32, rows ordered (pos, n)

        # ---- Linear(1470, 100) as ONE batched contraction over 49 positions.
        # n_pad is a multiple of 8, so the leading-dim split is sublane-aligned.
        pooled3 = pooled.reshape(49, n_pad, C).astype(jnp.bfloat16)
        h = jax.lax.dot_general(pooled3, w1_ref[...],
                                dimension_numbers=(((2,), (1,)), ((0,), (0,))),
                                preferred_element_type=jnp.float32)  # (49, Npad, 100)
        h1 = _leaky(jnp.sum(h, axis=0) + b1_ref[...])                # (Npad, 100)

        # ---- Linear(100, 10) + Softmax(dim=1) (exact divide) ----
        logits = jnp.dot(h1.astype(jnp.bfloat16), w2_ref[...],
                         preferred_element_type=jnp.float32) + b2_ref[...]
        m = jnp.max(logits, axis=1, keepdims=True)
        ex = jnp.exp(logits - m)
        out_ref[...] = ex / jnp.sum(ex, axis=1, keepdims=True)

    return kernel


# --------------------------- wrapper-side glue ---------------------------
def _build_patches(x, n_pad):
    """(N,1,28,28) -> lane-dense im2col (49*n_pad, 100) bf16 + (49*n_pad, 1) row mask.

    Rows are (pos=(ph,pw), n); columns are (pool-elem e=(dh,dw), tap=(kh,kw)).
    Batch is zero-padded to n_pad so each position's row block is sublane-aligned;
    the mask zeroes the padding rows out of the BatchNorm statistics."""
    n = x.shape[0]
    xp = jnp.pad(x[:, 0], ((0, n_pad - n), (2, 2), (2, 2)))            # (n_pad, 32, 32)
    taps = jnp.stack([xp[:, kh:kh + 28:2, kw:kw + 28:2]
                      for kh in range(5) for kw in range(5)], axis=-1)  # (n_pad,14,14,25)
    t6 = taps.reshape(n_pad, 7, 2, 7, 2, 25)        # [n, ph, dh, pw, dw, tap]
    p6 = t6.transpose(1, 3, 0, 2, 4, 5)             # [ph, pw, n, dh, dw, tap]
    patches = p6.reshape(49 * n_pad, 100).astype(jnp.bfloat16)
    mask = jnp.tile((jnp.arange(n_pad) < n).astype(jnp.float32), (49,))
    return patches, mask.reshape(49 * n_pad, 1)


def _prep_params(params):
    """Fold weights into the kernel layouts (free at param-prep time):
       * conv weight -> block-diagonal (100, 120) bf16 (one matmul, all 4 pool elems)
       * conv bias   -> tiled (1, 120)
       * w1 rows permuted from the PyTorch flatten order (c, ph, pw) to (pos, c),
         stored as (49, 30, 100) bf16 for the batched contraction."""
    w_conv, b_conv, gamma, beta, w1, b1, w2, b2 = params
    wcb = w_conv.astype(jnp.bfloat16)                       # (25, 30)
    zero = jnp.zeros_like(wcb)
    wc_bd = jnp.concatenate(
        [jnp.concatenate([wcb if j == e else zero for j in range(4)], axis=1)
         for e in range(4)], axis=0)                        # (100, 120) block-diag
    bc_full = jnp.tile(b_conv, (1, 4))                      # (1, 120)
    w1r = (w1.reshape(CONV_CH, 49, HIDDEN)
             .transpose(1, 0, 2)).astype(jnp.bfloat16)      # (49, 30, 100)
    return (wc_bd, bc_full, gamma, beta, w1r, b1, w2.astype(jnp.bfloat16), b2)


@jax.jit
def simple_model_forward(x, params):
    n = x.shape[0]
    n_pad = _round_up(n, 8)                   # f32 sublane tile
    patches, rowmask = _build_patches(x, n_pad)
    wc_bd, bc_full, gamma, beta, w1r, b1, w2, b2 = _prep_params(params)
    rows = 49 * n_pad

    full2 = lambda i: (0, 0)
    full3 = lambda i: (0, 0, 0)
    # NOTE: for large N (v7x: 64 MiB VMEM, 2 TensorCores) tile the row axis over a
    # grid with a two-pass / partial-sum BatchNorm instead of one full-block call.
    out = pl.pallas_call(
        _make_kernel(n, n_pad),
        out_shape=jax.ShapeDtypeStruct((n_pad, NUM_CLASSES), jnp.float32),
        grid=(1,),
        in_specs=[
            pl.BlockSpec((rows, 100), full2),               # im2col patches (bf16)
            pl.BlockSpec((rows, 1), full2),                 # batch-pad row mask
            pl.BlockSpec((100, 4 * CONV_CH), full2),        # block-diag conv weight (bf16)
            pl.BlockSpec((1, 4 * CONV_CH), full2),          # tiled conv bias
            pl.BlockSpec((1, CONV_CH), full2),              # BN gamma
            pl.BlockSpec((1, CONV_CH), full2),              # BN beta
            pl.BlockSpec((49, CONV_CH, HIDDEN), full3),     # permuted w1 (bf16)
            pl.BlockSpec((1, HIDDEN), full2),               # b1
            pl.BlockSpec((HIDDEN, NUM_CLASSES), full2),     # w2 (bf16)
            pl.BlockSpec((1, NUM_CLASSES), full2),          # b2
        ],
        out_specs=pl.BlockSpec((n_pad, NUM_CLASSES), full2),
        compiler_params=pltpu.CompilerParams(
            dimension_semantics=("arbitrary",),
            vmem_limit_bytes=32 * 1024 * 1024),
    )(patches, rowmask, wc_bd, bc_full, gamma, beta, w1r, b1, w2, b2)
    return out[:n]


def init_params(key):
    # Deterministic synthetic parameters (shapes from SimpleModel.__init__).
    ks = jax.random.split(key, 6)
    # Conv2d(1, 30, 5): stored as (kh*5+kw, c_out) for the im2col matmul.
    w_conv = jax.random.normal(ks[0], (25, CONV_CH), jnp.float32) * 0.1
    b_conv = jax.random.normal(ks[1], (1, CONV_CH), jnp.float32) * 0.1
    gamma = jnp.ones((1, CONV_CH), jnp.float32)     # BatchNorm2d default weight
    beta = jnp.zeros((1, CONV_CH), jnp.float32)     # BatchNorm2d default bias
    # Linear(1470, 100) / Linear(100, 10): stored (in, out); w1 rows are in the
    # PyTorch flatten order (c, ph, pw) — permutation happens in _prep_params.
    w1 = jax.random.normal(ks[2], (CONV_CH * 49, HIDDEN), jnp.float32) * 0.02
    b1 = jax.random.normal(ks[3], (1, HIDDEN), jnp.float32) * 0.02
    w2 = jax.random.normal(ks[4], (HIDDEN, NUM_CLASSES), jnp.float32) * 0.1
    b2 = jax.random.normal(ks[5], (1, NUM_CLASSES), jnp.float32) * 0.1
    return (w_conv, b_conv, gamma, beta, w1, b1, w2, b2)


if __name__ == "__main__":
    key = jax.random.PRNGKey(0)
    kx, kp = jax.random.split(key)
    # 28x28 input is implied by Linear(convLayerSize * 7 * 7, 100)
    x = jax.random.normal(kx, (2, 1, 28, 28), jnp.float32)
    params = init_params(kp)

    out = simple_model_forward(x, params)
    out = jax.block_until_ready(out)

    assert out.shape == (2, NUM_CLASSES)
    assert bool(jnp.all(jnp.isfinite(out)))
    assert bool(jnp.all(out >= 0))
    # Softmax rows sum to ~1 (exact f32 divide).
    assert bool(jnp.allclose(jnp.sum(out, axis=1), 1.0, atol=1e-4))
    print("KERNEL_OK")
</pallas_src>

<mosaic_0001>
module attributes {stable_mosaic.version = 11 : i64} {
  func.func @kernel(%arg0: i32, %arg1: memref<392x100xbf16, #tpu.memory_space<vmem>>, %arg2: memref<392x1xf32, #tpu.memory_space<vmem>>, %arg3: memref<100x120xbf16, #tpu.memory_space<vmem>>, %arg4: memref<1x120xf32, #tpu.memory_space<vmem>>, %arg5: memref<1x30xf32, #tpu.memory_space<vmem>>, %arg6: memref<1x30xf32, #tpu.memory_space<vmem>>, %arg7: memref<49x30x100xbf16, #tpu.memory_space<vmem>>, %arg8: memref<1x100xf32, #tpu.memory_space<vmem>>, %arg9: memref<100x10xbf16, #tpu.memory_space<vmem>>, %arg10: memref<1x10xf32, #tpu.memory_space<vmem>>, %arg11: memref<8x10xf32, #tpu.memory_space<vmem>>) attributes {dimension_semantics = [#tpu.dimension_semantics<arbitrary>], iteration_bounds = array<i64: 1>, scalar_prefetch = 0 : i64, scratch_operands = 0 : i64, tpu.core_type = #tpu.core_type<tc>, window_params = [{pipeline_mode = #tpu.pipeline_mode<synchronous>, transform_indices = @transform_0, window_bounds = array<i64: 392, 100>}, {pipeline_mode = #tpu.pipeline_mode<synchronous>, transform_indices = @transform_1, window_bounds = array<i64: 392, 1>}, {pipeline_mode = #tpu.pipeline_mode<synchronous>, transform_indices = @transform_2, window_bounds = array<i64: 100, 120>}, {pipeline_mode = #tpu.pipeline_mode<synchronous>, transform_indices = @transform_3, window_bounds = array<i64: 1, 120>}, {pipeline_mode = #tpu.pipeline_mode<synchronous>, transform_indices = @transform_4, window_bounds = array<i64: 1, 30>}, {pipeline_mode = #tpu.pipeline_mode<synchronous>, transform_indices = @transform_5, window_bounds = array<i64: 1, 30>}, {pipeline_mode = #tpu.pipeline_mode<synchronous>, transform_indices = @transform_6, window_bounds = array<i64: 49, 30, 100>}, {pipeline_mode = #tpu.pipeline_mode<synchronous>, transform_indices = @transform_7, window_bounds = array<i64: 1, 100>}, {pipeline_mode = #tpu.pipeline_mode<synchronous>, transform_indices = @transform_8, window_bounds = array<i64: 100, 10>}, {pipeline_mode = #tpu.pipeline_mode<synchronous>, transform_indices = @transform_9, window_bounds = array<i64: 1, 10>}, {pipeline_mode = #tpu.pipeline_mode<synchronous>, transform_indices = @transform_10, window_bounds = array<i64: 8, 10>}]} {
    %c0 = arith.constant 0 : index
    %c0_0 = arith.constant 0 : index
    %0 = vector.load %arg1[%c0, %c0_0] : memref<392x100xbf16, #tpu.memory_space<vmem>>, vector<392x100xbf16>
    %c0_1 = arith.constant 0 : index
    %c0_2 = arith.constant 0 : index
    %1 = vector.load %arg3[%c0_1, %c0_2] : memref<100x120xbf16, #tpu.memory_space<vmem>>, vector<100x120xbf16>
    %cst = arith.constant dense<0.000000e+00> : vector<392x120xf32>
    %2 = tpu.matmul %0, %1, %cst {dimension_numbers = #tpu.dot_dimension_numbers<[1], [0], [0], [1], [0, 0, 1, 1], [], []>} : vector<392x100xbf16>, vector<100x120xbf16>, vector<392x120xf32> -> vector<392x120xf32>
    %c0_3 = arith.constant 0 : index
    %c0_4 = arith.constant 0 : index
    %3 = vector.load %arg4[%c0_3, %c0_4] : memref<1x120xf32, #tpu.memory_space<vmem>>, vector<1x120xf32>
    %4 = vector.broadcast %3 : vector<1x120xf32> to vector<392x120xf32>
    %5 = arith.addf %2, %4 : vector<392x120xf32>
    %cst_5 = arith.constant 0.000000e+00 : f32
    %6 = vector.broadcast %cst_5 : f32 to vector<392x120xf32>
    %7 = arith.cmpf ogt, %5, %6 : vector<392x120xf32>
    %cst_6 = arith.constant 1.000000e-03 : f32
    %8 = vector.broadcast %cst_6 : f32 to vector<392x120xf32>
    %9 = arith.mulf %8, %5 : vector<392x120xf32>
    %10 = arith.select %7, %5, %9 : vector<392x120xi1>, vector<392x120xf32>
    %c0_7 = arith.constant 0 : index
    %c0_8 = arith.constant 0 : index
    %11 = vector.load %arg2[%c0_7, %c0_8] : memref<392x1xf32, #tpu.memory_space<vmem>>, vector<392x1xf32>
    %12 = vector.broadcast %11 : vector<392x1xf32> to vector<392x120xf32>
    %13 = arith.mulf %10, %12 : vector<392x120xf32>
    %cst_9 = arith.constant dense<0.000000e+00> : vector<120xf32>
    %14 = vector.multi_reduction <add>, %13, %cst_9 [0] : vector<392x120xf32> to vector<120xf32>
    %15 = vector.shape_cast %14 : vector<120xf32> to vector<1x120xf32>
    %16 = vector.extract_strided_slice %15 {offsets = [0, 0], sizes = [1, 30], strides = [1, 1]} : vector<1x120xf32> to vector<1x30xf32>
    %17 = vector.extract_strided_slice %15 {offsets = [0, 30], sizes = [1, 30], strides = [1, 1]} : vector<1x120xf32> to vector<1x30xf32>
    %18 = arith.addf %16, %17 : vector<1x30xf32>
    %19 = vector.extract_strided_slice %15 {offsets = [0, 60], sizes = [1, 30], strides = [1, 1]} : vector<1x120xf32> to vector<1x30xf32>
    %20 = arith.addf %18, %19 : vector<1x30xf32>
    %21 = vector.extract_strided_slice %15 {offsets = [0, 90], sizes = [1, 30], strides = [1, 1]} : vector<1x120xf32> to vector<1x30xf32>
    %22 = arith.addf %20, %21 : vector<1x30xf32>
    %cst_10 = arith.constant 0.00255102036 : f32
    %23 = vector.broadcast %cst_10 : f32 to vector<1x30xf32>
    %24 = arith.mulf %22, %23 : vector<1x30xf32>
    %25 = tpu.concatenate %24, %24, %24, %24 in 1 : vector<1x30xf32>, vector<1x30xf32>, vector<1x30xf32>, vector<1x30xf32> -> vector<1x120xf32>
    %26 = vector.broadcast %25 : vector<1x120xf32> to vector<392x120xf32>
    %27 = arith.subf %10, %26 : vector<392x120xf32>
    %28 = vector.broadcast %11 : vector<392x1xf32> to vector<392x120xf32>
    %29 = arith.mulf %27, %28 : vector<392x120xf32>
    %30 = arith.mulf %29, %29 : vector<392x120xf32>
    %cst_11 = arith.constant dense<0.000000e+00> : vector<120xf32>
    %31 = vector.multi_reduction <add>, %30, %cst_11 [0] : vector<392x120xf32> to vector<120xf32>
    %32 = vector.shape_cast %31 : vector<120xf32> to vector<1x120xf32>
    %33 = vector.extract_strided_slice %32 {offsets = [0, 0], sizes = [1, 30], strides = [1, 1]} : vector<1x120xf32> to vector<1x30xf32>
    %34 = vector.extract_strided_slice %32 {offsets = [0, 30], sizes = [1, 30], strides = [1, 1]} : vector<1x120xf32> to vector<1x30xf32>
    %35 = arith.addf %33, %34 : vector<1x30xf32>
    %36 = vector.extract_strided_slice %32 {offsets = [0, 60], sizes = [1, 30], strides = [1, 1]} : vector<1x120xf32> to vector<1x30xf32>
    %37 = arith.addf %35, %36 : vector<1x30xf32>
    %38 = vector.extract_strided_slice %32 {offsets = [0, 90], sizes = [1, 30], strides = [1, 1]} : vector<1x120xf32> to vector<1x30xf32>
    %39 = arith.addf %37, %38 : vector<1x30xf32>
    %cst_12 = arith.constant 0.00255102036 : f32
    %40 = vector.broadcast %cst_12 : f32 to vector<1x30xf32>
    %41 = arith.mulf %39, %40 : vector<1x30xf32>
    %c0_13 = arith.constant 0 : index
    %c0_14 = arith.constant 0 : index
    %42 = vector.load %arg5[%c0_13, %c0_14] : memref<1x30xf32, #tpu.memory_space<vmem>>, vector<1x30xf32>
    %cst_15 = arith.constant 9.99999974E-6 : f32
    %43 = vector.broadcast %cst_15 : f32 to vector<1x30xf32>
    %44 = arith.addf %41, %43 : vector<1x30xf32>
    %45 = math.rsqrt %44 : vector<1x30xf32>
    %46 = arith.mulf %42, %45 : vector<1x30xf32>
    %c0_16 = arith.constant 0 : index
    %c0_17 = arith.constant 0 : index
    %47 = vector.load %arg6[%c0_16, %c0_17] : memref<1x30xf32, #tpu.memory_space<vmem>>, vector<1x30xf32>
    %48 = arith.mulf %24, %46 : vector<1x30xf32>
    %49 = arith.subf %47, %48 : vector<1x30xf32>
    %50 = vector.extract_strided_slice %10 {offsets = [0, 0], sizes = [392, 30], strides = [1, 1]} : vector<392x120xf32> to vector<392x30xf32>
    %51 = vector.broadcast %46 : vector<1x30xf32> to vector<392x30xf32>
    %52 = arith.mulf %50, %51 : vector<392x30xf32>
    %53 = vector.broadcast %49 : vector<1x30xf32> to vector<392x30xf32>
    %54 = arith.addf %52, %53 : vector<392x30xf32>
    %55 = vector.extract_strided_slice %10 {offsets = [0, 30], sizes = [392, 30], strides = [1, 1]} : vector<392x120xf32> to vector<392x30xf32>
    %56 = vector.broadcast %46 : vector<1x30xf32> to vector<392x30xf32>
    %57 = arith.mulf %55, %56 : vector<392x30xf32>
    %58 = vector.broadcast %49 : vector<1x30xf32> to vector<392x30xf32>
    %59 = arith.addf %57, %58 : vector<392x30xf32>
    %60 = arith.maximumf %54, %59 : vector<392x30xf32>
    %61 = vector.extract_strided_slice %10 {offsets = [0, 60], sizes = [392, 30], strides = [1, 1]} : vector<392x120xf32> to vector<392x30xf32>
    %62 = vector.broadcast %46 : vector<1x30xf32> to vector<392x30xf32>
    %63 = arith.mulf %61, %62 : vector<392x30xf32>
    %64 = vector.broadcast %49 : vector<1x30xf32> to vector<392x30xf32>
    %65 = arith.addf %63, %64 : vector<392x30xf32>
    %66 = arith.maximumf %60, %65 : vector<392x30xf32>
    %67 = vector.extract_strided_slice %10 {offsets = [0, 90], sizes = [392, 30], strides = [1, 1]} : vector<392x120xf32> to vector<392x30xf32>
    %68 = vector.broadcast %46 : vector<1x30xf32> to vector<392x30xf32>
    %69 = arith.mulf %67, %68 : vector<392x30xf32>
    %70 = vector.broadcast %49 : vector<1x30xf32> to vector<392x30xf32>
    %71 = arith.addf %69, %70 : vector<392x30xf32>
    %72 = arith.maximumf %66, %71 : vector<392x30xf32>
    %73 = vector.shape_cast %72 : vector<392x30xf32> to vector<49x8x30xf32>
    %74 = arith.truncf %73 : vector<49x8x30xf32> to vector<49x8x30xbf16>
    %c0_18 = arith.constant 0 : index
    %c0_19 = arith.constant 0 : index
    %c0_20 = arith.constant 0 : index
    %75 = vector.load %arg7[%c0_18, %c0_19, %c0_20] : memref<49x30x100xbf16, #tpu.memory_space<vmem>>, vector<49x30x100xbf16>
    %cst_21 = arith.constant dense<0.000000e+00> : vector<49x8x100xf32>
    %76 = tpu.matmul %74, %75, %cst_21 {dimension_numbers = #tpu.dot_dimension_numbers<[2], [1], [1], [2], [0, 0, 0, 1, 1, 2], [0], [0]>} : vector<49x8x30xbf16>, vector<49x30x100xbf16>, vector<49x8x100xf32> -> vector<49x8x100xf32>
    %cst_22 = arith.constant dense<0.000000e+00> : vector<8x100xf32>
    %77 = vector.multi_reduction <add>, %76, %cst_22 [0] : vector<49x8x100xf32> to vector<8x100xf32>
    %c0_23 = arith.constant 0 : index
    %c0_24 = arith.constant 0 : index
    %78 = vector.load %arg8[%c0_23, %c0_24] : memref<1x100xf32, #tpu.memory_space<vmem>>, vector<1x100xf32>
    %79 = vector.broadcast %78 : vector<1x100xf32> to vector<8x100xf32>
    %80 = arith.addf %77, %79 : vector<8x100xf32>
    %cst_25 = arith.constant 0.000000e+00 : f32
    %81 = vector.broadcast %cst_25 : f32 to vector<8x100xf32>
    %82 = arith.cmpf ogt, %80, %81 : vector<8x100xf32>
    %cst_26 = arith.constant 1.000000e-03 : f32
    %83 = vector.broadcast %cst_26 : f32 to vector<8x100xf32>
    %84 = arith.mulf %83, %80 : vector<8x100xf32>
    %85 = arith.select %82, %80, %84 : vector<8x100xi1>, vector<8x100xf32>
    %86 = arith.truncf %85 : vector<8x100xf32> to vector<8x100xbf16>
    %c0_27 = arith.constant 0 : index
    %c0_28 = arith.constant 0 : index
    %87 = vector.load %arg9[%c0_27, %c0_28] : memref<100x10xbf16, #tpu.memory_space<vmem>>, vector<100x10xbf16>
    %cst_29 = arith.constant dense<0.000000e+00> : vector<8x10xf32>
    %88 = tpu.matmul %86, %87, %cst_29 {dimension_numbers = #tpu.dot_dimension_numbers<[1], [0], [0], [1], [0, 0, 1, 1], [], []>} : vector<8x100xbf16>, vector<100x10xbf16>, vector<8x10xf32> -> vector<8x10xf32>
    %c0_30 = arith.constant 0 : index
    %c0_31 = arith.constant 0 : index
    %89 = vector.load %arg10[%c0_30, %c0_31] : memref<1x10xf32, #tpu.memory_space<vmem>>, vector<1x10xf32>
    %90 = vector.broadcast %89 : vector<1x10xf32> to vector<8x10xf32>
    %91 = arith.addf %88, %90 : vector<8x10xf32>
    %cst_32 = arith.constant dense<0xFF800000> : vector<8xf32>
    %92 = vector.multi_reduction <maximumf>, %91, %cst_32 [1] : vector<8x10xf32> to vector<8xf32>
    %93 = vector.shape_cast %92 : vector<8xf32> to vector<8x1xf32>
    %94 = vector.broadcast %93 : vector<8x1xf32> to vector<8x10xf32>
    %95 = arith.subf %91, %94 : vector<8x10xf32>
    %96 = math.exp %95 : vector<8x10xf32>
    %cst_33 = arith.constant dense<0.000000e+00> : vector<8xf32>
    %97 = vector.multi_reduction <add>, %96, %cst_33 [1] : vector<8x10xf32> to vector<8xf32>
    %98 = vector.shape_cast %97 : vector<8xf32> to vector<8x1xf32>
    %99 = vector.broadcast %98 : vector<8x1xf32> to vector<8x10xf32>
    %100 = arith.divf %96, %99 : vector<8x10xf32>
    %c0_34 = arith.constant 0 : index
    %c0_35 = arith.constant 0 : index
    %101 = vector.load %arg11[%c0_34, %c0_35] : memref<8x10xf32, #tpu.memory_space<vmem>>, vector<8x10xf32>
    tpu.vector_store %arg11[%c0_34, %c0_35], %100 {strides = array<i32>} : memref<8x10xf32, #tpu.memory_space<vmem>>, vector<8x10xf32>,
    return
  }
  func.func @transform_0(%arg0: i32) -> (i32, i32) {
    %c0_i32 = arith.constant 0 : i32
    %c0_i32_0 = arith.constant 0 : i32
    %c0_i32_1 = arith.constant 0 : i32
    return %c0_i32, %c0_i32_0 : i32, i32
  }
  func.func @transform_1(%arg0: i32) -> (i32, i32) {
    %c0_i32 = arith.constant 0 : i32
    %c0_i32_0 = arith.constant 0 : i32
    %c0_i32_1 = arith.constant 0 : i32
    return %c0_i32, %c0_i32_0 : i32, i32
  }
  func.func @transform_2(%arg0: i32) -> (i32, i32) {
    %c0_i32 = arith.constant 0 : i32
    %c0_i32_0 = arith.constant 0 : i32
    %c0_i32_1 = arith.constant 0 : i32
    return %c0_i32, %c0_i32_0 : i32, i32
  }
  func.func @transform_3(%arg0: i32) -> (i32, i32) {
    %c0_i32 = arith.constant 0 : i32
    %c0_i32_0 = arith.constant 0 : i32
    %c0_i32_1 = arith.constant 0 : i32
    return %c0_i32, %c0_i32_0 : i32, i32
  }
  func.func @transform_4(%arg0: i32) -> (i32, i32) {
    %c0_i32 = arith.constant 0 : i32
    %c0_i32_0 = arith.constant 0 : i32
    %c0_i32_1 = arith.constant 0 : i32
    return %c0_i32, %c0_i32_0 : i32, i32
  }
  func.func @transform_5(%arg0: i32) -> (i32, i32) {
    %c0_i32 = arith.constant 0 : i32
    %c0_i32_0 = arith.constant 0 : i32
    %c0_i32_1 = arith.constant 0 : i32
    return %c0_i32, %c0_i32_0 : i32, i32
  }
  func.func @transform_6(%arg0: i32) -> (i32, i32, i32) {
    %c0_i32 = arith.constant 0 : i32
    %c0_i32_0 = arith.constant 0 : i32
    %c0_i32_1 = arith.constant 0 : i32
    %c0_i32_2 = arith.constant 0 : i32
    return %c0_i32, %c0_i32_0, %c0_i32_1 : i32, i32, i32
  }
  func.func @transform_7(%arg0: i32) -> (i32, i32) {
    %c0_i32 = arith.constant 0 : i32
    %c0_i32_0 = arith.constant 0 : i32
    %c0_i32_1 = arith.constant 0 : i32
    return %c0_i32, %c0_i32_0 : i32, i32
  }
  func.func @transform_8(%arg0: i32) -> (i32, i32) {
    %c0_i32 = arith.constant 0 : i32
    %c0_i32_0 = arith.constant 0 : i32
    %c0_i32_1 = arith.constant 0 : i32
    return %c0_i32, %c0_i32_0 : i32, i32
  }
  func.func @transform_9(%arg0: i32) -> (i32, i32) {
    %c0_i32 = arith.constant 0 : i32
    %c0_i32_0 = arith.constant 0 : i32
    %c0_i32_1 = arith.constant 0 : i32
    return %c0_i32, %c0_i32_0 : i32, i32
  }
  func.func @transform_10(%arg0: i32) -> (i32, i32) {
    %c0_i32 = arith.constant 0 : i32
    %c0_i32_0 = arith.constant 0 : i32
    %c0_i32_1 = arith.constant 0 : i32
    return %c0_i32, %c0_i32_0 : i32, i32
  }
}

</mosaic_0001>

<llo_original>
// kernel: tile.13
$region0: #{tile.13}
  #allocation0 [shape = 's32[1]{0}', space=sflag, size = 0x4, scoped, tag = 'scoped memory for tile.13']
  %s0 = inlined_call_operand.vmem [shape: f32[8], index: 0, kind: input, shape index: {}]
  %s1 = inlined_call_operand.vmem [shape: f32[49,8], index: 1, kind: output, shape index: {}]
  // Predicated region
  $region2: #{tile.13} parent=0 // pred_check
    _
  $region3: #{tile.13} parent=0 // pred_check_branch
    %3 = sbr.rel (0) target = $region5
  $region4: #{tile.13} parent=0 // pred_region
    _
  $region5: #{tile.13} parent=0 // pred_fallthru
    _
  %v4 = vld [vmem:[%s0] ss:$0 sm:$0xff]
  %5 = vst [vmem:[%s1] sm:$0xff] %v4
  %s6 = scalar_lea.vmem %s1, 8
  %7 = vst [vmem:[%s6] sm:$0xff] %v4
  %s8 = scalar_lea.vmem %s1, 16
  %9 = vst [vmem:[%s8] sm:$0xff] %v4
  %s10 = scalar_lea.vmem %s1, 24
  %11 = vst [vmem:[%s10] sm:$0xff] %v4
  %s12 = scalar_lea.vmem %s1, 32
  %13 = vst [vmem:[%s12] sm:$0xff] %v4
  %s14 = scalar_lea.vmem %s1, 40
  %15 = vst [vmem:[%s14] sm:$0xff] %v4
  %s16 = scalar_lea.vmem %s1, 48
  %17 = vst [vmem:[%s16] sm:$0xff] %v4

// kernel: tile.0
$region0: #{tile.0}
  %s0 = inlined_call_operand.vmem [shape: f32[49,8], index: 0, kind: input, shape index: {}]
  %s1 = inlined_call_operand.vmem [shape: f32[392,1], index: 1, kind: output, shape index: {}]
  %v2 = vld [vmem:[%s0] sm:$0xff]
  %vm3 = vcmask 7168
  %4 = vst.msk [vmem:[%s1] ss:$8 sm:$0xf] %vm3, %v2
  %5 = vst.msk [vmem:[%s1] ss:$8 sm:$0xf0] %vm3, %v2
  %s6 = scalar_lea.vmem %s0, 8
  %v7 = vld [vmem:[%s6] sm:$0xff]
  %vm8 = vcmask 7168
  %s9 = scalar_lea.vmem %s1, 64
  %10 = vst.msk [vmem:[%s9] ss:$8 sm:$0xf] %vm8, %v7
  %s11 = scalar_lea.vmem %s1, 64
  %12 = vst.msk [vmem:[%s11] ss:$8 sm:$0xf0] %vm8, %v7
  %s13 = scalar_lea.vmem %s0, 16
  %v14 = vld [vmem:[%s13] sm:$0xff]
  %vm15 = vcmask 7168
  %s16 = scalar_lea.vmem %s1, 128
  %17 = vst.msk [vmem:[%s16] ss:$8 sm:$0xf] %vm15, %v14
  %s18 = scalar_lea.vmem %s1, 128
  %19 = vst.msk [vmem:[%s18] ss:$8 sm:$0xf0] %vm15, %v14
  %s20 = scalar_lea.vmem %s0, 24
  %v21 = vld [vmem:[%s20] sm:$0xff]
  %vm22 = vcmask 7168
  %s23 = scalar_lea.vmem %s1, 192
  %24 = vst.msk [vmem:[%s23] ss:$8 sm:$0xf] %vm22, %v21
  %s25 = scalar_lea.vmem %s1, 192
  %26 = vst.msk [vmem:[%s25] ss:$8 sm:$0xf0] %vm22, %v21
  %s27 = scalar_lea.vmem %s0, 32
  %v28 = vld [vmem:[%s27] sm:$0xff]
  %vm29 = vcmask 7168
  %s30 = scalar_lea.vmem %s1, 256
  %31 = vst.msk [vmem:[%s30] ss:$8 sm:$0xf] %vm29, %v28
  %s32 = scalar_lea.vmem %s1, 256
  %33 = vst.msk [vmem:[%s32] ss:$8 sm:$0xf0] %vm29, %v28
  %s34 = scalar_lea.vmem %s0, 40
  %v35 = vld [vmem:[%s34] sm:$0xff]
  %vm36 = vcmask 7168
  %s37 = scalar_lea.vmem %s1, 320
  %38 = vst.msk [vmem:[%s37] ss:$8 sm:$0xf] %vm36, %v35
  %s39 = scalar_lea.vmem %s1, 320
  %40 = vst.msk [vmem:[%s39] ss:$8 sm:$0xf0] %vm36, %v35
  %s41 = scalar_lea.vmem %s0, 48
  %v42 = vld [vmem:[%s41] sm:$0x1]
  %vm43 = vcmask 7168
  %s44 = scalar_lea.vmem %s1, 384
  %45 = vst.msk [vmem:[%s44] sm:$0x1] %vm43, %v42
  %v46 = vld [vmem:[%s0] sm:$0xff]
  %47 = vrot.lane.b32.xlu0 %v46, 127
  %v48 = vpop.permute.xlu0 %47
  %vm49 = vcmask 7168
  %s50 = scalar_lea.vmem %s1, 1
  %51 = vst.msk [vmem:[%s50] ss:$8 sm:$0xf] %vm49, %v48
  %s52 = scalar_lea.vmem %s1, 1
  %53 = vst.msk [vmem:[%s52] ss:$8 sm:$0xf0] %vm49, %v48
  %s54 = scalar_lea.vmem %s0, 8
  %v55 = vld [vmem:[%s54] sm:$0xff]
  %56 = vrot.lane.b32.xlu0 %v55, 127
  %v57 = vpop.permute.xlu0 %56
  %vm58 = vcmask 7168
  %s59 = scalar_lea.vmem %s1, 65
  %60 = vst.msk [vmem:[%s59] ss:$8 sm:$0xf] %vm58, %v57
  %s61 = scalar_lea.vmem %s1, 65
  %62 = vst.msk [vmem:[%s61] ss:$8 sm:$0xf0] %vm58, %v57
  %s63 = scalar_lea.vmem %s0, 16
  %v64 = vld [vmem:[%s63] sm:$0xff]
  %65 = vrot.lane.b32.xlu0 %v64, 127
  %v66 = vpop.permute.xlu0 %65
  %vm67 = vcmask 7168
  %s68 = scalar_lea.vmem %s1, 129
  %69 = vst.msk [vmem:[%s68] ss:$8 sm:$0xf] %vm67, %v66
  %s70 = scalar_lea.vmem %s1, 129
  %71 = vst.msk [vmem:[%s70] ss:$8 sm:$0xf0] %vm67, %v66
  %s72 = scalar_lea.vmem %s0, 24
  %v73 = vld [vmem:[%s72] sm:$0xff]
  %74 = vrot.lane.b32.xlu0 %v73, 127
  %v75 = vpop.permute.xlu0 %74
  %vm76 = vcmask 7168
  %s77 = scalar_lea.vmem %s1, 193
  %78 = vst.msk [vmem:[%s77] ss:$8 sm:$0xf] %vm76, %v75
  %s79 = scalar_lea.vmem %s1, 193
  %80 = vst.msk [vmem:[%s79] ss:$8 sm:$0xf0] %vm76, %v75
  %s81 = scalar_lea.vmem %s0, 32
  %v82 = vld [vmem:[%s81] sm:$0xff]
  %83 = vrot.lane.b32.xlu0 %v82, 127
  %v84 = vpop.permute.xlu0 %83
  %vm85 = vcmask 7168
  %s86 = scalar_lea.vmem %s1, 257
  %87 = vst.msk [vmem:[%s86] ss:$8 sm:$0xf] %vm85, %v84
  %s88 = scalar_lea.vmem %s1, 257
  %89 = vst.msk [vmem:[%s88] ss:$8 sm:$0xf0] %vm85, %v84
  %s90 = scalar_lea.vmem %s0, 40
  %v91 = vld [vmem:[%s90] sm:$0xff]
  %92 = vrot.lane.b32.xlu0 %v91, 127
  %v93 = vpop.permute.xlu0 %92
  %vm94 = vcmask 7168
  %s95 = scalar_lea.vmem %s1, 321
  %96 = vst.msk [vmem:[%s95] ss:$8 sm:$0xf] %vm94, %v93
  %s97 = scalar_lea.vmem %s1, 321
  %98 = vst.msk [vmem:[%s97] ss:$8 sm:$0xf0] %vm94, %v93
  %s99 = scalar_lea.vmem %s0, 48
  %v100 = vld [vmem:[%s99] sm:$0x1]
  %101 = vrot.lane.b32.xlu0 %v100, 127
  %v102 = vpop.permute.xlu0 %101
  %vm103 = vcmask 7168
  %s104 = scalar_lea.vmem %s1, 385
  %105 = vst.msk [vmem:[%s104] sm:$0x1] %vm103, %v102
  %v106 = vld [vmem:[%s0] sm:$0xff]
  %107 = vrot.lane.b32.xlu0 %v106, 126
  %v108 = vpop.permute.xlu0 %107
  %vm109 = vcmask 7168
  %s110 = scalar_lea.vmem %s1, 2
  %111 = vst.msk [vmem:[%s110] ss:$8 sm:$0xf] %vm109, %v108
  %s112 = scalar_lea.vmem %s1, 2
  %113 = vst.msk [vmem:[%s112] ss:$8 sm:$0xf0] %vm109, %v108
  %s114 = scalar_lea.vmem %s0, 8
  %v115 = vld [vmem:[%s114] sm:$0xff]
  %116 = vrot.lane.b32.xlu0 %v115, 126
  %v117 = vpop.permute.xlu0 %116
  %vm118 = vcmask 7168
  %s119 = scalar_lea.vmem %s1, 66
  %120 = vst.msk [vmem:[%s119] ss:$8 sm:$0xf] %vm118, %v117
  %s121 = scalar_lea.vmem %s1, 66
  %122 = vst.msk [vmem:[%s121] ss:$8 sm:$0xf0] %vm118, %v117
  %s123 = scalar_lea.vmem %s0, 16
  %v124 = vld [vmem:[%s123] sm:$0xff]
  %125 = vrot.lane.b32.xlu0 %v124, 126
  %v126 = vpop.permute.xlu0 %125
  %vm127 = vcmask 7168
  %s128 = scalar_lea.vmem %s1, 130
  %129 = vst.msk [vmem:[%s128] ss:$8 sm:$0xf] %vm127, %v126
  %s130 = scalar_lea.vmem %s1, 130
  %131 = vst.msk [vmem:[%s130] ss:$8 sm:$0xf0] %vm127, %v126
  %s132 = scalar_lea.vmem %s0, 24
  %v133 = vld [vmem:[%s132] sm:$0xff]
  %134 = vrot.lane.b32.xlu0 %v133, 126
  %v135 = vpop.permute.xlu0 %134
  %vm136 = vcmask 7168
  %s137 = scalar_lea.vmem %s1, 194
  %138 = vst.msk [vmem:[%s137] ss:$8 sm:$0xf] %vm136, %v135
  %s139 = scalar_lea.vmem %s1, 194
  %140 = vst.msk [vmem:[%s139] ss:$8 sm:$0xf0] %vm136, %v135
  %s141 = scalar_lea.vmem %s0, 32
  %v142 = vld [vmem:[%s141] sm:$0xff]
  %143 = vrot.lane.b32.xlu0 %v142, 126
  %v144 = vpop.permute.xlu0 %143
  %vm145 = vcmask 7168
  %s146 = scalar_lea.vmem %s1, 258
  %147 = vst.msk [vmem:[%s146] ss:$8 sm:$0xf] %vm145, %v144
  %s148 = scalar_lea.vmem %s1, 258
  %149 = vst.msk [vmem:[%s148] ss:$8 sm:$0xf0] %vm145, %v144
  %s150 = scalar_lea.vmem %s0, 40
  %v151 = vld [vmem:[%s150] sm:$0xff]
  %152 = vrot.lane.b32.xlu0 %v151, 126
  %v153 = vpop.permute.xlu0 %152
  %vm154 = vcmask 7168
  %s155 = scalar_lea.vmem %s1, 322
  %156 = vst.msk [vmem:[%s155] ss:$8 sm:$0xf] %vm154, %v153
  %s157 = scalar_lea.vmem %s1, 322
  %158 = vst.msk [vmem:[%s157] ss:$8 sm:$0xf0] %vm154, %v153
  %s159 = scalar_lea.vmem %s0, 48
  %v160 = vld [vmem:[%s159] sm:$0x1]
  %161 = vrot.lane.b32.xlu0 %v160, 126
  %v162 = vpop.permute.xlu0 %161
  %vm163 = vcmask 7168
  %s164 = scalar_lea.vmem %s1, 386
  %165 = vst.msk [vmem:[%s164] sm:$0x1] %vm163, %v162
  %v166 = vld [vmem:[%s0] sm:$0xff]
  %167 = vrot.lane.b32.xlu0 %v166, 125
  %v168 = vpop.permute.xlu0 %167
  %vm169 = vcmask 7168
  %s170 = scalar_lea.vmem %s1, 3
  %171 = vst.msk [vmem:[%s170] ss:$8 sm:$0xf] %vm169, %v168
  %s172 = scalar_lea.vmem %s1, 3
  %173 = vst.msk [vmem:[%s172] ss:$8 sm:$0xf0] %vm169, %v168
  %s174 = scalar_lea.vmem %s0, 8
  %v175 = vld [vmem:[%s174] sm:$0xff]
  %176 = vrot.lane.b32.xlu0 %v175, 125
  %v177 = vpop.permute.xlu0 %176
  %vm178 = vcmask 7168
  %s179 = scalar_lea.vmem %s1, 67
  %180 = vst.msk [vmem:[%s179] ss:$8 sm:$0xf] %vm178, %v177
  %s181 = scalar_lea.vmem %s1, 67
  %182 = vst.msk [vmem:[%s181] ss:$8 sm:$0xf0] %vm178, %v177
  %s183 = scalar_lea.vmem %s0, 16
  %v184 = vld [vmem:[%s183] sm:$0xff]
  %185 = vrot.lane.b32.xlu0 %v184, 125
  %v186 = vpop.permute.xlu0 %185
  %vm187 = vcmask 7168
  %s188 = scalar_lea.vmem %s1, 131
  %189 = vst.msk [vmem:[%s188] ss:$8 sm:$0xf] %vm187, %v186
  %s190 = scalar_lea.vmem %s1, 131
  %191 = vst.msk [vmem:[%s190] ss:$8 sm:$0xf0] %vm187, %v186
  %s192 = scalar_lea.vmem %s0, 24
  %v193 = vld [vmem:[%s192] sm:$0xff]
  %194 = vrot.lane.b32.xlu0 %v193, 125
  %v195 = vpop.permute.xlu0 %194
  %vm196 = vcmask 7168
  %s197 = scalar_lea.vmem %s1, 195
  %198 = vst.msk [vmem:[%s197] ss:$8 sm:$0xf] %vm196, %v195
  %s199 = scalar_lea.vmem %s1, 195
  %200 = vst.msk [vmem:[%s199] ss:$8 sm:$0xf0] %vm196, %v195
  %s201 = scalar_lea.vmem %s0, 32
  %v202 = vld [vmem:[%s201] sm:$0xff]
  %203 = vrot.lane.b32.xlu0 %v202, 125
  %v204 = vpop.permute.xlu0 %203
  %vm205 = vcmask 7168
  %s206 = scalar_lea.vmem %s1, 259
  %207 = vst.msk [vmem:[%s206] ss:$8 sm:$0xf] %vm205, %v204
  %s208 = scalar_lea.vmem %s1, 259
  %209 = vst.msk [vmem:[%s208] ss:$8 sm:$0xf0] %vm205, %v204
  %s210 = scalar_lea.vmem %s0, 40
  %v211 = vld [vmem:[%s210] sm:$0xff]
  %212 = vrot.lane.b32.xlu0 %v211, 125
  %v213 = vpop.permute.xlu0 %212
  %vm214 = vcmask 7168
  %s215 = scalar_lea.vmem %s1, 323
  %216 = vst.msk [vmem:[%s215] ss:$8 sm:$0xf] %vm214, %v213
  %s217 = scalar_lea.vmem %s1, 323
  %218 = vst.msk [vmem:[%s217] ss:$8 sm:$0xf0] %vm214, %v213
  %s219 = scalar_lea.vmem %s0, 48
  %v220 = vld [vmem:[%s219] sm:$0x1]
  %221 = vrot.lane.b32.xlu0 %v220, 125
  %v222 = vpop.permute.xlu0 %221
  %vm223 = vcmask 7168
  %s224 = scalar_lea.vmem %s1, 387
  %225 = vst.msk [vmem:[%s224] sm:$0x1] %vm223, %v222
  %v226 = vld [vmem:[%s0] sm:$0xff]
  %227 = vrot.lane.b32.xlu0 %v226, 124
  %v228 = vpop.permute.xlu0 %227
  %vm229 = vcmask 7168
  %s230 = scalar_lea.vmem %s1, 4
  %231 = vst.msk [vmem:[%s230] ss:$8 sm:$0xf] %vm229, %v228
  %s232 = scalar_lea.vmem %s1, 4
  %233 = vst.msk [vmem:[%s232] ss:$8 sm:$0xf0] %vm229, %v228
  %s234 = scalar_lea.vmem %s0, 8
  %v235 = vld [vmem:[%s234] sm:$0xff]
  %236 = vrot.lane.b32.xlu0 %v235, 124
  %v237 = vpop.permute.xlu0 %236
  %vm238 = vcmask 7168
  %s239 = scalar_lea.vmem %s1, 68
  %240 = vst.msk [vmem:[%s239] ss:$8 sm:$0xf] %vm238, %v237
  %s241 = scalar_lea.vmem %s1, 68
  %242 = vst.msk [vmem:[%s241] ss:$8 sm:$0xf0] %vm238, %v237
  %s243 = scalar_lea.vmem %s0, 16
  %v244 = vld [vmem:[%s243] sm:$0xff]
  %245 = vrot.lane.b32.xlu0 %v244, 124
  %v246 = vpop.permute.xlu0 %245
  %vm247 = vcmask 7168
  %s248 = scalar_lea.vmem %s1, 132
  %249 = vst.msk [vmem:[%s248] ss:$8 sm:$0xf] %vm247, %v246
  %s250 = scalar_lea.vmem %s1, 132
  %251 = vst.msk [vmem:[%s250] ss:$8 sm:$0xf0] %vm247, %v246
  %s252 = scalar_lea.vmem %s0, 24
  %v253 = vld [vmem:[%s252] sm:$0xff]
  %254 = vrot.lane.b32.xlu0 %v253, 124
  %v255 = vpop.permute.xlu0 %254
  %vm256 = vcmask 7168
  %s257 = scalar_lea.vmem %s1, 196
  %258 = vst.msk [vmem:[%s257] ss:$8 sm:$0xf] %vm256, %v255
  %s259 = scalar_lea.vmem %s1, 196
  %260 = vst.msk [vmem:[%s259] ss:$8 sm:$0xf0] %vm256, %v255
  %s261 = scalar_lea.vmem %s0, 32
  %v262 = vld [vmem:[%s261] sm:$0xff]
  %263 = vrot.lane.b32.xlu0 %v262, 124
  %v264 = vpop.permute.xlu0 %263
  %vm265 = vcmask 7168
  %s266 = scalar_lea.vmem %s1, 260
  %267 = vst.msk [vmem:[%s266] ss:$8 sm:$0xf] %vm265, %v264
  %s268 = scalar_lea.vmem %s1, 260
  %269 = vst.msk [vmem:[%s268] ss:$8 sm:$0xf0] %vm265, %v264
  %s270 = scalar_lea.vmem %s0, 40
  %v271 = vld [vmem:[%s270] sm:$0xff]
  %272 = vrot.lane.b32.xlu0 %v271, 124
  %v273 = vpop.permute.xlu0 %272
  %vm274 = vcmask 7168
  %s275 = scalar_lea.vmem %s1, 324
  %276 = vst.msk [vmem:[%s275] ss:$8 sm:$0xf] %vm274, %v273
  %s277 = scalar_lea.vmem %s1, 324
  %278 = vst.msk [vmem:[%s277] ss:$8 sm:$0xf0] %vm274, %v273
  %s279 = scalar_lea.vmem %s0, 48
  %v280 = vld [vmem:[%s279] sm:$0x1]
  %281 = vrot.lane.b32.xlu0 %v280, 124
  %v282 = vpop.permute.xlu0 %281
  %vm283 = vcmask 7168
  %s284 = scalar_lea.vmem %s1, 388
  %285 = vst.msk [vmem:[%s284] sm:$0x1] %vm283, %v282
  %v286 = vld [vmem:[%s0] sm:$0xff]
  %287 = vrot.lane.b32.xlu0 %v286, 123
  %v288 = vpop.permute.xlu0 %287
  %vm289 = vcmask 7168
  %s290 = scalar_lea.vmem %s1, 5
  %291 = vst.msk [vmem:[%s290] ss:$8 sm:$0xf] %vm289, %v288
  %s292 = scalar_lea.vmem %s1, 5
  %293 = vst.msk [vmem:[%s292] ss:$8 sm:$0xf0] %vm289, %v288
  %s294 = scalar_lea.vmem %s0, 8
  %v295 = vld [vmem:[%s294] sm:$0xff]
  %296 = vrot.lane.b32.xlu0 %v295, 123
  %v297 = vpop.permute.xlu0 %296
  %vm298 = vcmask 7168
  %s299 = scalar_lea.vmem %s1, 69
  %300 = vst.msk [vmem:[%s299] ss:$8 sm:$0xf] %vm298, %v297
  %s301 = scalar_lea.vmem %s1, 69
  %302 = vst.msk [vmem:[%s301] ss:$8 sm:$0xf0] %vm298, %v297
  %s303 = scalar_lea.vmem %s0, 16
  %v304 = vld [vmem:[%s303] sm:$0xff]
  %305 = vrot.lane.b32.xlu0 %v304, 123
  %v306 = vpop.permute.xlu0 %305
  %vm307 = vcmask 7168
  %s308 = scalar_lea.vmem %s1, 133
  %309 = vst.msk [vmem:[%s308] ss:$8 sm:$0xf] %vm307, %v306
  %s310 = scalar_lea.vmem %s1, 133
  %311 = vst.msk [vmem:[%s310] ss:$8 sm:$0xf0] %vm307, %v306
  %s312 = scalar_lea.vmem %s0, 24
  %v313 = vld [vmem:[%s312] sm:$0xff]
  %314 = vrot.lane.b32.xlu0 %v313, 123
  %v315 = vpop.permute.xlu0 %314
  %vm316 = vcmask 7168
  %s317 = scalar_lea.vmem %s1, 197
  %318 = vst.msk [vmem:[%s317] ss:$8 sm:$0xf] %vm316, %v315
  %s319 = scalar_lea.vmem %s1, 197
  %320 = vst.msk [vmem:[%s319] ss:$8 sm:$0xf0] %vm316, %v315
  %s321 = scalar_lea.vmem %s0, 32
  %v322 = vld [vmem:[%s321] sm:$0xff]
  %323 = vrot.lane.b32.xlu0 %v322, 123
  %v324 = vpop.permute.xlu0 %323
  %vm325 = vcmask 7168
  %s326 = scalar_lea.vmem %s1, 261
  %327 = vst.msk [vmem:[%s326] ss:$8 sm:$0xf] %vm325, %v324
  %s328 = scalar_lea.vmem %s1, 261
  %329 = vst.msk [vmem:[%s328] ss:$8 sm:$0xf0] %vm325, %v324
  %s330 = scalar_lea.vmem %s0, 40
  %v331 = vld [vmem:[%s330] sm:$0xff]
  %332 = vrot.lane.b32.xlu0 %v331, 123
  %v333 = vpop.permute.xlu0 %332
  %vm334 = vcmask 7168
  %s335 = scalar_lea.vmem %s1, 325
  %336 = vst.msk [vmem:[%s335] ss:$8 sm:$0xf] %vm334, %v333
  %s337 = scalar_lea.vmem %s1, 325
  %338 = vst.msk [vmem:[%s337] ss:$8 sm:$0xf0] %vm334, %v333
  %s339 = scalar_lea.vmem %s0, 48
  %v340 = vld [vmem:[%s339] sm:$0x1]
  %341 = vrot.lane.b32.xlu0 %v340, 123
  %v342 = vpop.permute.xlu0 %341
  %vm343 = vcmask 7168
  %s344 = scalar_lea.vmem %s1, 389
  %345 = vst.msk [vmem:[%s344] sm:$0x1] %vm343, %v342
  %v346 = vld [vmem:[%s0] sm:$0xff]
  %347 = vrot.lane.b32.xlu0 %v346, 122
  %v348 = vpop.permute.xlu0 %347
  %vm349 = vcmask 7168
  %s350 = scalar_lea.vmem %s1, 6
  %351 = vst.msk [vmem:[%s350] ss:$8 sm:$0xf] %vm349, %v348
  %s352 = scalar_lea.vmem %s1, 6
  %353 = vst.msk [vmem:[%s352] ss:$8 sm:$0xf0] %vm349, %v348
  %s354 = scalar_lea.vmem %s0, 8
  %v355 = vld [vmem:[%s354] sm:$0xff]
  %356 = vrot.lane.b32.xlu0 %v355, 122
  %v357 = vpop.permute.xlu0 %356
  %vm358 = vcmask 7168
  %s359 = scalar_lea.vmem %s1, 70
  %360 = vst.msk [vmem:[%s359] ss:$8 sm:$0xf] %vm358, %v357
  %s361 = scalar_lea.vmem %s1, 70
  %362 = vst.msk [vmem:[%s361] ss:$8 sm:$0xf0] %vm358, %v357
  %s363 = scalar_lea.vmem %s0, 16
  %v364 = vld [vmem:[%s363] sm:$0xff]
  %365 = vrot.lane.b32.xlu0 %v364, 122
  %v366 = vpop.permute.xlu0 %365
  %vm367 = vcmask 7168
  %s368 = scalar_lea.vmem %s1, 134
  %369 = vst.msk [vmem:[%s368] ss:$8 sm:$0xf] %vm367, %v366
  %s370 = scalar_lea.vmem %s1, 134
  %371 = vst.msk [vmem:[%s370] ss:$8 sm:$0xf0] %vm367, %v366
  %s372 = scalar_lea.vmem %s0, 24
  %v373 = vld [vmem:[%s372] sm:$0xff]
  %374 = vrot.lane.b32.xlu0 %v373, 122
  %v375 = vpop.permute.xlu0 %374
  %vm376 = vcmask 7168
  %s377 = scalar_lea.vmem %s1, 198
  %378 = vst.msk [vmem:[%s377] ss:$8 sm:$0xf] %vm376, %v375
  %s379 = scalar_lea.vmem %s1, 198
  %380 = vst.msk [vmem:[%s379] ss:$8 sm:$0xf0] %vm376, %v375
  %s381 = scalar_lea.vmem %s0, 32
  %v382 = vld [vmem:[%s381] sm:$0xff]
  %383 = vrot.lane.b32.xlu0 %v382, 122
  %v384 = vpop.permute.xlu0 %383
  %vm385 = vcmask 7168
  %s386 = scalar_lea.vmem %s1, 262
  %387 = vst.msk [vmem:[%s386] ss:$8 sm:$0xf] %vm385, %v384
  %s388 = scalar_lea.vmem %s1, 262
  %389 = vst.msk [vmem:[%s388] ss:$8 sm:$0xf0] %vm385, %v384
  %s390 = scalar_lea.vmem %s0, 40
  %v391 = vld [vmem:[%s390] sm:$0xff]
  %392 = vrot.lane.b32.xlu0 %v391, 122
  %v393 = vpop.permute.xlu0 %392
  %vm394 = vcmask 7168
  %s395 = scalar_lea.vmem %s1, 326
  %396 = vst.msk [vmem:[%s395] ss:$8 sm:$0xf] %vm394, %v393
  %s397 = scalar_lea.vmem %s1, 326
  %398 = vst.msk [vmem:[%s397] ss:$8 sm:$0xf0] %vm394, %v393
  %s399 = scalar_lea.vmem %s0, 48
  %v400 = vld [vmem:[%s399] sm:$0x1]
  %401 = vrot.lane.b32.xlu0 %v400, 122
  %v402 = vpop.permute.xlu0 %401
  %vm403 = vcmask 7168
  %s404 = scalar_lea.vmem %s1, 390
  %405 = vst.msk [vmem:[%s404] sm:$0x1] %vm403, %v402
  %v406 = vld [vmem:[%s0] sm:$0xff]
  %407 = vrot.lane.b32.xlu0 %v406, 121
  %v408 = vpop.permute.xlu0 %407
  %vm409 = vcmask 7168
  %s410 = scalar_lea.vmem %s1, 7
  %411 = vst.msk [vmem:[%s410] ss:$8 sm:$0xf] %vm409, %v408
  %s412 = scalar_lea.vmem %s1, 7
  %413 = vst.msk [vmem:[%s412] ss:$8 sm:$0xf0] %vm409, %v408
  %s414 = scalar_lea.vmem %s0, 8
  %v415 = vld [vmem:[%s414] sm:$0xff]
  %416 = vrot.lane.b32.xlu0 %v415, 121
  %v417 = vpop.permute.xlu0 %416
  %vm418 = vcmask 7168
  %s419 = scalar_lea.vmem %s1, 71
  %420 = vst.msk [vmem:[%s419] ss:$8 sm:$0xf] %vm418, %v417
  %s421 = scalar_lea.vmem %s1, 71
  %422 = vst.msk [vmem:[%s421] ss:$8 sm:$0xf0] %vm418, %v417
  %s423 = scalar_lea.vmem %s0, 16
  %v424 = vld [vmem:[%s423] sm:$0xff]
  %425 = vrot.lane.b32.xlu0 %v424, 121
  %v426 = vpop.permute.xlu0 %425
  %vm427 = vcmask 7168
  %s428 = scalar_lea.vmem %s1, 135
  %429 = vst.msk [vmem:[%s428] ss:$8 sm:$0xf] %vm427, %v426
  %s430 = scalar_lea.vmem %s1, 135
  %431 = vst.msk [vmem:[%s430] ss:$8 sm:$0xf0] %vm427, %v426
  %s432 = scalar_lea.vmem %s0, 24
  %v433 = vld [vmem:[%s432] sm:$0xff]
  %434 = vrot.lane.b32.xlu0 %v433, 121
  %v435 = vpop.permute.xlu0 %434
  %vm436 = vcmask 7168
  %s437 = scalar_lea.vmem %s1, 199
  %438 = vst.msk [vmem:[%s437] ss:$8 sm:$0xf] %vm436, %v435
  %s439 = scalar_lea.vmem %s1, 199
  %440 = vst.msk [vmem:[%s439] ss:$8 sm:$0xf0] %vm436, %v435
  %s441 = scalar_lea.vmem %s0, 32
  %v442 = vld [vmem:[%s441] sm:$0xff]
  %443 = vrot.lane.b32.xlu0 %v442, 121
  %v444 = vpop.permute.xlu0 %443
  %vm445 = vcmask 7168
  %s446 = scalar_lea.vmem %s1, 263
  %447 = vst.msk [vmem:[%s446] ss:$8 sm:$0xf] %vm445, %v444
  %s448 = scalar_lea.vmem %s1, 263
  %449 = vst.msk [vmem:[%s448] ss:$8 sm:$0xf0] %vm445, %v444
  %s450 = scalar_lea.vmem %s0, 40
  %v451 = vld [vmem:[%s450] sm:$0xff]
  %452 = vrot.lane.b32.xlu0 %v451, 121
  %v453 = vpop.permute.xlu0 %452
  %vm454 = vcmask 7168
  %s455 = scalar_lea.vmem %s1, 327
  %456 = vst.msk [vmem:[%s455] ss:$8 sm:$0xf] %vm454, %v453
  %s457 = scalar_lea.vmem %s1, 327
  %458 = vst.msk [vmem:[%s457] ss:$8 sm:$0xf0] %vm454, %v453
  %s459 = scalar_lea.vmem %s0, 48
  %v460 = vld [vmem:[%s459] sm:$0x1]
  %461 = vrot.lane.b32.xlu0 %v460, 121
  %v462 = vpop.permute.xlu0 %461
  %vm463 = vcmask 7168
  %s464 = scalar_lea.vmem %s1, 391
  %465 = vst.msk [vmem:[%s464] sm:$0x1] %vm463, %v462

// kernel: simple_model_forward.1
$region0: #{simple_model_forward.1}
  #allocation0 [shape = 'u32[]', space=smem, size = 0x4, offset = 0x4, fixed_abs, tag = 'smem constant byte address 0x4 - core index']
  #allocation1 [shape = 'u32[144,128]{1,0:T(1,128)}', space=vmem, size = 0x12000, scoped, tag = 'internal scratch']
  %s0 = inlined_call_operand.vmem [shape: bf16[392,100], index: 0, kind: input, shape index: {}]
  %s1 = inlined_call_operand.vmem [shape: f32[392,1], index: 1, kind: input, shape index: {}]
  %s2 = inlined_call_operand.vmem [shape: bf16[100,120], index: 2, kind: input, shape index: {}]
  %s3 = inlined_call_operand.vmem [shape: f32[1,120], index: 3, kind: input, shape index: {}]
  %s4 = inlined_call_operand.vmem [shape: f32[1,30], index: 4, kind: input, shape index: {}]
  %s5 = inlined_call_operand.vmem [shape: f32[1,30], index: 5, kind: input, shape index: {}]
  %s6 = inlined_call_operand.vmem [shape: bf16[49,30,100], index: 6, kind: input, shape index: {}]
  %s7 = inlined_call_operand.vmem [shape: f32[1,100], index: 7, kind: input, shape index: {}]
  %s8 = inlined_call_operand.vmem [shape: bf16[100,10], index: 8, kind: input, shape index: {}]
  %s9 = inlined_call_operand.vmem [shape: f32[1,10], index: 9, kind: input, shape index: {}]
  %s10 = inlined_call_operand.vmem [shape: f32[8,10], index: 10, kind: output, shape index: {}]
  %s11 = sld [smem:[#allocation0]]
  $region50: #{simple_model_forward.1} parent=0
    _
  %s13 = ssub.s32 1, %s11
  %s14 = scalar_select 0, %s13, %s11
  // Predicated region
  $region2: #{simple_model_forward.1} parent=0 // pred_check
    _
  $region3: #{simple_model_forward.1} parent=0 // pred_check_branch
    %16 = sbr.rel (0) target = $region5
  $region4: #{simple_model_forward.1} parent=0 // pred_region
    _
  $region5: #{simple_model_forward.1} parent=0 // pred_fallthru
    _
  // Predicated region
  $region6: #{simple_model_forward.1} parent=0 // pred_check
    _
  $region7: #{simple_model_forward.1} parent=0 // pred_check_branch
    %18 = sbr.rel (0) target = $region9
  $region8: #{simple_model_forward.1} parent=0 // pred_region
    _
  $region9: #{simple_model_forward.1} parent=0 // pred_fallthru
    _
  // Predicated region
  $region10: #{simple_model_forward.1} parent=0 // pred_check
    _
  $region11: #{simple_model_forward.1} parent=0 // pred_check_branch
    %20 = sbr.rel (0) target = $region13
  $region12: #{simple_model_forward.1} parent=0 // pred_region
    _
  $region13: #{simple_model_forward.1} parent=0 // pred_fallthru
    _
  // Predicated region
  $region14: #{simple_model_forward.1} parent=0 // pred_check
    _
  $region15: #{simple_model_forward.1} parent=0 // pred_check_branch
    %22 = sbr.rel (0) target = $region17
  $region16: #{simple_model_forward.1} parent=0 // pred_region
    _
  $region17: #{simple_model_forward.1} parent=0 // pred_fallthru
    _
  // Predicated region
  $region18: #{simple_model_forward.1} parent=0 // pred_check
    _
  $region19: #{simple_model_forward.1} parent=0 // pred_check_branch
    %24 = sbr.rel (0) target = $region21
  $region20: #{simple_model_forward.1} parent=0 // pred_region
    _
  $region21: #{simple_model_forward.1} parent=0 // pred_fallthru
    _
  // Predicated region
  $region22: #{simple_model_forward.1} parent=0 // pred_check
    _
  $region23: #{simple_model_forward.1} parent=0 // pred_check_branch
    %26 = sbr.rel (0) target = $region25
  $region24: #{simple_model_forward.1} parent=0 // pred_region
    _
  $region25: #{simple_model_forward.1} parent=0 // pred_fallthru
    _
  // Predicated region
  $region26: #{simple_model_forward.1} parent=0 // pred_check
    _
  $region27: #{simple_model_forward.1} parent=0 // pred_check_branch
    %28 = sbr.rel (0) target = $region29
  $region28: #{simple_model_forward.1} parent=0 // pred_region
    _
  $region29: #{simple_model_forward.1} parent=0 // pred_fallthru
    _
  // Predicated region
  $region30: #{simple_model_forward.1} parent=0 // pred_check
    _
  $region31: #{simple_model_forward.1} parent=0 // pred_check_branch
    %30 = sbr.rel (0) target = $region33
  $region32: #{simple_model_forward.1} parent=0 // pred_region
    _
  $region33: #{simple_model_forward.1} parent=0 // pred_fallthru
    _
  // Predicated region
  $region34: #{simple_model_forward.1} parent=0 // pred_check
    _
  $region35: #{simple_model_forward.1} parent=0 // pred_check_branch
    %32 = sbr.rel (0) target = $region37
  $region36: #{simple_model_forward.1} parent=0 // pred_region
    _
  $region37: #{simple_model_forward.1} parent=0 // pred_fallthru
    _
  // Predicated region
  $region38: #{simple_model_forward.1} parent=0 // pred_check
    _
  $region39: #{simple_model_forward.1} parent=0 // pred_check_branch
    %34 = sbr.rel (0) target = $region41
  $region40: #{simple_model_forward.1} parent=0 // pred_region
    _
  $region41: #{simple_model_forward.1} parent=0 // pred_fallthru
    _
  %v36 = vld [vmem:[%s0] sm:$0xf]
  %v37 = vld [vmem:[%s0 + $0x4] sm:$0xf]
  %v38 = vld [vmem:[%s0 + $0x8] sm:$0xf]
  %v39 = vld [vmem:[%s0 + $0xc] sm:$0xf]
  %v40 = vld [vmem:[%s0 + $0x10] sm:$0xf]
  %v41 = vld [vmem:[%s0 + $0x14] sm:$0xf]
  %v42 = vld [vmem:[%s0 + $0x18] sm:$0xf]
  %v43 = vld [vmem:[%s0 + $0x1c] sm:$0xf]
  %v44 = vld [vmem:[%s0 + $0x20] sm:$0xf]
  %v45 = vld [vmem:[%s0 + $0x24] sm:$0xf]
  %v46 = vld [vmem:[%s0 + $0x28] sm:$0xf]
  %v47 = vld [vmem:[%s0 + $0x2c] sm:$0xf]
  %v48 = vld [vmem:[%s0 + $0x30] sm:$0xf]
  %v49 = vld [vmem:[%s0 + $0x34] sm:$0xf]
  %v50 = vld [vmem:[%s0 + $0x38] sm:$0xf]
  %v51 = vld [vmem:[%s0 + $0x3c] sm:$0xf]
  %v52 = vld [vmem:[%s0 + $0x40] sm:$0xf]
  %v53 = vld [vmem:[%s0 + $0x44] sm:$0xf]
  %v54 = vld [vmem:[%s0 + $0x48] sm:$0xf]
  %v55 = vld [vmem:[%s0 + $0x4c] sm:$0xf]
  %v56 = vld [vmem:[%s0 + $0x50] sm:$0xf]
  %v57 = vld [vmem:[%s0 + $0x54] sm:$0xf]
  %v58 = vld [vmem:[%s0 + $0x58] sm:$0xf]
  %v59 = vld [vmem:[%s0 + $0x5c] sm:$0xf]
  %v60 = vld [vmem:[%s0 + $0x60] sm:$0xf]
  %v61 = vld [vmem:[%s0 + $0x64] sm:$0xf]
  %v62 = vld [vmem:[%s0 + $0x68] sm:$0xf]
  %v63 = vld [vmem:[%s0 + $0x6c] sm:$0xf]
  %v64 = vld [vmem:[%s0 + $0x70] sm:$0xf]
  %v65 = vld [vmem:[%s0 + $0x74] sm:$0xf]
  %v66 = vld [vmem:[%s0 + $0x78] sm:$0xf]
  %v67 = vld [vmem:[%s0 + $0x7c] sm:$0xf]
  %v68 = vld [vmem:[%s0 + $0x80] sm:$0xf]
  %v69 = vld [vmem:[%s0 + $0x84] sm:$0xf]
  %v70 = vld [vmem:[%s0 + $0x88] sm:$0xf]
  %v71 = vld [vmem:[%s0 + $0x8c] sm:$0xf]
  %v72 = vld [vmem:[%s0 + $0x90] sm:$0xf]
  %v73 = vld [vmem:[%s0 + $0x94] sm:$0xf]
  %v74 = vld [vmem:[%s0 + $0x98] sm:$0xf]
  %v75 = vld [vmem:[%s0 + $0x9c] sm:$0xf]
  %v76 = vld [vmem:[%s0 + $0xa0] sm:$0xf]
  %v77 = vld [vmem:[%s0 + $0xa4] sm:$0xf]
  %v78 = vld [vmem:[%s0 + $0xa8] sm:$0xf]
  %v79 = vld [vmem:[%s0 + $0xac] sm:$0xf]
  %v80 = vld [vmem:[%s0 + $0xb0] sm:$0xf]
  %v81 = vld [vmem:[%s0 + $0xb4] sm:$0xf]
  %v82 = vld [vmem:[%s0 + $0xb8] sm:$0xf]
  %v83 = vld [vmem:[%s0 + $0xbc] sm:$0xf]
  %v84 = vld [vmem:[%s0 + $0xc0] sm:$0xf]
  %v85 = vld [vmem:[%s2] sm:$0xf]
  %v86 = vld [vmem:[%s2 + $0x4] sm:$0xf]
  %v87 = vld [vmem:[%s2 + $0x8] sm:$0xf]
  %v88 = vld [vmem:[%s2 + $0xc] sm:$0xf]
  %v89 = vld [vmem:[%s2 + $0x10] sm:$0xf]
  %v90 = vld [vmem:[%s2 + $0x14] sm:$0xf]
  %v91 = vld [vmem:[%s2 + $0x18] sm:$0xf]
  %v92 = vld [vmem:[%s2 + $0x1c] sm:$0xf]
  %v93 = vld [vmem:[%s2 + $0x20] sm:$0xf]
  %v94 = vld [vmem:[%s2 + $0x24] sm:$0xf]
  %v95 = vld [vmem:[%s2 + $0x28] sm:$0xf]
  %v96 = vld [vmem:[%s2 + $0x2c] sm:$0xf]
  %v97 = vld [vmem:[%s2 + $0x30] sm:$0x3]
  %v98 = vld [vmem:[%s3] sm:$0x1]
  %v100 = vlaneseq
  %v101 = vshrl.u32 %v100, 7
  %v102 = vsub.s32 0, %v101
  %v103 = vrot.slane %v98, %v102
  %v154 = vunpack.c.l.b16 %v36
  %v155 = vunpack.c.l.b16 %v37
  %v156 = vunpack.c.l.b16 %v38
  %v157 = vunpack.c.l.b16 %v39
  %v158 = vunpack.c.l.b16 %v40
  %v159 = vunpack.c.l.b16 %v41
  %v160 = vunpack.c.l.b16 %v42
  %v161 = vunpack.c.l.b16 %v43
  %v162 = vunpack.c.l.b16 %v44
  %v163 = vunpack.c.l.b16 %v45
  %v164 = vunpack.c.l.b16 %v46
  %v165 = vunpack.c.l.b16 %v47
  %v166 = vunpack.c.l.b16 %v48
  %v167 = vunpack.c.l.b16 %v49
  %v168 = vunpack.c.l.b16 %v50
  %v169 = vunpack.c.l.b16 %v51
  %v170 = vunpack.c.l.b16 %v52
  %v171 = vunpack.c.l.b16 %v53
  %v172 = vunpack.c.l.b16 %v54
  %v173 = vunpack.c.l.b16 %v55
  %v174 = vunpack.c.l.b16 %v56
  %v175 = vunpack.c.l.b16 %v57
  %v176 = vunpack.c.l.b16 %v58
  %v177 = vunpack.c.l.b16 %v59
  %v178 = vunpack.c.l.b16 %v60
  %v179 = vunpack.c.l.b16 %v61
  %v180 = vunpack.c.l.b16 %v62
  %v181 = vunpack.c.l.b16 %v63
  %v182 = vunpack.c.l.b16 %v64
  %v183 = vunpack.c.l.b16 %v65
  %v184 = vunpack.c.l.b16 %v66
  %v185 = vunpack.c.l.b16 %v67
  %v186 = vunpack.c.l.b16 %v68
  %v187 = vunpack.c.l.b16 %v69
  %v188 = vunpack.c.l.b16 %v70
  %v189 = vunpack.c.l.b16 %v71
  %v190 = vunpack.c.l.b16 %v72
  %v191 = vunpack.c.l.b16 %v73
  %v192 = vunpack.c.l.b16 %v74
  %v193 = vunpack.c.l.b16 %v75
  %v194 = vunpack.c.l.b16 %v76
  %v195 = vunpack.c.l.b16 %v77
  %v196 = vunpack.c.l.b16 %v78
  %v197 = vunpack.c.l.b16 %v79
  %v198 = vunpack.c.l.b16 %v80
  %v199 = vunpack.c.l.b16 %v81
  %v200 = vunpack.c.l.b16 %v82
  %v201 = vunpack.c.l.b16 %v83
  %v202 = vunpack.c.l.b16 %v84
  %v203 = vpack.c.b16 %v155, %v154
  %v204 = vpack.c.b16 %v157, %v156
  %v205 = vpack.c.b16 %v159, %v158
  %v206 = vpack.c.b16 %v161, %v160
  %v207 = vpack.c.b16 %v163, %v162
  %v208 = vpack.c.b16 %v165, %v164
  %v209 = vpack.c.b16 %v167, %v166
  %v210 = vpack.c.b16 %v169, %v168
  %v211 = vpack.c.b16 %v171, %v170
  %v212 = vpack.c.b16 %v173, %v172
  %v213 = vpack.c.b16 %v175, %v174
  %v214 = vpack.c.b16 %v177, %v176
  %v215 = vpack.c.b16 %v179, %v178
  %v216 = vpack.c.b16 %v181, %v180
  %v217 = vpack.c.b16 %v183, %v182
  %v218 = vpack.c.b16 %v185, %v184
  %v219 = vpack.c.b16 %v187, %v186
  %v220 = vpack.c.b16 %v189, %v188
  %v221 = vpack.c.b16 %v191, %v190
  %v222 = vpack.c.b16 %v193, %v192
  %v223 = vpack.c.b16 %v195, %v194
  %v224 = vpack.c.b16 %v197, %v196
  %v225 = vpack.c.b16 %v199, %v198
  %v226 = vpack.c.b16 %v201, %v200
  %v227 = vpack.c.b16 %v202, %v202
  %v241 = vunpack.c.l.b16 %v85
  %v242 = vunpack.c.l.b16 %v86
  %v243 = vunpack.c.l.b16 %v87
  %v244 = vunpack.c.l.b16 %v88
  %v245 = vunpack.c.l.b16 %v89
  %v246 = vunpack.c.l.b16 %v90
  %v247 = vunpack.c.l.b16 %v91
  %v248 = vunpack.c.l.b16 %v92
  %v249 = vunpack.c.l.b16 %v93
  %v250 = vunpack.c.l.b16 %v94
  %v251 = vunpack.c.l.b16 %v95
  %v252 = vunpack.c.l.b16 %v96
  %v253 = vunpack.c.l.b16 %v97
  %v254 = vpack.c.b16 %v242, %v241
  %v255 = vpack.c.b16 %v244, %v243
  %v256 = vpack.c.b16 %v246, %v245
  %v257 = vpack.c.b16 %v248, %v247
  %v258 = vpack.c.b16 %v250, %v249
  %v259 = vpack.c.b16 %v252, %v251
  %v260 = vpack.c.b16 %v253, %v253
  %vm267 = vcmask 818176
  %v269 = vsel %vm267, %v203, 0
  %v272 = vsel %vm267, %v204, 0
  %v275 = vsel %vm267, %v205, 0
  %v278 = vsel %vm267, %v206, 0
  %v281 = vsel %vm267, %v207, 0
  %v284 = vsel %vm267, %v208, 0
  %v287 = vsel %vm267, %v209, 0
  %v290 = vsel %vm267, %v210, 0
  %v293 = vsel %vm267, %v211, 0
  %v296 = vsel %vm267, %v212, 0
  %v299 = vsel %vm267, %v213, 0
  %v302 = vsel %vm267, %v214, 0
  %v305 = vsel %vm267, %v215, 0
  %v308 = vsel %vm267, %v216, 0
  %v311 = vsel %vm267, %v217, 0
  %v314 = vsel %vm267, %v218, 0
  %v317 = vsel %vm267, %v219, 0
  %v320 = vsel %vm267, %v220, 0
  %v323 = vsel %vm267, %v221, 0
  %v326 = vsel %vm267, %v222, 0
  %v329 = vsel %vm267, %v223, 0
  %v332 = vsel %vm267, %v224, 0
  %v335 = vsel %vm267, %v225, 0
  %v338 = vsel %vm267, %v226, 0
  %v341 = vsel %vm267, %v227, 0
  %vm343 = vcmask 1041408
  %v345 = vsel %vm343, %v260, 0
  %347 = vmatprep.subr.bf16.mxu0 0
  %348 = vmatpush1.bf16.msra.mxu0 %v254
  %349 = vmatprep.subr.bf16.mxu0 0
  %350 = vmatpush1.bf16.msra.mxu0 %v255
  %351 = vmatprep.subr.bf16.mxu0 0
  %352 = vmatpush1.bf16.msra.mxu0 %v256
  %353 = vmatprep.subr.bf16.mxu0 0
  %354 = vmatpush1.bf16.msra.mxu0 %v257
  %355 = vmatprep.subr.bf16.mxu0 0
  %356 = vmatpush1.bf16.msra.mxu0 %v258
  %357 = vmatprep.subr.bf16.mxu0 0
  %358 = vmatpush1.bf16.msra.mxu0 %v259
  %359 = vmatprep.subr.bf16.mxu0 0
  %360 = vmatpush1.bf16.msra.mxu0 %v345
  %361 = vmatprep.subr.bf16.mxu0 0
  %362 = vmatpush1.bf16.msra.mxu0 0
  %363 = vmatprep.subr.bf16.mxu0 0
  %364 = vmatpush1.bf16.msra.mxu0 0
  %365 = vmatprep.subr.bf16.mxu0 0
  %366 = vmatpush1.bf16.msra.mxu0 0
  %367 = vmatprep.subr.bf16.mxu0 0
  %368 = vmatpush1.bf16.msra.mxu0 0
  %369 = vmatprep.subr.bf16.mxu0 0
  %370 = vmatpush1.bf16.msra.mxu0 0
  %371 = vmatprep.subr.bf16.mxu0 0
  %372 = vmatpush1.bf16.msra.mxu0 0
  %373 = vmatprep.subr.bf16.mxu0 0
  %374 = vmatpush1.bf16.msra.mxu0 0
  %375 = vmatprep.subr.bf16.mxu0 0
  %376 = vmatpush1.bf16.msra.mxu0 0
  %377 = vmatprep.subr.bf16.mxu0 0
  %378 = vmatpush1.bf16.msra.mxu0 0
  %379 = vmatprep.mubr.bf16.mxu0 0
  %380 = vmatmul.mubr.bf16.gmra.mrb[0].mxu0 %v269
  %v381 = vpop.f32.mrb[0].mxu0
  %v382 = vadd.f32 %v103, %v381
  %v383 = vpop.f32.mrb[0].mxu0
  %v384 = vpop.f32.mrb[0].mxu0
  %v385 = vadd.f32 %v103, %v384
  %v386 = vpop.f32.mrb[0].mxu0
  %387 = vmatprep.mubr.bf16.mxu0 0
  %388 = vmatmul.mubr.bf16.gmra.mrb[0].mxu0 %v272
  %v389 = vpop.f32.mrb[0].mxu0
  %v390 = vadd.f32 %v103, %v389
  %v391 = vpop.f32.mrb[0].mxu0
  %v392 = vpop.f32.mrb[0].mxu0
  %v393 = vadd.f32 %v103, %v392
  %v394 = vpop.f32.mrb[0].mxu0
  %395 = vmatprep.mubr.bf16.mxu0 0
  %396 = vmatmul.mubr.bf16.gmra.mrb[0].mxu0 %v275
  %v397 = vpop.f32.mrb[0].mxu0
  %v398 = vadd.f32 %v103, %v397
  %v399 = vpop.f32.mrb[0].mxu0
  %v400 = vpop.f32.mrb[0].mxu0
  %v401 = vadd.f32 %v103, %v400
  %v402 = vpop.f32.mrb[0].mxu0
  %403 = vmatprep.mubr.bf16.mxu0 0
  %404 = vmatmul.mubr.bf16.gmra.mrb[0].mxu0 %v278
  %v405 = vpop.f32.mrb[0].mxu0
  %v406 = vadd.f32 %v103, %v405
  %v407 = vpop.f32.mrb[0].mxu0
  %v408 = vpop.f32.mrb[0].mxu0
  %v409 = vadd.f32 %v103, %v408
  %v410 = vpop.f32.mrb[0].mxu0
  %411 = vmatprep.mubr.bf16.mxu0 0
  %412 = vmatmul.mubr.bf16.gmra.mrb[0].mxu0 %v281
  %v413 = vpop.f32.mrb[0].mxu0
  %v414 = vadd.f32 %v103, %v413
  %v415 = vpop.f32.mrb[0].mxu0
  %v416 = vpop.f32.mrb[0].mxu0
  %v417 = vadd.f32 %v103, %v416
  %v418 = vpop.f32.mrb[0].mxu0
  %419 = vmatprep.mubr.bf16.mxu0 0
  %420 = vmatmul.mubr.bf16.gmra.mrb[0].mxu0 %v284
  %v421 = vpop.f32.mrb[0].mxu0
  %v422 = vadd.f32 %v103, %v421
  %v423 = vpop.f32.mrb[0].mxu0
  %v424 = vpop.f32.mrb[0].mxu0
  %v425 = vadd.f32 %v103, %v424
  %v426 = vpop.f32.mrb[0].mxu0
  %427 = vmatprep.mubr.bf16.mxu0 0
  %428 = vmatmul.mubr.bf16.gmra.mrb[0].mxu0 %v287
  %v429 = vpop.f32.mrb[0].mxu0
  %v430 = vadd.f32 %v103, %v429
  %v431 = vpop.f32.mrb[0].mxu0
  %v432 = vpop.f32.mrb[0].mxu0
  %v433 = vadd.f32 %v103, %v432
  %v434 = vpop.f32.mrb[0].mxu0
  %435 = vmatprep.mubr.bf16.mxu0 0
  %436 = vmatmul.mubr.bf16.gmra.mrb[0].mxu0 %v290
  %v437 = vpop.f32.mrb[0].mxu0
  %v438 = vadd.f32 %v103, %v437
  %v439 = vpop.f32.mrb[0].mxu0
  %v440 = vpop.f32.mrb[0].mxu0
  %v441 = vadd.f32 %v103, %v440
  %v442 = vpop.f32.mrb[0].mxu0
  %443 = vmatprep.mubr.bf16.mxu0 0
  %444 = vmatmul.mubr.bf16.gmra.mrb[0].mxu0 %v293
  %v445 = vpop.f32.mrb[0].mxu0
  %v446 = vadd.f32 %v103, %v445
  %v447 = vpop.f32.mrb[0].mxu0
  %v448 = vpop.f32.mrb[0].mxu0
  %v449 = vadd.f32 %v103, %v448
  %v450 = vpop.f32.mrb[0].mxu0
  %451 = vmatprep.mubr.bf16.mxu0 0
  %452 = vmatmul.mubr.bf16.gmra.mrb[0].mxu0 %v296
  %v453 = vpop.f32.mrb[0].mxu0
  %v454 = vadd.f32 %v103, %v453
  %v455 = vpop.f32.mrb[0].mxu0
  %v456 = vpop.f32.mrb[0].mxu0
  %v457 = vadd.f32 %v103, %v456
  %v458 = vpop.f32.mrb[0].mxu0
  %459 = vmatprep.mubr.bf16.mxu0 0
  %460 = vmatmul.mubr.bf16.gmra.mrb[0].mxu0 %v299
  %v461 = vpop.f32.mrb[0].mxu0
  %v462 = vadd.f32 %v103, %v461
  %v463 = vpop.f32.mrb[0].mxu0
  %v464 = vpop.f32.mrb[0].mxu0
  %v465 = vadd.f32 %v103, %v464
  %v466 = vpop.f32.mrb[0].mxu0
  %467 = vmatprep.mubr.bf16.mxu0 0
  %468 = vmatmul.mubr.bf16.gmra.mrb[0].mxu0 %v302
  %v469 = vpop.f32.mrb[0].mxu0
  %v470 = vadd.f32 %v103, %v469
  %v471 = vpop.f32.mrb[0].mxu0
  %v472 = vpop.f32.mrb[0].mxu0
  %v473 = vadd.f32 %v103, %v472
  %v474 = vpop.f32.mrb[0].mxu0
  %475 = vmatprep.mubr.bf16.mxu0 0
  %476 = vmatmul.mubr.bf16.gmra.mrb[0].mxu0 %v305
  %v477 = vpop.f32.mrb[0].mxu0
  %v478 = vadd.f32 %v103, %v477
  %v479 = vpop.f32.mrb[0].mxu0
  %v480 = vpop.f32.mrb[0].mxu0
  %v481 = vadd.f32 %v103, %v480
  %v482 = vpop.f32.mrb[0].mxu0
  %483 = vmatprep.mubr.bf16.mxu0 0
  %484 = vmatmul.mubr.bf16.gmra.mrb[0].mxu0 %v308
  %v485 = vpop.f32.mrb[0].mxu0
  %v486 = vadd.f32 %v103, %v485
  %v487 = vpop.f32.mrb[0].mxu0
  %v488 = vpop.f32.mrb[0].mxu0
  %v489 = vadd.f32 %v103, %v488
  %v490 = vpop.f32.mrb[0].mxu0
  %491 = vmatprep.mubr.bf16.mxu0 0
  %492 = vmatmul.mubr.bf16.gmra.mrb[0].mxu0 %v311
  %v493 = vpop.f32.mrb[0].mxu0
  %v494 = vadd.f32 %v103, %v493
  %v495 = vpop.f32.mrb[0].mxu0
  %v496 = vpop.f32.mrb[0].mxu0
  %v497 = vadd.f32 %v103, %v496
  %v498 = vpop.f32.mrb[0].mxu0
  %499 = vmatprep.mubr.bf16.mxu0 0
  %500 = vmatmul.mubr.bf16.gmra.mrb[0].mxu0 %v314
  %v501 = vpop.f32.mrb[0].mxu0
  %v502 = vadd.f32 %v103, %v501
  %v503 = vpop.f32.mrb[0].mxu0
  %v504 = vpop.f32.mrb[0].mxu0
  %v505 = vadd.f32 %v103, %v504
  %v506 = vpop.f32.mrb[0].mxu0
  %507 = vmatprep.mubr.bf16.mxu0 0
  %508 = vmatmul.mubr.bf16.gmra.mrb[0].mxu0 %v317
  %v509 = vpop.f32.mrb[0].mxu0
  %v510 = vadd.f32 %v103, %v509
  %v511 = vpop.f32.mrb[0].mxu0
  %v512 = vpop.f32.mrb[0].mxu0
  %v513 = vadd.f32 %v103, %v512
  %v514 = vpop.f32.mrb[0].mxu0
  %515 = vmatprep.mubr.bf16.mxu0 0
  %516 = vmatmul.mubr.bf16.gmra.mrb[0].mxu0 %v320
  %v517 = vpop.f32.mrb[0].mxu0
  %v518 = vadd.f32 %v103, %v517
  %v519 = vpop.f32.mrb[0].mxu0
  %v520 = vpop.f32.mrb[0].mxu0
  %v521 = vadd.f32 %v103, %v520
  %v522 = vpop.f32.mrb[0].mxu0
  %523 = vmatprep.mubr.bf16.mxu0 0
  %524 = vmatmul.mubr.bf16.gmra.mrb[0].mxu0 %v323
  %v525 = vpop.f32.mrb[0].mxu0
  %v526 = vadd.f32 %v103, %v525
  %v527 = vpop.f32.mrb[0].mxu0
  %v528 = vpop.f32.mrb[0].mxu0
  %v529 = vadd.f32 %v103, %v528
  %v530 = vpop.f32.mrb[0].mxu0
  %531 = vmatprep.mubr.bf16.mxu0 0
  %532 = vmatmul.mubr.bf16.gmra.mrb[0].mxu0 %v326
  %v533 = vpop.f32.mrb[0].mxu0
  %v534 = vadd.f32 %v103, %v533
  %v535 = vpop.f32.mrb[0].mxu0
  %v536 = vpop.f32.mrb[0].mxu0
  %v537 = vadd.f32 %v103, %v536
  %v538 = vpop.f32.mrb[0].mxu0
  %539 = vmatprep.mubr.bf16.mxu0 0
  %540 = vmatmul.mubr.bf16.gmra.mrb[0].mxu0 %v329
  %v541 = vpop.f32.mrb[0].mxu0
  %v542 = vadd.f32 %v103, %v541
  %v543 = vpop.f32.mrb[0].mxu0
  %v544 = vpop.f32.mrb[0].mxu0
  %v545 = vadd.f32 %v103, %v544
  %v546 = vpop.f32.mrb[0].mxu0
  %547 = vmatprep.mubr.bf16.mxu0 0
  %548 = vmatmul.mubr.bf16.gmra.mrb[0].mxu0 %v332
  %v549 = vpop.f32.mrb[0].mxu0
  %v550 = vadd.f32 %v103, %v549
  %v551 = vpop.f32.mrb[0].mxu0
  %v552 = vpop.f32.mrb[0].mxu0
  %v553 = vadd.f32 %v103, %v552
  %v554 = vpop.f32.mrb[0].mxu0
  %555 = vmatprep.mubr.bf16.mxu0 0
  %556 = vmatmul.mubr.bf16.gmra.mrb[0].mxu0 %v335
  %v557 = vpop.f32.mrb[0].mxu0
  %v558 = vadd.f32 %v103, %v557
  %v559 = vpop.f32.mrb[0].mxu0
  %v560 = vpop.f32.mrb[0].mxu0
  %v561 = vadd.f32 %v103, %v560
  %v562 = vpop.f32.mrb[0].mxu0
  %563 = vmatprep.mubr.bf16.mxu0 0
  %564 = vmatmul.mubr.bf16.gmra.mrb[0].mxu0 %v338
  %v565 = vpop.f32.mrb[0].mxu0
  %v566 = vadd.f32 %v103, %v565
  %v567 = vpop.f32.mrb[0].mxu0
  %v568 = vpop.f32.mrb[0].mxu0
  %v569 = vadd.f32 %v103, %v568
  %v570 = vpop.f32.mrb[0].mxu0
  %571 = vmatprep.mubr.bf16.mxu0 0
  %572 = vmatmul.mubr.bf16.gmra.mrb[0].mxu0 %v341
  %v573 = vpop.f32.mrb[0].mxu0
  %v574 = vadd.f32 %v103, %v573
  %v575 = vpop.f32.mrb[0].mxu0
  %v576 = vpop.f32.mrb[0].mxu0
  %v577 = vpop.f32.mrb[0].mxu0
  %578 = vdwg.mxu0
  %vm579 = vcmp.gt.f32.partialorder %v382, 0.0
  %vm580 = vcmp.gt.f32.partialorder %v385, 0.0
  %vm581 = vcmp.gt.f32.partialorder %v390, 0.0
  %vm582 = vcmp.gt.f32.partialorder %v393, 0.0
  %vm583 = vcmp.gt.f32.partialorder %v398, 0.0
  %vm584 = vcmp.gt.f32.partialorder %v401, 0.0
  %vm585 = vcmp.gt.f32.partialorder %v406, 0.0
  %vm586 = vcmp.gt.f32.partialorder %v409, 0.0
  %vm587 = vcmp.gt.f32.partialorder %v414, 0.0
  %vm588 = vcmp.gt.f32.partialorder %v417, 0.0
  %vm589 = vcmp.gt.f32.partialorder %v422, 0.0
  %vm590 = vcmp.gt.f32.partialorder %v425, 0.0
  %vm591 = vcmp.gt.f32.partialorder %v430, 0.0
  %vm592 = vcmp.gt.f32.partialorder %v433, 0.0
  %vm593 = vcmp.gt.f32.partialorder %v438, 0.0
  %vm594 = vcmp.gt.f32.partialorder %v441, 0.0
  %vm595 = vcmp.gt.f32.partialorder %v446, 0.0
  %vm596 = vcmp.gt.f32.partialorder %v449, 0.0
  %vm597 = vcmp.gt.f32.partialorder %v454, 0.0
  %vm598 = vcmp.gt.f32.partialorder %v457, 0.0
  %vm599 = vcmp.gt.f32.partialorder %v462, 0.0
  %vm600 = vcmp.gt.f32.partialorder %v465, 0.0
  %vm601 = vcmp.gt.f32.partialorder %v470, 0.0
  %vm602 = vcmp.gt.f32.partialorder %v473, 0.0
  %vm603 = vcmp.gt.f32.partialorder %v478, 0.0
  %vm604 = vcmp.gt.f32.partialorder %v481, 0.0
  %vm605 = vcmp.gt.f32.partialorder %v486, 0.0
  %vm606 = vcmp.gt.f32.partialorder %v489, 0.0
  %vm607 = vcmp.gt.f32.partialorder %v494, 0.0
  %vm608 = vcmp.gt.f32.partialorder %v497, 0.0
  %vm609 = vcmp.gt.f32.partialorder %v502, 0.0
  %vm610 = vcmp.gt.f32.partialorder %v505, 0.0
  %vm611 = vcmp.gt.f32.partialorder %v510, 0.0
  %vm612 = vcmp.gt.f32.partialorder %v513, 0.0
  %vm613 = vcmp.gt.f32.partialorder %v518, 0.0
  %vm614 = vcmp.gt.f32.partialorder %v521, 0.0
  %vm615 = vcmp.gt.f32.partialorder %v526, 0.0
  %vm616 = vcmp.gt.f32.partialorder %v529, 0.0
  %vm617 = vcmp.gt.f32.partialorder %v534, 0.0
  %vm618 = vcmp.gt.f32.partialorder %v537, 0.0
  %vm619 = vcmp.gt.f32.partialorder %v542, 0.0
  %vm620 = vcmp.gt.f32.partialorder %v545, 0.0
  %vm621 = vcmp.gt.f32.partialorder %v550, 0.0
  %vm622 = vcmp.gt.f32.partialorder %v553, 0.0
  %vm623 = vcmp.gt.f32.partialorder %v558, 0.0
  %vm624 = vcmp.gt.f32.partialorder %v561, 0.0
  %vm625 = vcmp.gt.f32.partialorder %v566, 0.0
  %vm626 = vcmp.gt.f32.partialorder %v569, 0.0
  %vm627 = vcmp.gt.f32.partialorder %v574, 0.0
  %v628 = vmul.f32 %v382, 0.001
  %v629 = vmul.f32 %v385, 0.001
  %v630 = vmul.f32 %v390, 0.001
  %v631 = vmul.f32 %v393, 0.001
  %v632 = vmul.f32 %v398, 0.001
  %v633 = vmul.f32 %v401, 0.001
  %v634 = vmul.f32 %v406, 0.001
  %v635 = vmul.f32 %v409, 0.001
  %v636 = vmul.f32 %v414, 0.001
  %v637 = vmul.f32 %v417, 0.001
  %v638 = vmul.f32 %v422, 0.001
  %v639 = vmul.f32 %v425, 0.001
  %v640 = vmul.f32 %v430, 0.001
  %v641 = vmul.f32 %v433, 0.001
  %v642 = vmul.f32 %v438, 0.001
  %v643 = vmul.f32 %v441, 0.001
  %v644 = vmul.f32 %v446, 0.001
  %v645 = vmul.f32 %v449, 0.001
  %v646 = vmul.f32 %v454, 0.001
  %v647 = vmul.f32 %v457, 0.001
  %v648 = vmul.f32 %v462, 0.001
  %v649 = vmul.f32 %v465, 0.001
  %v650 = vmul.f32 %v470, 0.001
  %v651 = vmul.f32 %v473, 0.001
  %v652 = vmul.f32 %v478, 0.001
  %v653 = vmul.f32 %v481, 0.001
  %v654 = vmul.f32 %v486, 0.001
  %v655 = vmul.f32 %v489, 0.001
  %v656 = vmul.f32 %v494, 0.001
  %v657 = vmul.f32 %v497, 0.001
  %v658 = vmul.f32 %v502, 0.001
  %v659 = vmul.f32 %v505, 0.001
  %v660 = vmul.f32 %v510, 0.001
  %v661 = vmul.f32 %v513, 0.001
  %v662 = vmul.f32 %v518, 0.001
  %v663 = vmul.f32 %v521, 0.001
  %v664 = vmul.f32 %v526, 0.001
  %v665 = vmul.f32 %v529, 0.001
  %v666 = vmul.f32 %v534, 0.001
  %v667 = vmul.f32 %v537, 0.001
  %v668 = vmul.f32 %v542, 0.001
  %v669 = vmul.f32 %v545, 0.001
  %v670 = vmul.f32 %v550, 0.001
  %v671 = vmul.f32 %v553, 0.001
  %v672 = vmul.f32 %v558, 0.001
  %v673 = vmul.f32 %v561, 0.001
  %v674 = vmul.f32 %v566, 0.001
  %v675 = vmul.f32 %v569, 0.001
  %v676 = vmul.f32 %v574, 0.001
  %v677 = vsel %vm579, %v382, %v628
  %v678 = vsel %vm580, %v385, %v629
  %v679 = vsel %vm581, %v390, %v630
  %v680 = vsel %vm582, %v393, %v631
  %v681 = vsel %vm583, %v398, %v632
  %v682 = vsel %vm584, %v401, %v633
  %v683 = vsel %vm585, %v406, %v634
  %v684 = vsel %vm586, %v409, %v635
  %v685 = vsel %vm587, %v414, %v636
  %v686 = vsel %vm588, %v417, %v637
  %v687 = vsel %vm589, %v422, %v638
  %v688 = vsel %vm590, %v425, %v639
  %v689 = vsel %vm591, %v430, %v640
  %v690 = vsel %vm592, %v433, %v641
  %v691 = vsel %vm593, %v438, %v642
  %v692 = vsel %vm594, %v441, %v643
  %v693 = vsel %vm595, %v446, %v644
  %v694 = vsel %vm596, %v449, %v645
  %v695 = vsel %vm597, %v454, %v646
  %v696 = vsel %vm598, %v457, %v647
  %v697 = vsel %vm599, %v462, %v648
  %v698 = vsel %vm600, %v465, %v649
  %v699 = vsel %vm601, %v470, %v650
  %v700 = vsel %vm602, %v473, %v651
  %v701 = vsel %vm603, %v478, %v652
  %v702 = vsel %vm604, %v481, %v653
  %v703 = vsel %vm605, %v486, %v654
  %v704 = vsel %vm606, %v489, %v655
  %v705 = vsel %vm607, %v494, %v656
  %v706 = vsel %vm608, %v497, %v657
  %v707 = vsel %vm609, %v502, %v658
  %v708 = vsel %vm610, %v505, %v659
  %v709 = vsel %vm611, %v510, %v660
  %v710 = vsel %vm612, %v513, %v661
  %v711 = vsel %vm613, %v518, %v662
  %v712 = vsel %vm614, %v521, %v663
  %v713 = vsel %vm615, %v526, %v664
  %v714 = vsel %vm616, %v529, %v665
  %v715 = vsel %vm617, %v534, %v666
  %v716 = vsel %vm618, %v537, %v667
  %v717 = vsel %vm619, %v542, %v668
  %v718 = vsel %vm620, %v545, %v669
  %v719 = vsel %vm621, %v550, %v670
  %v720 = vsel %vm622, %v553, %v671
  %v721 = vsel %vm623, %v558, %v672
  %v722 = vsel %vm624, %v561, %v673
  %v723 = vsel %vm625, %v566, %v674
  %v724 = vsel %vm626, %v569, %v675
  %v725 = vsel %vm627, %v574, %v676
  %v726 = vld [vmem:[%s1] sm:$0xff]
  %v727 = vld [vmem:[%s1 + $0x8] sm:$0xff]
  %v728 = vld [vmem:[%s1 + $0x10] sm:$0xff]
  %v729 = vld [vmem:[%s1 + $0x18] sm:$0xff]
  %v730 = vld [vmem:[%s1 + $0x20] sm:$0xff]
  %v731 = vld [vmem:[%s1 + $0x28] sm:$0xff]
  %v732 = vld [vmem:[%s1 + $0x30] sm:$0xff]
  %v733 = vld [vmem:[%s1 + $0x38] sm:$0xff]
  %v734 = vld [vmem:[%s1 + $0x40] sm:$0xff]
  %v735 = vld [vmem:[%s1 + $0x48] sm:$0xff]
  %v736 = vld [vmem:[%s1 + $0x50] sm:$0xff]
  %v737 = vld [vmem:[%s1 + $0x58] sm:$0xff]
  %v738 = vld [vmem:[%s1 + $0x60] sm:$0xff]
  %v739 = vld [vmem:[%s1 + $0x68] sm:$0xff]
  %v740 = vld [vmem:[%s1 + $0x70] sm:$0xff]
  %v741 = vld [vmem:[%s1 + $0x78] sm:$0xff]
  %v742 = vld [vmem:[%s1 + $0x80] sm:$0xff]
  %v743 = vld [vmem:[%s1 + $0x88] sm:$0xff]
  %v744 = vld [vmem:[%s1 + $0x90] sm:$0xff]
  %v745 = vld [vmem:[%s1 + $0x98] sm:$0xff]
  %v746 = vld [vmem:[%s1 + $0xa0] sm:$0xff]
  %v747 = vld [vmem:[%s1 + $0xa8] sm:$0xff]
  %v748 = vld [vmem:[%s1 + $0xb0] sm:$0xff]
  %v749 = vld [vmem:[%s1 + $0xb8] sm:$0xff]
  %v750 = vld [vmem:[%s1 + $0xc0] sm:$0xff]
  %v751 = vld [vmem:[%s1 + $0xc8] sm:$0xff]
  %v752 = vld [vmem:[%s1 + $0xd0] sm:$0xff]
  %v753 = vld [vmem:[%s1 + $0xd8] sm:$0xff]
  %v754 = vld [vmem:[%s1 + $0xe0] sm:$0xff]
  %v755 = vld [vmem:[%s1 + $0xe8] sm:$0xff]
  %v756 = vld [vmem:[%s1 + $0xf0] sm:$0xff]
  %v757 = vld [vmem:[%s1 + $0xf8] sm:$0xff]
  %v758 = vld [vmem:[%s1 + $0x100] sm:$0xff]
  %v759 = vld [vmem:[%s1 + $0x108] sm:$0xff]
  %v760 = vld [vmem:[%s1 + $0x110] sm:$0xff]
  %v761 = vld [vmem:[%s1 + $0x118] sm:$0xff]
  %v762 = vld [vmem:[%s1 + $0x120] sm:$0xff]
  %v763 = vld [vmem:[%s1 + $0x128] sm:$0xff]
  %v764 = vld [vmem:[%s1 + $0x130] sm:$0xff]
  %v765 = vld [vmem:[%s1 + $0x138] sm:$0xff]
  %v766 = vld [vmem:[%s1 + $0x140] sm:$0xff]
  %v767 = vld [vmem:[%s1 + $0x148] sm:$0xff]
  %v768 = vld [vmem:[%s1 + $0x150] sm:$0xff]
  %v769 = vld [vmem:[%s1 + $0x158] sm:$0xff]
  %v770 = vld [vmem:[%s1 + $0x160] sm:$0xff]
  %v771 = vld [vmem:[%s1 + $0x168] sm:$0xff]
  %v772 = vld [vmem:[%s1 + $0x170] sm:$0xff]
  %v773 = vld [vmem:[%s1 + $0x178] sm:$0xff]
  %v774 = vld [vmem:[%s1 + $0x180] sm:$0xff]
  %776 = vset.pattern.permute.xlu0 0
  %777 = vperm.xlu0 %776, %v726
  %v778 = vpop.permute.xlu0 %777
  %781 = vset.pattern.permute.xlu0 0
  %782 = vperm.xlu0 %781, %v727
  %v783 = vpop.permute.xlu0 %782
  %786 = vset.pattern.permute.xlu0 0
  %787 = vperm.xlu0 %786, %v728
  %v788 = vpop.permute.xlu0 %787
  %791 = vset.pattern.permute.xlu0 0
  %792 = vperm.xlu0 %791, %v729
  %v793 = vpop.permute.xlu0 %792
  %796 = vset.pattern.permute.xlu0 0
  %797 = vperm.xlu0 %796, %v730
  %v798 = vpop.permute.xlu0 %797
  %801 = vset.pattern.permute.xlu0 0
  %802 = vperm.xlu0 %801, %v731
  %v803 = vpop.permute.xlu0 %802
  %806 = vset.pattern.permute.xlu0 0
  %807 = vperm.xlu0 %806, %v732
  %v808 = vpop.permute.xlu0 %807
  %811 = vset.pattern.permute.xlu0 0
  %812 = vperm.xlu0 %811, %v733
  %v813 = vpop.permute.xlu0 %812
  %816 = vset.pattern.permute.xlu0 0
  %817 = vperm.xlu0 %816, %v734
  %v818 = vpop.permute.xlu0 %817
  %821 = vset.pattern.permute.xlu0 0
  %822 = vperm.xlu0 %821, %v735
  %v823 = vpop.permute.xlu0 %822
  %826 = vset.pattern.permute.xlu0 0
  %827 = vperm.xlu0 %826, %v736
  %v828 = vpop.permute.xlu0 %827
  %831 = vset.pattern.permute.xlu0 0
  %832 = vperm.xlu0 %831, %v737
  %v833 = vpop.permute.xlu0 %832
  %836 = vset.pattern.permute.xlu0 0
  %837 = vperm.xlu0 %836, %v738
  %v838 = vpop.permute.xlu0 %837
  %841 = vset.pattern.permute.xlu0 0
  %842 = vperm.xlu0 %841, %v739
  %v843 = vpop.permute.xlu0 %842
  %846 = vset.pattern.permute.xlu0 0
  %847 = vperm.xlu0 %846, %v740
  %v848 = vpop.permute.xlu0 %847
  %851 = vset.pattern.permute.xlu0 0
  %852 = vperm.xlu0 %851, %v741
  %v853 = vpop.permute.xlu0 %852
  %856 = vset.pattern.permute.xlu0 0
  %857 = vperm.xlu0 %856, %v742
  %v858 = vpop.permute.xlu0 %857
  %861 = vset.pattern.permute.xlu0 0
  %862 = vperm.xlu0 %861, %v743
  %v863 = vpop.permute.xlu0 %862
  %866 = vset.pattern.permute.xlu0 0
  %867 = vperm.xlu0 %866, %v744
  %v868 = vpop.permute.xlu0 %867
  %871 = vset.pattern.permute.xlu0 0
  %872 = vperm.xlu0 %871, %v745
  %v873 = vpop.permute.xlu0 %872
  %876 = vset.pattern.permute.xlu0 0
  %877 = vperm.xlu0 %876, %v746
  %v878 = vpop.permute.xlu0 %877
  %881 = vset.pattern.permute.xlu0 0
  %882 = vperm.xlu0 %881, %v747
  %v883 = vpop.permute.xlu0 %882
  %886 = vset.pattern.permute.xlu0 0
  %887 = vperm.xlu0 %886, %v748
  %v888 = vpop.permute.xlu0 %887
  %891 = vset.pattern.permute.xlu0 0
  %892 = vperm.xlu0 %891, %v749
  %v893 = vpop.permute.xlu0 %892
  %896 = vset.pattern.permute.xlu0 0
  %897 = vperm.xlu0 %896, %v750
  %v898 = vpop.permute.xlu0 %897
  %901 = vset.pattern.permute.xlu0 0
  %902 = vperm.xlu0 %901, %v751
  %v903 = vpop.permute.xlu0 %902
  %906 = vset.pattern.permute.xlu0 0
  %907 = vperm.xlu0 %906, %v752
  %v908 = vpop.permute.xlu0 %907
  %911 = vset.pattern.permute.xlu0 0
  %912 = vperm.xlu0 %911, %v753
  %v913 = vpop.permute.xlu0 %912
  %916 = vset.pattern.permute.xlu0 0
  %917 = vperm.xlu0 %916, %v754
  %v918 = vpop.permute.xlu0 %917
  %921 = vset.pattern.permute.xlu0 0
  %922 = vperm.xlu0 %921, %v755
  %v923 = vpop.permute.xlu0 %922
  %926 = vset.pattern.permute.xlu0 0
  %927 = vperm.xlu0 %926, %v756
  %v928 = vpop.permute.xlu0 %927
  %931 = vset.pattern.permute.xlu0 0
  %932 = vperm.xlu0 %931, %v757
  %v933 = vpop.permute.xlu0 %932
  %936 = vset.pattern.permute.xlu0 0
  %937 = vperm.xlu0 %936, %v758
  %v938 = vpop.permute.xlu0 %937
  %941 = vset.pattern.permute.xlu0 0
  %942 = vperm.xlu0 %941, %v759
  %v943 = vpop.permute.xlu0 %942
  %946 = vset.pattern.permute.xlu0 0
  %947 = vperm.xlu0 %946, %v760
  %v948 = vpop.permute.xlu0 %947
  %951 = vset.pattern.permute.xlu0 0
  %952 = vperm.xlu0 %951, %v761
  %v953 = vpop.permute.xlu0 %952
  %956 = vset.pattern.permute.xlu0 0
  %957 = vperm.xlu0 %956, %v762
  %v958 = vpop.permute.xlu0 %957
  %961 = vset.pattern.permute.xlu0 0
  %962 = vperm.xlu0 %961, %v763
  %v963 = vpop.permute.xlu0 %962
  %966 = vset.pattern.permute.xlu0 0
  %967 = vperm.xlu0 %966, %v764
  %v968 = vpop.permute.xlu0 %967
  %971 = vset.pattern.permute.xlu0 0
  %972 = vperm.xlu0 %971, %v765
  %v973 = vpop.permute.xlu0 %972
  %976 = vset.pattern.permute.xlu0 0
  %977 = vperm.xlu0 %976, %v766
  %v978 = vpop.permute.xlu0 %977
  %981 = vset.pattern.permute.xlu0 0
  %982 = vperm.xlu0 %981, %v767
  %v983 = vpop.permute.xlu0 %982
  %986 = vset.pattern.permute.xlu0 0
  %987 = vperm.xlu0 %986, %v768
  %v988 = vpop.permute.xlu0 %987
  %991 = vset.pattern.permute.xlu0 0
  %992 = vperm.xlu0 %991, %v769
  %v993 = vpop.permute.xlu0 %992
  %996 = vset.pattern.permute.xlu0 0
  %997 = vperm.xlu0 %996, %v770
  %v998 = vpop.permute.xlu0 %997
  %1001 = vset.pattern.permute.xlu0 0
  %1002 = vperm.xlu0 %1001, %v771
  %v1003 = vpop.permute.xlu0 %1002
  %1006 = vset.pattern.permute.xlu0 0
  %1007 = vperm.xlu0 %1006, %v772
  %v1008 = vpop.permute.xlu0 %1007
  %1011 = vset.pattern.permute.xlu0 0
  %1012 = vperm.xlu0 %1011, %v773
  %v1013 = vpop.permute.xlu0 %1012
  %1016 = vset.pattern.permute.xlu0 0
  %1017 = vperm.xlu0 %1016, %v774
  %v1018 = vpop.permute.xlu0 %1017
  %v1020 = vmul.f32 %v677, %v778
  %v1021 = vmul.f32 %v678, %v783
  %v1022 = vmul.f32 %v679, %v788
  %v1023 = vmul.f32 %v680, %v793
  %v1024 = vmul.f32 %v681, %v798
  %v1025 = vmul.f32 %v682, %v803
  %v1026 = vmul.f32 %v683, %v808
  %v1027 = vmul.f32 %v684, %v813
  %v1028 = vmul.f32 %v685, %v818
  %v1029 = vmul.f32 %v686, %v823
  %v1030 = vmul.f32 %v687, %v828
  %v1031 = vmul.f32 %v688, %v833
  %v1032 = vmul.f32 %v689, %v838
  %v1033 = vmul.f32 %v690, %v843
  %v1034 = vmul.f32 %v691, %v848
  %v1035 = vmul.f32 %v692, %v853
  %v1036 = vmul.f32 %v693, %v858
  %v1037 = vmul.f32 %v694, %v863
  %v1038 = vmul.f32 %v695, %v868
  %v1039 = vmul.f32 %v696, %v873
  %v1040 = vmul.f32 %v697, %v878
  %v1041 = vmul.f32 %v698, %v883
  %v1042 = vmul.f32 %v699, %v888
  %v1043 = vmul.f32 %v700, %v893
  %v1044 = vmul.f32 %v701, %v898
  %v1045 = vmul.f32 %v702, %v903
  %v1046 = vmul.f32 %v703, %v908
  %v1047 = vmul.f32 %v704, %v913
  %v1048 = vmul.f32 %v705, %v918
  %v1049 = vmul.f32 %v706, %v923
  %v1050 = vmul.f32 %v707, %v928
  %v1051 = vmul.f32 %v708, %v933
  %v1052 = vmul.f32 %v709, %v938
  %v1053 = vmul.f32 %v710, %v943
  %v1054 = vmul.f32 %v711, %v948
  %v1055 = vmul.f32 %v712, %v953
  %v1056 = vmul.f32 %v713, %v958
  %v1057 = vmul.f32 %v714, %v963
  %v1058 = vmul.f32 %v715, %v968
  %v1059 = vmul.f32 %v716, %v973
  %v1060 = vmul.f32 %v717, %v978
  %v1061 = vmul.f32 %v718, %v983
  %v1062 = vmul.f32 %v719, %v988
  %v1063 = vmul.f32 %v720, %v993
  %v1064 = vmul.f32 %v721, %v998
  %v1065 = vmul.f32 %v722, %v1003
  %v1066 = vmul.f32 %v723, %v1008
  %v1067 = vmul.f32 %v724, %v1013
  %v1068 = vmul.f32 %v725, %v1018
  %vm1069 = vcmask 982016
  %v1070 = vsel %vm1069, %v1020, 0.0
  %v1071 = vsel %vm1069, %v1021, 0.0
  %v1072 = vadd.f32 %v1070, %v1071
  %v1073 = vsel %vm1069, %v1022, 0.0
  %v1074 = vadd.f32 %v1072, %v1073
  %v1075 = vsel %vm1069, %v1023, 0.0
  %v1076 = vadd.f32 %v1074, %v1075
  %v1077 = vsel %vm1069, %v1024, 0.0
  %v1078 = vadd.f32 %v1076, %v1077
  %v1079 = vsel %vm1069, %v1025, 0.0
  %v1080 = vadd.f32 %v1078, %v1079
  %v1081 = vsel %vm1069, %v1026, 0.0
  %v1082 = vadd.f32 %v1080, %v1081
  %v1083 = vsel %vm1069, %v1027, 0.0
  %v1084 = vadd.f32 %v1082, %v1083
  %v1085 = vsel %vm1069, %v1028, 0.0
  %v1086 = vadd.f32 %v1084, %v1085
  %v1087 = vsel %vm1069, %v1029, 0.0
  %v1088 = vadd.f32 %v1086, %v1087
  %v1089 = vsel %vm1069, %v1030, 0.0
  %v1090 = vadd.f32 %v1088, %v1089
  %v1091 = vsel %vm1069, %v1031, 0.0
  %v1092 = vadd.f32 %v1090, %v1091
  %v1093 = vsel %vm1069, %v1032, 0.0
  %v1094 = vadd.f32 %v1092, %v1093
  %v1095 = vsel %vm1069, %v1033, 0.0
  %v1096 = vadd.f32 %v1094, %v1095
  %v1097 = vsel %vm1069, %v1034, 0.0
  %v1098 = vadd.f32 %v1096, %v1097
  %v1099 = vsel %vm1069, %v1035, 0.0
  %v1100 = vadd.f32 %v1098, %v1099
  %v1101 = vsel %vm1069, %v1036, 0.0
  %v1102 = vadd.f32 %v1100, %v1101
  %v1103 = vsel %vm1069, %v1037, 0.0
  %v1104 = vadd.f32 %v1102, %v1103
  %v1105 = vsel %vm1069, %v1038, 0.0
  %v1106 = vadd.f32 %v1104, %v1105
  %v1107 = vsel %vm1069, %v1039, 0.0
  %v1108 = vadd.f32 %v1106, %v1107
  %v1109 = vsel %vm1069, %v1040, 0.0
  %v1110 = vadd.f32 %v1108, %v1109
  %v1111 = vsel %vm1069, %v1041, 0.0
  %v1112 = vadd.f32 %v1110, %v1111
  %v1113 = vsel %vm1069, %v1042, 0.0
  %v1114 = vadd.f32 %v1112, %v1113
  %v1115 = vsel %vm1069, %v1043, 0.0
  %v1116 = vadd.f32 %v1114, %v1115
  %v1117 = vsel %vm1069, %v1044, 0.0
  %v1118 = vadd.f32 %v1116, %v1117
  %v1119 = vsel %vm1069, %v1045, 0.0
  %v1120 = vadd.f32 %v1118, %v1119
  %v1121 = vsel %vm1069, %v1046, 0.0
  %v1122 = vadd.f32 %v1120, %v1121
  %v1123 = vsel %vm1069, %v1047, 0.0
  %v1124 = vadd.f32 %v1122, %v1123
  %v1125 = vsel %vm1069, %v1048, 0.0
  %v1126 = vadd.f32 %v1124, %v1125
  %v1127 = vsel %vm1069, %v1049, 0.0
  %v1128 = vadd.f32 %v1126, %v1127
  %v1129 = vsel %vm1069, %v1050, 0.0
  %v1130 = vadd.f32 %v1128, %v1129
  %v1131 = vsel %vm1069, %v1051, 0.0
  %v1132 = vadd.f32 %v1130, %v1131
  %v1133 = vsel %vm1069, %v1052, 0.0
  %v1134 = vadd.f32 %v1132, %v1133
  %v1135 = vsel %vm1069, %v1053, 0.0
  %v1136 = vadd.f32 %v1134, %v1135
  %v1137 = vsel %vm1069, %v1054, 0.0
  %v1138 = vadd.f32 %v1136, %v1137
  %v1139 = vsel %vm1069, %v1055, 0.0
  %v1140 = vadd.f32 %v1138, %v1139
  %v1141 = vsel %vm1069, %v1056, 0.0
  %v1142 = vadd.f32 %v1140, %v1141
  %v1143 = vsel %vm1069, %v1057, 0.0
  %v1144 = vadd.f32 %v1142, %v1143
  %v1145 = vsel %vm1069, %v1058, 0.0
  %v1146 = vadd.f32 %v1144, %v1145
  %v1147 = vsel %vm1069, %v1059, 0.0
  %v1148 = vadd.f32 %v1146, %v1147
  %v1149 = vsel %vm1069, %v1060, 0.0
  %v1150 = vadd.f32 %v1148, %v1149
  %v1151 = vsel %vm1069, %v1061, 0.0
  %v1152 = vadd.f32 %v1150, %v1151
  %v1153 = vsel %vm1069, %v1062, 0.0
  %v1154 = vadd.f32 %v1152, %v1153
  %v1155 = vsel %vm1069, %v1063, 0.0
  %v1156 = vadd.f32 %v1154, %v1155
  %v1157 = vsel %vm1069, %v1064, 0.0
  %v1158 = vadd.f32 %v1156, %v1157
  %v1159 = vsel %vm1069, %v1065, 0.0
  %v1160 = vadd.f32 %v1158, %v1159
  %v1161 = vsel %vm1069, %v1066, 0.0
  %v1162 = vadd.f32 %v1160, %v1161
  %v1163 = vsel %vm1069, %v1067, 0.0
  %v1164 = vadd.f32 %v1162, %v1163
  %v1165 = vsel %vm1069, %v1068, 0.0
  %v1166 = vadd.f32 %v1164, %v1165
  %v1167 = vrot.slane %v1166, 4
  %v1168 = vadd.f32 %v1166, %v1167
  %v1169 = vrot.slane %v1168, 2
  %v1170 = vadd.f32 %v1168, %v1169
  %v1171 = vrot.slane %v1170, 1
  %v1172 = vadd.f32 %v1170, %v1171
  %1174 = vrot.lane.b32.xlu0 %v1172, 98
  %v1175 = vpop.permute.xlu0 %1174
  %v1177 = vadd.f32 %v1172, %v1175
  %1178 = vrot.lane.b32.xlu0 %v1172, 68
  %v1179 = vpop.permute.xlu0 %1178
  %v1181 = vadd.f32 %v1177, %v1179
  %1182 = vrot.lane.b32.xlu0 %v1172, 38
  %v1183 = vpop.permute.xlu0 %1182
  %v1185 = vadd.f32 %v1181, %v1183
  %v1186 = vmul.f32 %v1185, 0.0025510204
  %1188 = vrot.lane.b32.xlu0 %v1186, 30
  %v1189 = vpop.permute.xlu0 %1188
  %1191 = vrot.lane.b32.xlu0 %v1186, 60
  %v1192 = vpop.permute.xlu0 %1191
  %1194 = vrot.lane.b32.xlu0 %v1186, 90
  %v1195 = vpop.permute.xlu0 %1194
  %vm1197 = vcmask 244736
  %v1198 = vsel %vm1197, %v1186, %v1189
  %vm1199 = vcmask 490496
  %v1200 = vsel %vm1199, %v1198, %v1192
  %vm1201 = vcmask 736256
  %v1202 = vsel %vm1201, %v1200, %v1195
  %v1203 = vlaneseq
  %v1204 = vshrl.u32 %v1203, 7
  %v1205 = vsub.s32 0, %v1204
  %v1206 = vrot.slane %v1202, %v1205
  %v1207 = vsub.f32 %v677, %v1206
  %v1208 = vsub.f32 %v678, %v1206
  %v1209 = vsub.f32 %v679, %v1206
  %v1210 = vsub.f32 %v680, %v1206
  %v1211 = vsub.f32 %v681, %v1206
  %v1212 = vsub.f32 %v682, %v1206
  %v1213 = vsub.f32 %v683, %v1206
  %v1214 = vsub.f32 %v684, %v1206
  %v1215 = vsub.f32 %v685, %v1206
  %v1216 = vsub.f32 %v686, %v1206
  %v1217 = vsub.f32 %v687, %v1206
  %v1218 = vsub.f32 %v688, %v1206
  %v1219 = vsub.f32 %v689, %v1206
  %v1220 = vsub.f32 %v690, %v1206
  %v1221 = vsub.f32 %v691, %v1206
  %v1222 = vsub.f32 %v692, %v1206
  %v1223 = vsub.f32 %v693, %v1206
  %v1224 = vsub.f32 %v694, %v1206
  %v1225 = vsub.f32 %v695, %v1206
  %v1226 = vsub.f32 %v696, %v1206
  %v1227 = vsub.f32 %v697, %v1206
  %v1228 = vsub.f32 %v698, %v1206
  %v1229 = vsub.f32 %v699, %v1206
  %v1230 = vsub.f32 %v700, %v1206
  %v1231 = vsub.f32 %v701, %v1206
  %v1232 = vsub.f32 %v702, %v1206
  %v1233 = vsub.f32 %v703, %v1206
  %v1234 = vsub.f32 %v704, %v1206
  %v1235 = vsub.f32 %v705, %v1206
  %v1236 = vsub.f32 %v706, %v1206
  %v1237 = vsub.f32 %v707, %v1206
  %v1238 = vsub.f32 %v708, %v1206
  %v1239 = vsub.f32 %v709, %v1206
  %v1240 = vsub.f32 %v710, %v1206
  %v1241 = vsub.f32 %v711, %v1206
  %v1242 = vsub.f32 %v712, %v1206
  %v1243 = vsub.f32 %v713, %v1206
  %v1244 = vsub.f32 %v714, %v1206
  %v1245 = vsub.f32 %v715, %v1206
  %v1246 = vsub.f32 %v716, %v1206
  %v1247 = vsub.f32 %v717, %v1206
  %v1248 = vsub.f32 %v718, %v1206
  %v1249 = vsub.f32 %v719, %v1206
  %v1250 = vsub.f32 %v720, %v1206
  %v1251 = vsub.f32 %v721, %v1206
  %v1252 = vsub.f32 %v722, %v1206
  %v1253 = vsub.f32 %v723, %v1206
  %v1254 = vsub.f32 %v724, %v1206
  %v1255 = vsub.f32 %v725, %v1206
  %v1256 = vmul.f32 %v1207, %v778
  %v1257 = vmul.f32 %v1208, %v783
  %v1258 = vmul.f32 %v1209, %v788
  %v1259 = vmul.f32 %v1210, %v793
  %v1260 = vmul.f32 %v1211, %v798
  %v1261 = vmul.f32 %v1212, %v803
  %v1262 = vmul.f32 %v1213, %v808
  %v1263 = vmul.f32 %v1214, %v813
  %v1264 = vmul.f32 %v1215, %v818
  %v1265 = vmul.f32 %v1216, %v823
  %v1266 = vmul.f32 %v1217, %v828
  %v1267 = vmul.f32 %v1218, %v833
  %v1268 = vmul.f32 %v1219, %v838
  %v1269 = vmul.f32 %v1220, %v843
  %v1270 = vmul.f32 %v1221, %v848
  %v1271 = vmul.f32 %v1222, %v853
  %v1272 = vmul.f32 %v1223, %v858
  %v1273 = vmul.f32 %v1224, %v863
  %v1274 = vmul.f32 %v1225, %v868
  %v1275 = vmul.f32 %v1226, %v873
  %v1276 = vmul.f32 %v1227, %v878
  %v1277 = vmul.f32 %v1228, %v883
  %v1278 = vmul.f32 %v1229, %v888
  %v1279 = vmul.f32 %v1230, %v893
  %v1280 = vmul.f32 %v1231, %v898
  %v1281 = vmul.f32 %v1232, %v903
  %v1282 = vmul.f32 %v1233, %v908
  %v1283 = vmul.f32 %v1234, %v913
  %v1284 = vmul.f32 %v1235, %v918
  %v1285 = vmul.f32 %v1236, %v923
  %v1286 = vmul.f32 %v1237, %v928
  %v1287 = vmul.f32 %v1238, %v933
  %v1288 = vmul.f32 %v1239, %v938
  %v1289 = vmul.f32 %v1240, %v943
  %v1290 = vmul.f32 %v1241, %v948
  %v1291 = vmul.f32 %v1242, %v953
  %v1292 = vmul.f32 %v1243, %v958
  %v1293 = vmul.f32 %v1244, %v963
  %v1294 = vmul.f32 %v1245, %v968
  %v1295 = vmul.f32 %v1246, %v973
  %v1296 = vmul.f32 %v1247, %v978
  %v1297 = vmul.f32 %v1248, %v983
  %v1298 = vmul.f32 %v1249, %v988
  %v1299 = vmul.f32 %v1250, %v993
  %v1300 = vmul.f32 %v1251, %v998
  %v1301 = vmul.f32 %v1252, %v1003
  %v1302 = vmul.f32 %v1253, %v1008
  %v1303 = vmul.f32 %v1254, %v1013
  %v1304 = vmul.f32 %v1255, %v1018
  %v1305 = vmul.f32 %v1256, %v1256
  %v1306 = vmul.f32 %v1257, %v1257
  %v1307 = vmul.f32 %v1258, %v1258
  %v1308 = vmul.f32 %v1259, %v1259
  %v1309 = vmul.f32 %v1260, %v1260
  %v1310 = vmul.f32 %v1261, %v1261
  %v1311 = vmul.f32 %v1262, %v1262
  %v1312 = vmul.f32 %v1263, %v1263
  %v1313 = vmul.f32 %v1264, %v1264
  %v1314 = vmul.f32 %v1265, %v1265
  %v1315 = vmul.f32 %v1266, %v1266
  %v1316 = vmul.f32 %v1267, %v1267
  %v1317 = vmul.f32 %v1268, %v1268
  %v1318 = vmul.f32 %v1269, %v1269
  %v1319 = vmul.f32 %v1270, %v1270
  %v1320 = vmul.f32 %v1271, %v1271
  %v1321 = vmul.f32 %v1272, %v1272
  %v1322 = vmul.f32 %v1273, %v1273
  %v1323 = vmul.f32 %v1274, %v1274
  %v1324 = vmul.f32 %v1275, %v1275
  %v1325 = vmul.f32 %v1276, %v1276
  %v1326 = vmul.f32 %v1277, %v1277
  %v1327 = vmul.f32 %v1278, %v1278
  %v1328 = vmul.f32 %v1279, %v1279
  %v1329 = vmul.f32 %v1280, %v1280
  %v1330 = vmul.f32 %v1281, %v1281
  %v1331 = vmul.f32 %v1282, %v1282
  %v1332 = vmul.f32 %v1283, %v1283
  %v1333 = vmul.f32 %v1284, %v1284
  %v1334 = vmul.f32 %v1285, %v1285
  %v1335 = vmul.f32 %v1286, %v1286
  %v1336 = vmul.f32 %v1287, %v1287
  %v1337 = vmul.f32 %v1288, %v1288
  %v1338 = vmul.f32 %v1289, %v1289
  %v1339 = vmul.f32 %v1290, %v1290
  %v1340 = vmul.f32 %v1291, %v1291
  %v1341 = vmul.f32 %v1292, %v1292
  %v1342 = vmul.f32 %v1293, %v1293
  %v1343 = vmul.f32 %v1294, %v1294
  %v1344 = vmul.f32 %v1295, %v1295
  %v1345 = vmul.f32 %v1296, %v1296
  %v1346 = vmul.f32 %v1297, %v1297
  %v1347 = vmul.f32 %v1298, %v1298
  %v1348 = vmul.f32 %v1299, %v1299
  %v1349 = vmul.f32 %v1300, %v1300
  %v1350 = vmul.f32 %v1301, %v1301
  %v1351 = vmul.f32 %v1302, %v1302
  %v1352 = vmul.f32 %v1303, %v1303
  %v1353 = vmul.f32 %v1304, %v1304
  %v1354 = vsel %vm1069, %v1305, 0.0
  %v1355 = vsel %vm1069, %v1306, 0.0
  %v1356 = vadd.f32 %v1354, %v1355
  %v1357 = vsel %vm1069, %v1307, 0.0
  %v1358 = vadd.f32 %v1356, %v1357
  %v1359 = vsel %vm1069, %v1308, 0.0
  %v1360 = vadd.f32 %v1358, %v1359
  %v1361 = vsel %vm1069, %v1309, 0.0
  %v1362 = vadd.f32 %v1360, %v1361
  %v1363 = vsel %vm1069, %v1310, 0.0
  %v1364 = vadd.f32 %v1362, %v1363
  %v1365 = vsel %vm1069, %v1311, 0.0
  %v1366 = vadd.f32 %v1364, %v1365
  %v1367 = vsel %vm1069, %v1312, 0.0
  %v1368 = vadd.f32 %v1366, %v1367
  %v1369 = vsel %vm1069, %v1313, 0.0
  %v1370 = vadd.f32 %v1368, %v1369
  %v1371 = vsel %vm1069, %v1314, 0.0
  %v1372 = vadd.f32 %v1370, %v1371
  %v1373 = vsel %vm1069, %v1315, 0.0
  %v1374 = vadd.f32 %v1372, %v1373
  %v1375 = vsel %vm1069, %v1316, 0.0
  %v1376 = vadd.f32 %v1374, %v1375
  %v1377 = vsel %vm1069, %v1317, 0.0
  %v1378 = vadd.f32 %v1376, %v1377
  %v1379 = vsel %vm1069, %v1318, 0.0
  %v1380 = vadd.f32 %v1378, %v1379
  %v1381 = vsel %vm1069, %v1319, 0.0
  %v1382 = vadd.f32 %v1380, %v1381
  %v1383 = vsel %vm1069, %v1320, 0.0
  %v1384 = vadd.f32 %v1382, %v1383
  %v1385 = vsel %vm1069, %v1321, 0.0
  %v1386 = vadd.f32 %v1384, %v1385
  %v1387 = vsel %vm1069, %v1322, 0.0
  %v1388 = vadd.f32 %v1386, %v1387
  %v1389 = vsel %vm1069, %v1323, 0.0
  %v1390 = vadd.f32 %v1388, %v1389
  %v1391 = vsel %vm1069, %v1324, 0.0
  %v1392 = vadd.f32 %v1390, %v1391
  %v1393 = vsel %vm1069, %v1325, 0.0
  %v1394 = vadd.f32 %v1392, %v1393
  %v1395 = vsel %vm1069, %v1326, 0.0
  %v1396 = vadd.f32 %v1394, %v1395
  %v1397 = vsel %vm1069, %v1327, 0.0
  %v1398 = vadd.f32 %v1396, %v1397
  %v1399 = vsel %vm1069, %v1328, 0.0
  %v1400 = vadd.f32 %v1398, %v1399
  %v1401 = vsel %vm1069, %v1329, 0.0
  %v1402 = vadd.f32 %v1400, %v1401
  %v1403 = vsel %vm1069, %v1330, 0.0
  %v1404 = vadd.f32 %v1402, %v1403
  %v1405 = vsel %vm1069, %v1331, 0.0
  %v1406 = vadd.f32 %v1404, %v1405
  %v1407 = vsel %vm1069, %v1332, 0.0
  %v1408 = vadd.f32 %v1406, %v1407
  %v1409 = vsel %vm1069, %v1333, 0.0
  %v1410 = vadd.f32 %v1408, %v1409
  %v1411 = vsel %vm1069, %v1334, 0.0
  %v1412 = vadd.f32 %v1410, %v1411
  %v1413 = vsel %vm1069, %v1335, 0.0
  %v1414 = vadd.f32 %v1412, %v1413
  %v1415 = vsel %vm1069, %v1336, 0.0
  %v1416 = vadd.f32 %v1414, %v1415
  %v1417 = vsel %vm1069, %v1337, 0.0
  %v1418 = vadd.f32 %v1416, %v1417
  %v1419 = vsel %vm1069, %v1338, 0.0
  %v1420 = vadd.f32 %v1418, %v1419
  %v1421 = vsel %vm1069, %v1339, 0.0
  %v1422 = vadd.f32 %v1420, %v1421
  %v1423 = vsel %vm1069, %v1340, 0.0
  %v1424 = vadd.f32 %v1422, %v1423
  %v1425 = vsel %vm1069, %v1341, 0.0
  %v1426 = vadd.f32 %v1424, %v1425
  %v1427 = vsel %vm1069, %v1342, 0.0
  %v1428 = vadd.f32 %v1426, %v1427
  %v1429 = vsel %vm1069, %v1343, 0.0
  %v1430 = vadd.f32 %v1428, %v1429
  %v1431 = vsel %vm1069, %v1344, 0.0
  %v1432 = vadd.f32 %v1430, %v1431
  %v1433 = vsel %vm1069, %v1345, 0.0
  %v1434 = vadd.f32 %v1432, %v1433
  %v1435 = vsel %vm1069, %v1346, 0.0
  %v1436 = vadd.f32 %v1434, %v1435
  %v1437 = vsel %vm1069, %v1347, 0.0
  %v1438 = vadd.f32 %v1436, %v1437
  %v1439 = vsel %vm1069, %v1348, 0.0
  %v1440 = vadd.f32 %v1438, %v1439
  %v1441 = vsel %vm1069, %v1349, 0.0
  %v1442 = vadd.f32 %v1440, %v1441
  %v1443 = vsel %vm1069, %v1350, 0.0
  %v1444 = vadd.f32 %v1442, %v1443
  %v1445 = vsel %vm1069, %v1351, 0.0
  %v1446 = vadd.f32 %v1444, %v1445
  %v1447 = vsel %vm1069, %v1352, 0.0
  %v1448 = vadd.f32 %v1446, %v1447
  %v1449 = vsel %vm1069, %v1353, 0.0
  %v1450 = vadd.f32 %v1448, %v1449
  %v1451 = vrot.slane %v1450, 4
  %v1452 = vadd.f32 %v1450, %v1451
  %v1453 = vrot.slane %v1452, 2
  %v1454 = vadd.f32 %v1452, %v1453
  %v1455 = vrot.slane %v1454, 1
  %v1456 = vadd.f32 %v1454, %v1455
  %1458 = vrot.lane.b32.xlu0 %v1456, 98
  %v1459 = vpop.permute.xlu0 %1458
  %v1461 = vadd.f32 %v1456, %v1459
  %1462 = vrot.lane.b32.xlu0 %v1456, 68
  %v1463 = vpop.permute.xlu0 %1462
  %v1465 = vadd.f32 %v1461, %v1463
  %1466 = vrot.lane.b32.xlu0 %v1456, 38
  %v1467 = vpop.permute.xlu0 %1466
  %v1469 = vadd.f32 %v1465, %v1467
  %v1470 = vmul.f32 %v1469, 0.0025510204
  %v1471 = vld [vmem:[%s4] sm:$0x1]
  %v1472 = vadd.f32 %v1470, 1e-05
  %v1473 = vrsqrt.pop %v1472
  %v1474 = vmul.f32 %v1471, %v1473
  %v1475 = vld [vmem:[%s5] sm:$0x1]
  %v1476 = vmul.f32 %v1186, %v1474
  %v1477 = vsub.f32 %v1475, %v1476
  %v1479 = vlaneseq
  %v1480 = vshrl.u32 %v1479, 7
  %v1481 = vsub.s32 0, %v1480
  %v1482 = vrot.slane %v1474, %v1481
  %v1484 = vmul.f32 %v677, %v1482
  %v1485 = vmul.f32 %v678, %v1482
  %v1486 = vmul.f32 %v679, %v1482
  %v1487 = vmul.f32 %v680, %v1482
  %v1488 = vmul.f32 %v681, %v1482
  %v1489 = vmul.f32 %v682, %v1482
  %v1490 = vmul.f32 %v683, %v1482
  %v1491 = vmul.f32 %v684, %v1482
  %v1492 = vmul.f32 %v685, %v1482
  %v1493 = vmul.f32 %v686, %v1482
  %v1494 = vmul.f32 %v687, %v1482
  %v1495 = vmul.f32 %v688, %v1482
  %v1496 = vmul.f32 %v689, %v1482
  %v1497 = vmul.f32 %v690, %v1482
  %v1498 = vmul.f32 %v691, %v1482
  %v1499 = vmul.f32 %v692, %v1482
  %v1500 = vmul.f32 %v693, %v1482
  %v1501 = vmul.f32 %v694, %v1482
  %v1502 = vmul.f32 %v695, %v1482
  %v1503 = vmul.f32 %v696, %v1482
  %v1504 = vmul.f32 %v697, %v1482
  %v1505 = vmul.f32 %v698, %v1482
  %v1506 = vmul.f32 %v699, %v1482
  %v1507 = vmul.f32 %v700, %v1482
  %v1508 = vmul.f32 %v701, %v1482
  %v1509 = vmul.f32 %v702, %v1482
  %v1510 = vmul.f32 %v703, %v1482
  %v1511 = vmul.f32 %v704, %v1482
  %v1512 = vmul.f32 %v705, %v1482
  %v1513 = vmul.f32 %v706, %v1482
  %v1514 = vmul.f32 %v707, %v1482
  %v1515 = vmul.f32 %v708, %v1482
  %v1516 = vmul.f32 %v709, %v1482
  %v1517 = vmul.f32 %v710, %v1482
  %v1518 = vmul.f32 %v711, %v1482
  %v1519 = vmul.f32 %v712, %v1482
  %v1520 = vmul.f32 %v713, %v1482
  %v1521 = vmul.f32 %v714, %v1482
  %v1522 = vmul.f32 %v715, %v1482
  %v1523 = vmul.f32 %v716, %v1482
  %v1524 = vmul.f32 %v717, %v1482
  %v1525 = vmul.f32 %v718, %v1482
  %v1526 = vmul.f32 %v719, %v1482
  %v1527 = vmul.f32 %v720, %v1482
  %v1528 = vmul.f32 %v721, %v1482
  %v1529 = vmul.f32 %v722, %v1482
  %v1530 = vmul.f32 %v723, %v1482
  %v1531 = vmul.f32 %v724, %v1482
  %v1532 = vmul.f32 %v725, %v1482
  %v1534 = vlaneseq
  %v1535 = vshrl.u32 %v1534, 7
  %v1536 = vsub.s32 0, %v1535
  %v1537 = vrot.slane %v1477, %v1536
  %v1539 = vadd.f32 %v1484, %v1537
  %v1540 = vadd.f32 %v1485, %v1537
  %v1541 = vadd.f32 %v1486, %v1537
  %v1542 = vadd.f32 %v1487, %v1537
  %v1543 = vadd.f32 %v1488, %v1537
  %v1544 = vadd.f32 %v1489, %v1537
  %v1545 = vadd.f32 %v1490, %v1537
  %v1546 = vadd.f32 %v1491, %v1537
  %v1547 = vadd.f32 %v1492, %v1537
  %v1548 = vadd.f32 %v1493, %v1537
  %v1549 = vadd.f32 %v1494, %v1537
  %v1550 = vadd.f32 %v1495, %v1537
  %v1551 = vadd.f32 %v1496, %v1537
  %v1552 = vadd.f32 %v1497, %v1537
  %v1553 = vadd.f32 %v1498, %v1537
  %v1554 = vadd.f32 %v1499, %v1537
  %v1555 = vadd.f32 %v1500, %v1537
  %v1556 = vadd.f32 %v1501, %v1537
  %v1557 = vadd.f32 %v1502, %v1537
  %v1558 = vadd.f32 %v1503, %v1537
  %v1559 = vadd.f32 %v1504, %v1537
  %v1560 = vadd.f32 %v1505, %v1537
  %v1561 = vadd.f32 %v1506, %v1537
  %v1562 = vadd.f32 %v1507, %v1537
  %v1563 = vadd.f32 %v1508, %v1537
  %v1564 = vadd.f32 %v1509, %v1537
  %v1565 = vadd.f32 %v1510, %v1537
  %v1566 = vadd.f32 %v1511, %v1537
  %v1567 = vadd.f32 %v1512, %v1537
  %v1568 = vadd.f32 %v1513, %v1537
  %v1569 = vadd.f32 %v1514, %v1537
  %v1570 = vadd.f32 %v1515, %v1537
  %v1571 = vadd.f32 %v1516, %v1537
  %v1572 = vadd.f32 %v1517, %v1537
  %v1573 = vadd.f32 %v1518, %v1537
  %v1574 = vadd.f32 %v1519, %v1537
  %v1575 = vadd.f32 %v1520, %v1537
  %v1576 = vadd.f32 %v1521, %v1537
  %v1577 = vadd.f32 %v1522, %v1537
  %v1578 = vadd.f32 %v1523, %v1537
  %v1579 = vadd.f32 %v1524, %v1537
  %v1580 = vadd.f32 %v1525, %v1537
  %v1581 = vadd.f32 %v1526, %v1537
  %v1582 = vadd.f32 %v1527, %v1537
  %v1583 = vadd.f32 %v1528, %v1537
  %v1584 = vadd.f32 %v1529, %v1537
  %v1585 = vadd.f32 %v1530, %v1537
  %v1586 = vadd.f32 %v1531, %v1537
  %v1587 = vadd.f32 %v1532, %v1537
  %1588 = vrot.lane.b32.xlu0 %v1482, 30
  %v1589 = vpop.permute.xlu0 %1588
  %v1591 = vmul.f32 %v677, %v1589
  %v1592 = vmul.f32 %v678, %v1589
  %v1593 = vmul.f32 %v679, %v1589
  %v1594 = vmul.f32 %v680, %v1589
  %v1595 = vmul.f32 %v681, %v1589
  %v1596 = vmul.f32 %v682, %v1589
  %v1597 = vmul.f32 %v683, %v1589
  %v1598 = vmul.f32 %v684, %v1589
  %v1599 = vmul.f32 %v685, %v1589
  %v1600 = vmul.f32 %v686, %v1589
  %v1601 = vmul.f32 %v687, %v1589
  %v1602 = vmul.f32 %v688, %v1589
  %v1603 = vmul.f32 %v689, %v1589
  %v1604 = vmul.f32 %v690, %v1589
  %v1605 = vmul.f32 %v691, %v1589
  %v1606 = vmul.f32 %v692, %v1589
  %v1607 = vmul.f32 %v693, %v1589
  %v1608 = vmul.f32 %v694, %v1589
  %v1609 = vmul.f32 %v695, %v1589
  %v1610 = vmul.f32 %v696, %v1589
  %v1611 = vmul.f32 %v697, %v1589
  %v1612 = vmul.f32 %v698, %v1589
  %v1613 = vmul.f32 %v699, %v1589
  %v1614 = vmul.f32 %v700, %v1589
  %v1615 = vmul.f32 %v701, %v1589
  %v1616 = vmul.f32 %v702, %v1589
  %v1617 = vmul.f32 %v703, %v1589
  %v1618 = vmul.f32 %v704, %v1589
  %v1619 = vmul.f32 %v705, %v1589
  %v1620 = vmul.f32 %v706, %v1589
  %v1621 = vmul.f32 %v707, %v1589
  %v1622 = vmul.f32 %v708, %v1589
  %v1623 = vmul.f32 %v709, %v1589
  %v1624 = vmul.f32 %v710, %v1589
  %v1625 = vmul.f32 %v711, %v1589
  %v1626 = vmul.f32 %v712, %v1589
  %v1627 = vmul.f32 %v713, %v1589
  %v1628 = vmul.f32 %v714, %v1589
  %v1629 = vmul.f32 %v715, %v1589
  %v1630 = vmul.f32 %v716, %v1589
  %v1631 = vmul.f32 %v717, %v1589
  %v1632 = vmul.f32 %v718, %v1589
  %v1633 = vmul.f32 %v719, %v1589
  %v1634 = vmul.f32 %v720, %v1589
  %v1635 = vmul.f32 %v721, %v1589
  %v1636 = vmul.f32 %v722, %v1589
  %v1637 = vmul.f32 %v723, %v1589
  %v1638 = vmul.f32 %v724, %v1589
  %v1639 = vmul.f32 %v725, %v1589
  %1640 = vrot.lane.b32.xlu0 %v1537, 30
  %v1641 = vpop.permute.xlu0 %1640
  %v1643 = vadd.f32 %v1591, %v1641
  %v1644 = vadd.f32 %v1592, %v1641
  %v1645 = vadd.f32 %v1593, %v1641
  %v1646 = vadd.f32 %v1594, %v1641
  %v1647 = vadd.f32 %v1595, %v1641
  %v1648 = vadd.f32 %v1596, %v1641
  %v1649 = vadd.f32 %v1597, %v1641
  %v1650 = vadd.f32 %v1598, %v1641
  %v1651 = vadd.f32 %v1599, %v1641
  %v1652 = vadd.f32 %v1600, %v1641
  %v1653 = vadd.f32 %v1601, %v1641
  %v1654 = vadd.f32 %v1602, %v1641
  %v1655 = vadd.f32 %v1603, %v1641
  %v1656 = vadd.f32 %v1604, %v1641
  %v1657 = vadd.f32 %v1605, %v1641
  %v1658 = vadd.f32 %v1606, %v1641
  %v1659 = vadd.f32 %v1607, %v1641
  %v1660 = vadd.f32 %v1608, %v1641
  %v1661 = vadd.f32 %v1609, %v1641
  %v1662 = vadd.f32 %v1610, %v1641
  %v1663 = vadd.f32 %v1611, %v1641
  %v1664 = vadd.f32 %v1612, %v1641
  %v1665 = vadd.f32 %v1613, %v1641
  %v1666 = vadd.f32 %v1614, %v1641
  %v1667 = vadd.f32 %v1615, %v1641
  %v1668 = vadd.f32 %v1616, %v1641
  %v1669 = vadd.f32 %v1617, %v1641
  %v1670 = vadd.f32 %v1618, %v1641
  %v1671 = vadd.f32 %v1619, %v1641
  %v1672 = vadd.f32 %v1620, %v1641
  %v1673 = vadd.f32 %v1621, %v1641
  %v1674 = vadd.f32 %v1622, %v1641
  %v1675 = vadd.f32 %v1623, %v1641
  %v1676 = vadd.f32 %v1624, %v1641
  %v1677 = vadd.f32 %v1625, %v1641
  %v1678 = vadd.f32 %v1626, %v1641
  %v1679 = vadd.f32 %v1627, %v1641
  %v1680 = vadd.f32 %v1628, %v1641
  %v1681 = vadd.f32 %v1629, %v1641
  %v1682 = vadd.f32 %v1630, %v1641
  %v1683 = vadd.f32 %v1631, %v1641
  %v1684 = vadd.f32 %v1632, %v1641
  %v1685 = vadd.f32 %v1633, %v1641
  %v1686 = vadd.f32 %v1634, %v1641
  %v1687 = vadd.f32 %v1635, %v1641
  %v1688 = vadd.f32 %v1636, %v1641
  %v1689 = vadd.f32 %v1637, %v1641
  %v1690 = vadd.f32 %v1638, %v1641
  %v1691 = vadd.f32 %v1639, %v1641
  %1741 = vrot.lane.b32.xlu0 %v1643, 98
  %v1742 = vpop.permute.xlu0 %1741
  %1743 = vrot.lane.b32.xlu0 %v1644, 98
  %v1744 = vpop.permute.xlu0 %1743
  %1745 = vrot.lane.b32.xlu0 %v1645, 98
  %v1746 = vpop.permute.xlu0 %1745
  %1747 = vrot.lane.b32.xlu0 %v1646, 98
  %v1748 = vpop.permute.xlu0 %1747
  %1749 = vrot.lane.b32.xlu0 %v1647, 98
  %v1750 = vpop.permute.xlu0 %1749
  %1751 = vrot.lane.b32.xlu0 %v1648, 98
  %v1752 = vpop.permute.xlu0 %1751
  %1753 = vrot.lane.b32.xlu0 %v1649, 98
  %v1754 = vpop.permute.xlu0 %1753
  %1755 = vrot.lane.b32.xlu0 %v1650, 98
  %v1756 = vpop.permute.xlu0 %1755
  %1757 = vrot.lane.b32.xlu0 %v1651, 98
  %v1758 = vpop.permute.xlu0 %1757
  %1759 = vrot.lane.b32.xlu0 %v1652, 98
  %v1760 = vpop.permute.xlu0 %1759
  %1761 = vrot.lane.b32.xlu0 %v1653, 98
  %v1762 = vpop.permute.xlu0 %1761
  %1763 = vrot.lane.b32.xlu0 %v1654, 98
  %v1764 = vpop.permute.xlu0 %1763
  %1765 = vrot.lane.b32.xlu0 %v1655, 98
  %v1766 = vpop.permute.xlu0 %1765
  %1767 = vrot.lane.b32.xlu0 %v1656, 98
  %v1768 = vpop.permute.xlu0 %1767
  %1769 = vrot.lane.b32.xlu0 %v1657, 98
  %v1770 = vpop.permute.xlu0 %1769
  %1771 = vrot.lane.b32.xlu0 %v1658, 98
  %v1772 = vpop.permute.xlu0 %1771
  %1773 = vrot.lane.b32.xlu0 %v1659, 98
  %v1774 = vpop.permute.xlu0 %1773
  %1775 = vrot.lane.b32.xlu0 %v1660, 98
  %v1776 = vpop.permute.xlu0 %1775
  %1777 = vrot.lane.b32.xlu0 %v1661, 98
  %v1778 = vpop.permute.xlu0 %1777
  %1779 = vrot.lane.b32.xlu0 %v1662, 98
  %v1780 = vpop.permute.xlu0 %1779
  %1781 = vrot.lane.b32.xlu0 %v1663, 98
  %v1782 = vpop.permute.xlu0 %1781
  %1783 = vrot.lane.b32.xlu0 %v1664, 98
  %v1784 = vpop.permute.xlu0 %1783
  %1785 = vrot.lane.b32.xlu0 %v1665, 98
  %v1786 = vpop.permute.xlu0 %1785
  %1787 = vrot.lane.b32.xlu0 %v1666, 98
  %v1788 = vpop.permute.xlu0 %1787
  %1789 = vrot.lane.b32.xlu0 %v1667, 98
  %v1790 = vpop.permute.xlu0 %1789
  %1791 = vrot.lane.b32.xlu0 %v1668, 98
  %v1792 = vpop.permute.xlu0 %1791
  %1793 = vrot.lane.b32.xlu0 %v1669, 98
  %v1794 = vpop.permute.xlu0 %1793
  %1795 = vrot.lane.b32.xlu0 %v1670, 98
  %v1796 = vpop.permute.xlu0 %1795
  %1797 = vrot.lane.b32.xlu0 %v1671, 98
  %v1798 = vpop.permute.xlu0 %1797
  %1799 = vrot.lane.b32.xlu0 %v1672, 98
  %v1800 = vpop.permute.xlu0 %1799
  %1801 = vrot.lane.b32.xlu0 %v1673, 98
  %v1802 = vpop.permute.xlu0 %1801
  %1803 = vrot.lane.b32.xlu0 %v1674, 98
  %v1804 = vpop.permute.xlu0 %1803
  %1805 = vrot.lane.b32.xlu0 %v1675, 98
  %v1806 = vpop.permute.xlu0 %1805
  %1807 = vrot.lane.b32.xlu0 %v1676, 98
  %v1808 = vpop.permute.xlu0 %1807
  %1809 = vrot.lane.b32.xlu0 %v1677, 98
  %v1810 = vpop.permute.xlu0 %1809
  %1811 = vrot.lane.b32.xlu0 %v1678, 98
  %v1812 = vpop.permute.xlu0 %1811
  %1813 = vrot.lane.b32.xlu0 %v1679, 98
  %v1814 = vpop.permute.xlu0 %1813
  %1815 = vrot.lane.b32.xlu0 %v1680, 98
  %v1816 = vpop.permute.xlu0 %1815
  %1817 = vrot.lane.b32.xlu0 %v1681, 98
  %v1818 = vpop.permute.xlu0 %1817
  %1819 = vrot.lane.b32.xlu0 %v1682, 98
  %v1820 = vpop.permute.xlu0 %1819
  %1821 = vrot.lane.b32.xlu0 %v1683, 98
  %v1822 = vpop.permute.xlu0 %1821
  %1823 = vrot.lane.b32.xlu0 %v1684, 98
  %v1824 = vpop.permute.xlu0 %1823
  %1825 = vrot.lane.b32.xlu0 %v1685, 98
  %v1826 = vpop.permute.xlu0 %1825
  %1827 = vrot.lane.b32.xlu0 %v1686, 98
  %v1828 = vpop.permute.xlu0 %1827
  %1829 = vrot.lane.b32.xlu0 %v1687, 98
  %v1830 = vpop.permute.xlu0 %1829
  %1831 = vrot.lane.b32.xlu0 %v1688, 98
  %v1832 = vpop.permute.xlu0 %1831
  %1833 = vrot.lane.b32.xlu0 %v1689, 98
  %v1834 = vpop.permute.xlu0 %1833
  %1835 = vrot.lane.b32.xlu0 %v1690, 98
  %v1836 = vpop.permute.xlu0 %1835
  %1837 = vrot.lane.b32.xlu0 %v1691, 98
  %v1838 = vpop.permute.xlu0 %1837
  %v1888 = vmax.f32 %v1539, %v1742
  %v1889 = vmax.f32 %v1540, %v1744
  %v1890 = vmax.f32 %v1541, %v1746
  %v1891 = vmax.f32 %v1542, %v1748
  %v1892 = vmax.f32 %v1543, %v1750
  %v1893 = vmax.f32 %v1544, %v1752
  %v1894 = vmax.f32 %v1545, %v1754
  %v1895 = vmax.f32 %v1546, %v1756
  %v1896 = vmax.f32 %v1547, %v1758
  %v1897 = vmax.f32 %v1548, %v1760
  %v1898 = vmax.f32 %v1549, %v1762
  %v1899 = vmax.f32 %v1550, %v1764
  %v1900 = vmax.f32 %v1551, %v1766
  %v1901 = vmax.f32 %v1552, %v1768
  %v1902 = vmax.f32 %v1553, %v1770
  %v1903 = vmax.f32 %v1554, %v1772
  %v1904 = vmax.f32 %v1555, %v1774
  %v1905 = vmax.f32 %v1556, %v1776
  %v1906 = vmax.f32 %v1557, %v1778
  %v1907 = vmax.f32 %v1558, %v1780
  %v1908 = vmax.f32 %v1559, %v1782
  %v1909 = vmax.f32 %v1560, %v1784
  %v1910 = vmax.f32 %v1561, %v1786
  %v1911 = vmax.f32 %v1562, %v1788
  %v1912 = vmax.f32 %v1563, %v1790
  %v1913 = vmax.f32 %v1564, %v1792
  %v1914 = vmax.f32 %v1565, %v1794
  %v1915 = vmax.f32 %v1566, %v1796
  %v1916 = vmax.f32 %v1567, %v1798
  %v1917 = vmax.f32 %v1568, %v1800
  %v1918 = vmax.f32 %v1569, %v1802
  %v1919 = vmax.f32 %v1570, %v1804
  %v1920 = vmax.f32 %v1571, %v1806
  %v1921 = vmax.f32 %v1572, %v1808
  %v1922 = vmax.f32 %v1573, %v1810
  %v1923 = vmax.f32 %v1574, %v1812
  %v1924 = vmax.f32 %v1575, %v1814
  %v1925 = vmax.f32 %v1576, %v1816
  %v1926 = vmax.f32 %v1577, %v1818
  %v1927 = vmax.f32 %v1578, %v1820
  %v1928 = vmax.f32 %v1579, %v1822
  %v1929 = vmax.f32 %v1580, %v1824
  %v1930 = vmax.f32 %v1581, %v1826
  %v1931 = vmax.f32 %v1582, %v1828
  %v1932 = vmax.f32 %v1583, %v1830
  %v1933 = vmax.f32 %v1584, %v1832
  %v1934 = vmax.f32 %v1585, %v1834
  %v1935 = vmax.f32 %v1586, %v1836
  %v1936 = vmax.f32 %v1587, %v1838
  %1937 = vrot.lane.b32.xlu0 %v1482, 60
  %v1938 = vpop.permute.xlu0 %1937
  %v1940 = vmul.f32 %v677, %v1938
  %v1941 = vmul.f32 %v678, %v1938
  %v1942 = vmul.f32 %v679, %v1938
  %v1943 = vmul.f32 %v680, %v1938
  %v1944 = vmul.f32 %v681, %v1938
  %v1945 = vmul.f32 %v682, %v1938
  %v1946 = vmul.f32 %v683, %v1938
  %v1947 = vmul.f32 %v684, %v1938
  %v1948 = vmul.f32 %v685, %v1938
  %v1949 = vmul.f32 %v686, %v1938
  %v1950 = vmul.f32 %v687, %v1938
  %v1951 = vmul.f32 %v688, %v1938
  %v1952 = vmul.f32 %v689, %v1938
  %v1953 = vmul.f32 %v690, %v1938
  %v1954 = vmul.f32 %v691, %v1938
  %v1955 = vmul.f32 %v692, %v1938
  %v1956 = vmul.f32 %v693, %v1938
  %v1957 = vmul.f32 %v694, %v1938
  %v1958 = vmul.f32 %v695, %v1938
  %v1959 = vmul.f32 %v696, %v1938
  %v1960 = vmul.f32 %v697, %v1938
  %v1961 = vmul.f32 %v698, %v1938
  %v1962 = vmul.f32 %v699, %v1938
  %v1963 = vmul.f32 %v700, %v1938
  %v1964 = vmul.f32 %v701, %v1938
  %v1965 = vmul.f32 %v702, %v1938
  %v1966 = vmul.f32 %v703, %v1938
  %v1967 = vmul.f32 %v704, %v1938
  %v1968 = vmul.f32 %v705, %v1938
  %v1969 = vmul.f32 %v706, %v1938
  %v1970 = vmul.f32 %v707, %v1938
  %v1971 = vmul.f32 %v708, %v1938
  %v1972 = vmul.f32 %v709, %v1938
  %v1973 = vmul.f32 %v710, %v1938
  %v1974 = vmul.f32 %v711, %v1938
  %v1975 = vmul.f32 %v712, %v1938
  %v1976 = vmul.f32 %v713, %v1938
  %v1977 = vmul.f32 %v714, %v1938
  %v1978 = vmul.f32 %v715, %v1938
  %v1979 = vmul.f32 %v716, %v1938
  %v1980 = vmul.f32 %v717, %v1938
  %v1981 = vmul.f32 %v718, %v1938
  %v1982 = vmul.f32 %v719, %v1938
  %v1983 = vmul.f32 %v720, %v1938
  %v1984 = vmul.f32 %v721, %v1938
  %v1985 = vmul.f32 %v722, %v1938
  %v1986 = vmul.f32 %v723, %v1938
  %v1987 = vmul.f32 %v724, %v1938
  %v1988 = vmul.f32 %v725, %v1938
  %1989 = vrot.lane.b32.xlu0 %v1537, 60
  %v1990 = vpop.permute.xlu0 %1989
  %v1992 = vadd.f32 %v1940, %v1990
  %v1993 = vadd.f32 %v1941, %v1990
  %v1994 = vadd.f32 %v1942, %v1990
  %v1995 = vadd.f32 %v1943, %v1990
  %v1996 = vadd.f32 %v1944, %v1990
  %v1997 = vadd.f32 %v1945, %v1990
  %v1998 = vadd.f32 %v1946, %v1990
  %v1999 = vadd.f32 %v1947, %v1990
  %v2000 = vadd.f32 %v1948, %v1990
  %v2001 = vadd.f32 %v1949, %v1990
  %v2002 = vadd.f32 %v1950, %v1990
  %v2003 = vadd.f32 %v1951, %v1990
  %v2004 = vadd.f32 %v1952, %v1990
  %v2005 = vadd.f32 %v1953, %v1990
  %v2006 = vadd.f32 %v1954, %v1990
  %v2007 = vadd.f32 %v1955, %v1990
  %v2008 = vadd.f32 %v1956, %v1990
  %v2009 = vadd.f32 %v1957, %v1990
  %v2010 = vadd.f32 %v1958, %v1990
  %v2011 = vadd.f32 %v1959, %v1990
  %v2012 = vadd.f32 %v1960, %v1990
  %v2013 = vadd.f32 %v1961, %v1990
  %v2014 = vadd.f32 %v1962, %v1990
  %v2015 = vadd.f32 %v1963, %v1990
  %v2016 = vadd.f32 %v1964, %v1990
  %v2017 = vadd.f32 %v1965, %v1990
  %v2018 = vadd.f32 %v1966, %v1990
  %v2019 = vadd.f32 %v1967, %v1990
  %v2020 = vadd.f32 %v1968, %v1990
  %v2021 = vadd.f32 %v1969, %v1990
  %v2022 = vadd.f32 %v1970, %v1990
  %v2023 = vadd.f32 %v1971, %v1990
  %v2024 = vadd.f32 %v1972, %v1990
  %v2025 = vadd.f32 %v1973, %v1990
  %v2026 = vadd.f32 %v1974, %v1990
  %v2027 = vadd.f32 %v1975, %v1990
  %v2028 = vadd.f32 %v1976, %v1990
  %v2029 = vadd.f32 %v1977, %v1990
  %v2030 = vadd.f32 %v1978, %v1990
  %v2031 = vadd.f32 %v1979, %v1990
  %v2032 = vadd.f32 %v1980, %v1990
  %v2033 = vadd.f32 %v1981, %v1990
  %v2034 = vadd.f32 %v1982, %v1990
  %v2035 = vadd.f32 %v1983, %v1990
  %v2036 = vadd.f32 %v1984, %v1990
  %v2037 = vadd.f32 %v1985, %v1990
  %v2038 = vadd.f32 %v1986, %v1990
  %v2039 = vadd.f32 %v1987, %v1990
  %v2040 = vadd.f32 %v1988, %v1990
  %2090 = vrot.lane.b32.xlu0 %v1992, 68
  %v2091 = vpop.permute.xlu0 %2090
  %2092 = vrot.lane.b32.xlu0 %v1993, 68
  %v2093 = vpop.permute.xlu0 %2092
  %2094 = vrot.lane.b32.xlu0 %v1994, 68
  %v2095 = vpop.permute.xlu0 %2094
  %2096 = vrot.lane.b32.xlu0 %v1995, 68
  %v2097 = vpop.permute.xlu0 %2096
  %2098 = vrot.lane.b32.xlu0 %v1996, 68
  %v2099 = vpop.permute.xlu0 %2098
  %2100 = vrot.lane.b32.xlu0 %v1997, 68
  %v2101 = vpop.permute.xlu0 %2100
  %2102 = vrot.lane.b32.xlu0 %v1998, 68
  %v2103 = vpop.permute.xlu0 %2102
  %2104 = vrot.lane.b32.xlu0 %v1999, 68
  %v2105 = vpop.permute.xlu0 %2104
  %2106 = vrot.lane.b32.xlu0 %v2000, 68
  %v2107 = vpop.permute.xlu0 %2106
  %2108 = vrot.lane.b32.xlu0 %v2001, 68
  %v2109 = vpop.permute.xlu0 %2108
  %2110 = vrot.lane.b32.xlu0 %v2002, 68
  %v2111 = vpop.permute.xlu0 %2110
  %2112 = vrot.lane.b32.xlu0 %v2003, 68
  %v2113 = vpop.permute.xlu0 %2112
  %2114 = vrot.lane.b32.xlu0 %v2004, 68
  %v2115 = vpop.permute.xlu0 %2114
  %2116 = vrot.lane.b32.xlu0 %v2005, 68
  %v2117 = vpop.permute.xlu0 %2116
  %2118 = vrot.lane.b32.xlu0 %v2006, 68
  %v2119 = vpop.permute.xlu0 %2118
  %2120 = vrot.lane.b32.xlu0 %v2007, 68
  %v2121 = vpop.permute.xlu0 %2120
  %2122 = vrot.lane.b32.xlu0 %v2008, 68
  %v2123 = vpop.permute.xlu0 %2122
  %2124 = vrot.lane.b32.xlu0 %v2009, 68
  %v2125 = vpop.permute.xlu0 %2124
  %2126 = vrot.lane.b32.xlu0 %v2010, 68
  %v2127 = vpop.permute.xlu0 %2126
  %2128 = vrot.lane.b32.xlu0 %v2011, 68
  %v2129 = vpop.permute.xlu0 %2128
  %2130 = vrot.lane.b32.xlu0 %v2012, 68
  %v2131 = vpop.permute.xlu0 %2130
  %2132 = vrot.lane.b32.xlu0 %v2013, 68
  %v2133 = vpop.permute.xlu0 %2132
  %2134 = vrot.lane.b32.xlu0 %v2014, 68
  %v2135 = vpop.permute.xlu0 %2134
  %2136 = vrot.lane.b32.xlu0 %v2015, 68
  %v2137 = vpop.permute.xlu0 %2136
  %2138 = vrot.lane.b32.xlu0 %v2016, 68
  %v2139 = vpop.permute.xlu0 %2138
  %2140 = vrot.lane.b32.xlu0 %v2017, 68
  %v2141 = vpop.permute.xlu0 %2140
  %2142 = vrot.lane.b32.xlu0 %v2018, 68
  %v2143 = vpop.permute.xlu0 %2142
  %2144 = vrot.lane.b32.xlu0 %v2019, 68
  %v2145 = vpop.permute.xlu0 %2144
  %2146 = vrot.lane.b32.xlu0 %v2020, 68
  %v2147 = vpop.permute.xlu0 %2146
  %2148 = vrot.lane.b32.xlu0 %v2021, 68
  %v2149 = vpop.permute.xlu0 %2148
  %2150 = vrot.lane.b32.xlu0 %v2022, 68
  %v2151 = vpop.permute.xlu0 %2150
  %2152 = vrot.lane.b32.xlu0 %v2023, 68
  %v2153 = vpop.permute.xlu0 %2152
  %2154 = vrot.lane.b32.xlu0 %v2024, 68
  %v2155 = vpop.permute.xlu0 %2154
  %2156 = vrot.lane.b32.xlu0 %v2025, 68
  %v2157 = vpop.permute.xlu0 %2156
  %2158 = vrot.lane.b32.xlu0 %v2026, 68
  %v2159 = vpop.permute.xlu0 %2158
  %2160 = vrot.lane.b32.xlu0 %v2027, 68
  %v2161 = vpop.permute.xlu0 %2160
  %2162 = vrot.lane.b32.xlu0 %v2028, 68
  %v2163 = vpop.permute.xlu0 %2162
  %2164 = vrot.lane.b32.xlu0 %v2029, 68
  %v2165 = vpop.permute.xlu0 %2164
  %2166 = vrot.lane.b32.xlu0 %v2030, 68
  %v2167 = vpop.permute.xlu0 %2166
  %2168 = vrot.lane.b32.xlu0 %v2031, 68
  %v2169 = vpop.permute.xlu0 %2168
  %2170 = vrot.lane.b32.xlu0 %v2032, 68
  %v2171 = vpop.permute.xlu0 %2170
  %2172 = vrot.lane.b32.xlu0 %v2033, 68
  %v2173 = vpop.permute.xlu0 %2172
  %2174 = vrot.lane.b32.xlu0 %v2034, 68
  %v2175 = vpop.permute.xlu0 %2174
  %2176 = vrot.lane.b32.xlu0 %v2035, 68
  %v2177 = vpop.permute.xlu0 %2176
  %2178 = vrot.lane.b32.xlu0 %v2036, 68
  %v2179 = vpop.permute.xlu0 %2178
  %2180 = vrot.lane.b32.xlu0 %v2037, 68
  %v2181 = vpop.permute.xlu0 %2180
  %2182 = vrot.lane.b32.xlu0 %v2038, 68
  %v2183 = vpop.permute.xlu0 %2182
  %2184 = vrot.lane.b32.xlu0 %v2039, 68
  %v2185 = vpop.permute.xlu0 %2184
  %2186 = vrot.lane.b32.xlu0 %v2040, 68
  %v2187 = vpop.permute.xlu0 %2186
  %v2237 = vmax.f32 %v1888, %v2091
  %v2238 = vmax.f32 %v1889, %v2093
  %v2239 = vmax.f32 %v1890, %v2095
  %v2240 = vmax.f32 %v1891, %v2097
  %v2241 = vmax.f32 %v1892, %v2099
  %v2242 = vmax.f32 %v1893, %v2101
  %v2243 = vmax.f32 %v1894, %v2103
  %v2244 = vmax.f32 %v1895, %v2105
  %v2245 = vmax.f32 %v1896, %v2107
  %v2246 = vmax.f32 %v1897, %v2109
  %v2247 = vmax.f32 %v1898, %v2111
  %v2248 = vmax.f32 %v1899, %v2113
  %v2249 = vmax.f32 %v1900, %v2115
  %v2250 = vmax.f32 %v1901, %v2117
  %v2251 = vmax.f32 %v1902, %v2119
  %v2252 = vmax.f32 %v1903, %v2121
  %v2253 = vmax.f32 %v1904, %v2123
  %v2254 = vmax.f32 %v1905, %v2125
  %v2255 = vmax.f32 %v1906, %v2127
  %v2256 = vmax.f32 %v1907, %v2129
  %v2257 = vmax.f32 %v1908, %v2131
  %v2258 = vmax.f32 %v1909, %v2133
  %v2259 = vmax.f32 %v1910, %v2135
  %v2260 = vmax.f32 %v1911, %v2137
  %v2261 = vmax.f32 %v1912, %v2139
  %v2262 = vmax.f32 %v1913, %v2141
  %v2263 = vmax.f32 %v1914, %v2143
  %v2264 = vmax.f32 %v1915, %v2145
  %v2265 = vmax.f32 %v1916, %v2147
  %v2266 = vmax.f32 %v1917, %v2149
  %v2267 = vmax.f32 %v1918, %v2151
  %v2268 = vmax.f32 %v1919, %v2153
  %v2269 = vmax.f32 %v1920, %v2155
  %v2270 = vmax.f32 %v1921, %v2157
  %v2271 = vmax.f32 %v1922, %v2159
  %v2272 = vmax.f32 %v1923, %v2161
  %v2273 = vmax.f32 %v1924, %v2163
  %v2274 = vmax.f32 %v1925, %v2165
  %v2275 = vmax.f32 %v1926, %v2167
  %v2276 = vmax.f32 %v1927, %v2169
  %v2277 = vmax.f32 %v1928, %v2171
  %v2278 = vmax.f32 %v1929, %v2173
  %v2279 = vmax.f32 %v1930, %v2175
  %v2280 = vmax.f32 %v1931, %v2177
  %v2281 = vmax.f32 %v1932, %v2179
  %v2282 = vmax.f32 %v1933, %v2181
  %v2283 = vmax.f32 %v1934, %v2183
  %v2284 = vmax.f32 %v1935, %v2185
  %v2285 = vmax.f32 %v1936, %v2187
  %2286 = vrot.lane.b32.xlu0 %v1482, 90
  %v2287 = vpop.permute.xlu0 %2286
  %v2289 = vmul.f32 %v677, %v2287
  %v2290 = vmul.f32 %v678, %v2287
  %v2291 = vmul.f32 %v679, %v2287
  %v2292 = vmul.f32 %v680, %v2287
  %v2293 = vmul.f32 %v681, %v2287
  %v2294 = vmul.f32 %v682, %v2287
  %v2295 = vmul.f32 %v683, %v2287
  %v2296 = vmul.f32 %v684, %v2287
  %v2297 = vmul.f32 %v685, %v2287
  %v2298 = vmul.f32 %v686, %v2287
  %v2299 = vmul.f32 %v687, %v2287
  %v2300 = vmul.f32 %v688, %v2287
  %v2301 = vmul.f32 %v689, %v2287
  %v2302 = vmul.f32 %v690, %v2287
  %v2303 = vmul.f32 %v691, %v2287
  %v2304 = vmul.f32 %v692, %v2287
  %v2305 = vmul.f32 %v693, %v2287
  %v2306 = vmul.f32 %v694, %v2287
  %v2307 = vmul.f32 %v695, %v2287
  %v2308 = vmul.f32 %v696, %v2287
  %v2309 = vmul.f32 %v697, %v2287
  %v2310 = vmul.f32 %v698, %v2287
  %v2311 = vmul.f32 %v699, %v2287
  %v2312 = vmul.f32 %v700, %v2287
  %v2313 = vmul.f32 %v701, %v2287
  %v2314 = vmul.f32 %v702, %v2287
  %v2315 = vmul.f32 %v703, %v2287
  %v2316 = vmul.f32 %v704, %v2287
  %v2317 = vmul.f32 %v705, %v2287
  %v2318 = vmul.f32 %v706, %v2287
  %v2319 = vmul.f32 %v707, %v2287
  %v2320 = vmul.f32 %v708, %v2287
  %v2321 = vmul.f32 %v709, %v2287
  %v2322 = vmul.f32 %v710, %v2287
  %v2323 = vmul.f32 %v711, %v2287
  %v2324 = vmul.f32 %v712, %v2287
  %v2325 = vmul.f32 %v713, %v2287
  %v2326 = vmul.f32 %v714, %v2287
  %v2327 = vmul.f32 %v715, %v2287
  %v2328 = vmul.f32 %v716, %v2287
  %v2329 = vmul.f32 %v717, %v2287
  %v2330 = vmul.f32 %v718, %v2287
  %v2331 = vmul.f32 %v719, %v2287
  %v2332 = vmul.f32 %v720, %v2287
  %v2333 = vmul.f32 %v721, %v2287
  %v2334 = vmul.f32 %v722, %v2287
  %v2335 = vmul.f32 %v723, %v2287
  %v2336 = vmul.f32 %v724, %v2287
  %v2337 = vmul.f32 %v725, %v2287
  %2338 = vrot.lane.b32.xlu0 %v1537, 90
  %v2339 = vpop.permute.xlu0 %2338
  %v2341 = vadd.f32 %v2289, %v2339
  %v2342 = vadd.f32 %v2290, %v2339
  %v2343 = vadd.f32 %v2291, %v2339
  %v2344 = vadd.f32 %v2292, %v2339
  %v2345 = vadd.f32 %v2293, %v2339
  %v2346 = vadd.f32 %v2294, %v2339
  %v2347 = vadd.f32 %v2295, %v2339
  %v2348 = vadd.f32 %v2296, %v2339
  %v2349 = vadd.f32 %v2297, %v2339
  %v2350 = vadd.f32 %v2298, %v2339
  %v2351 = vadd.f32 %v2299, %v2339
  %v2352 = vadd.f32 %v2300, %v2339
  %v2353 = vadd.f32 %v2301, %v2339
  %v2354 = vadd.f32 %v2302, %v2339
  %v2355 = vadd.f32 %v2303, %v2339
  %v2356 = vadd.f32 %v2304, %v2339
  %v2357 = vadd.f32 %v2305, %v2339
  %v2358 = vadd.f32 %v2306, %v2339
  %v2359 = vadd.f32 %v2307, %v2339
  %v2360 = vadd.f32 %v2308, %v2339
  %v2361 = vadd.f32 %v2309, %v2339
  %v2362 = vadd.f32 %v2310, %v2339
  %v2363 = vadd.f32 %v2311, %v2339
  %v2364 = vadd.f32 %v2312, %v2339
  %v2365 = vadd.f32 %v2313, %v2339
  %v2366 = vadd.f32 %v2314, %v2339
  %v2367 = vadd.f32 %v2315, %v2339
  %v2368 = vadd.f32 %v2316, %v2339
  %v2369 = vadd.f32 %v2317, %v2339
  %v2370 = vadd.f32 %v2318, %v2339
  %v2371 = vadd.f32 %v2319, %v2339
  %v2372 = vadd.f32 %v2320, %v2339
  %v2373 = vadd.f32 %v2321, %v2339
  %v2374 = vadd.f32 %v2322, %v2339
  %v2375 = vadd.f32 %v2323, %v2339
  %v2376 = vadd.f32 %v2324, %v2339
  %v2377 = vadd.f32 %v2325, %v2339
  %v2378 = vadd.f32 %v2326, %v2339
  %v2379 = vadd.f32 %v2327, %v2339
  %v2380 = vadd.f32 %v2328, %v2339
  %v2381 = vadd.f32 %v2329, %v2339
  %v2382 = vadd.f32 %v2330, %v2339
  %v2383 = vadd.f32 %v2331, %v2339
  %v2384 = vadd.f32 %v2332, %v2339
  %v2385 = vadd.f32 %v2333, %v2339
  %v2386 = vadd.f32 %v2334, %v2339
  %v2387 = vadd.f32 %v2335, %v2339
  %v2388 = vadd.f32 %v2336, %v2339
  %v2389 = vadd.f32 %v2337, %v2339
  %2439 = vrot.lane.b32.xlu0 %v2341, 38
  %v2440 = vpop.permute.xlu0 %2439
  %2441 = vrot.lane.b32.xlu0 %v2342, 38
  %v2442 = vpop.permute.xlu0 %2441
  %2443 = vrot.lane.b32.xlu0 %v2343, 38
  %v2444 = vpop.permute.xlu0 %2443
  %2445 = vrot.lane.b32.xlu0 %v2344, 38
  %v2446 = vpop.permute.xlu0 %2445
  %2447 = vrot.lane.b32.xlu0 %v2345, 38
  %v2448 = vpop.permute.xlu0 %2447
  %2449 = vrot.lane.b32.xlu0 %v2346, 38
  %v2450 = vpop.permute.xlu0 %2449
  %2451 = vrot.lane.b32.xlu0 %v2347, 38
  %v2452 = vpop.permute.xlu0 %2451
  %2453 = vrot.lane.b32.xlu0 %v2348, 38
  %v2454 = vpop.permute.xlu0 %2453
  %2455 = vrot.lane.b32.xlu0 %v2349, 38
  %v2456 = vpop.permute.xlu0 %2455
  %2457 = vrot.lane.b32.xlu0 %v2350, 38
  %v2458 = vpop.permute.xlu0 %2457
  %2459 = vrot.lane.b32.xlu0 %v2351, 38
  %v2460 = vpop.permute.xlu0 %2459
  %2461 = vrot.lane.b32.xlu0 %v2352, 38
  %v2462 = vpop.permute.xlu0 %2461
  %2463 = vrot.lane.b32.xlu0 %v2353, 38
  %v2464 = vpop.permute.xlu0 %2463
  %2465 = vrot.lane.b32.xlu0 %v2354, 38
  %v2466 = vpop.permute.xlu0 %2465
  %2467 = vrot.lane.b32.xlu0 %v2355, 38
  %v2468 = vpop.permute.xlu0 %2467
  %2469 = vrot.lane.b32.xlu0 %v2356, 38
  %v2470 = vpop.permute.xlu0 %2469
  %2471 = vrot.lane.b32.xlu0 %v2357, 38
  %v2472 = vpop.permute.xlu0 %2471
  %2473 = vrot.lane.b32.xlu0 %v2358, 38
  %v2474 = vpop.permute.xlu0 %2473
  %2475 = vrot.lane.b32.xlu0 %v2359, 38
  %v2476 = vpop.permute.xlu0 %2475
  %2477 = vrot.lane.b32.xlu0 %v2360, 38
  %v2478 = vpop.permute.xlu0 %2477
  %2479 = vrot.lane.b32.xlu0 %v2361, 38
  %v2480 = vpop.permute.xlu0 %2479
  %2481 = vrot.lane.b32.xlu0 %v2362, 38
  %v2482 = vpop.permute.xlu0 %2481
  %2483 = vrot.lane.b32.xlu0 %v2363, 38
  %v2484 = vpop.permute.xlu0 %2483
  %2485 = vrot.lane.b32.xlu0 %v2364, 38
  %v2486 = vpop.permute.xlu0 %2485
  %2487 = vrot.lane.b32.xlu0 %v2365, 38
  %v2488 = vpop.permute.xlu0 %2487
  %2489 = vrot.lane.b32.xlu0 %v2366, 38
  %v2490 = vpop.permute.xlu0 %2489
  %2491 = vrot.lane.b32.xlu0 %v2367, 38
  %v2492 = vpop.permute.xlu0 %2491
  %2493 = vrot.lane.b32.xlu0 %v2368, 38
  %v2494 = vpop.permute.xlu0 %2493
  %2495 = vrot.lane.b32.xlu0 %v2369, 38
  %v2496 = vpop.permute.xlu0 %2495
  %2497 = vrot.lane.b32.xlu0 %v2370, 38
  %v2498 = vpop.permute.xlu0 %2497
  %2499 = vrot.lane.b32.xlu0 %v2371, 38
  %v2500 = vpop.permute.xlu0 %2499
  %2501 = vrot.lane.b32.xlu0 %v2372, 38
  %v2502 = vpop.permute.xlu0 %2501
  %2503 = vrot.lane.b32.xlu0 %v2373, 38
  %v2504 = vpop.permute.xlu0 %2503
  %2505 = vrot.lane.b32.xlu0 %v2374, 38
  %v2506 = vpop.permute.xlu0 %2505
  %2507 = vrot.lane.b32.xlu0 %v2375, 38
  %v2508 = vpop.permute.xlu0 %2507
  %2509 = vrot.lane.b32.xlu0 %v2376, 38
  %v2510 = vpop.permute.xlu0 %2509
  %2511 = vrot.lane.b32.xlu0 %v2377, 38
  %v2512 = vpop.permute.xlu0 %2511
  %2513 = vrot.lane.b32.xlu0 %v2378, 38
  %v2514 = vpop.permute.xlu0 %2513
  %2515 = vrot.lane.b32.xlu0 %v2379, 38
  %v2516 = vpop.permute.xlu0 %2515
  %2517 = vrot.lane.b32.xlu0 %v2380, 38
  %v2518 = vpop.permute.xlu0 %2517
  %2519 = vrot.lane.b32.xlu0 %v2381, 38
  %v2520 = vpop.permute.xlu0 %2519
  %2521 = vrot.lane.b32.xlu0 %v2382, 38
  %v2522 = vpop.permute.xlu0 %2521
  %2523 = vrot.lane.b32.xlu0 %v2383, 38
  %v2524 = vpop.permute.xlu0 %2523
  %2525 = vrot.lane.b32.xlu0 %v2384, 38
  %v2526 = vpop.permute.xlu0 %2525
  %2527 = vrot.lane.b32.xlu0 %v2385, 38
  %v2528 = vpop.permute.xlu0 %2527
  %2529 = vrot.lane.b32.xlu0 %v2386, 38
  %v2530 = vpop.permute.xlu0 %2529
  %2531 = vrot.lane.b32.xlu0 %v2387, 38
  %v2532 = vpop.permute.xlu0 %2531
  %2533 = vrot.lane.b32.xlu0 %v2388, 38
  %v2534 = vpop.permute.xlu0 %2533
  %2535 = vrot.lane.b32.xlu0 %v2389, 38
  %v2536 = vpop.permute.xlu0 %2535
  %v2586 = vmax.f32 %v2237, %v2440
  %v2587 = vmax.f32 %v2238, %v2442
  %v2588 = vmax.f32 %v2239, %v2444
  %v2589 = vmax.f32 %v2240, %v2446
  %v2590 = vmax.f32 %v2241, %v2448
  %v2591 = vmax.f32 %v2242, %v2450
  %v2592 = vmax.f32 %v2243, %v2452
  %v2593 = vmax.f32 %v2244, %v2454
  %v2594 = vmax.f32 %v2245, %v2456
  %v2595 = vmax.f32 %v2246, %v2458
  %v2596 = vmax.f32 %v2247, %v2460
  %v2597 = vmax.f32 %v2248, %v2462
  %v2598 = vmax.f32 %v2249, %v2464
  %v2599 = vmax.f32 %v2250, %v2466
  %v2600 = vmax.f32 %v2251, %v2468
  %v2601 = vmax.f32 %v2252, %v2470
  %v2602 = vmax.f32 %v2253, %v2472
  %v2603 = vmax.f32 %v2254, %v2474
  %v2604 = vmax.f32 %v2255, %v2476
  %v2605 = vmax.f32 %v2256, %v2478
  %v2606 = vmax.f32 %v2257, %v2480
  %v2607 = vmax.f32 %v2258, %v2482
  %v2608 = vmax.f32 %v2259, %v2484
  %v2609 = vmax.f32 %v2260, %v2486
  %v2610 = vmax.f32 %v2261, %v2488
  %v2611 = vmax.f32 %v2262, %v2490
  %v2612 = vmax.f32 %v2263, %v2492
  %v2613 = vmax.f32 %v2264, %v2494
  %v2614 = vmax.f32 %v2265, %v2496
  %v2615 = vmax.f32 %v2266, %v2498
  %v2616 = vmax.f32 %v2267, %v2500
  %v2617 = vmax.f32 %v2268, %v2502
  %v2618 = vmax.f32 %v2269, %v2504
  %v2619 = vmax.f32 %v2270, %v2506
  %v2620 = vmax.f32 %v2271, %v2508
  %v2621 = vmax.f32 %v2272, %v2510
  %v2622 = vmax.f32 %v2273, %v2512
  %v2623 = vmax.f32 %v2274, %v2514
  %v2624 = vmax.f32 %v2275, %v2516
  %v2625 = vmax.f32 %v2276, %v2518
  %v2626 = vmax.f32 %v2277, %v2520
  %v2627 = vmax.f32 %v2278, %v2522
  %v2628 = vmax.f32 %v2279, %v2524
  %v2629 = vmax.f32 %v2280, %v2526
  %v2630 = vmax.f32 %v2281, %v2528
  %v2631 = vmax.f32 %v2282, %v2530
  %v2632 = vmax.f32 %v2283, %v2532
  %v2633 = vmax.f32 %v2284, %v2534
  %v2634 = vmax.f32 %v2285, %v2536
  %v2635 = vpack.c.bf16 %v2586, %v2586
  %v2636 = vpack.c.bf16 %v2587, %v2587
  %v2637 = vpack.c.bf16 %v2588, %v2588
  %v2638 = vpack.c.bf16 %v2589, %v2589
  %v2639 = vpack.c.bf16 %v2590, %v2590
  %v2640 = vpack.c.bf16 %v2591, %v2591
  %v2641 = vpack.c.bf16 %v2592, %v2592
  %v2642 = vpack.c.bf16 %v2593, %v2593
  %v2643 = vpack.c.bf16 %v2594, %v2594
  %v2644 = vpack.c.bf16 %v2595, %v2595
  %v2645 = vpack.c.bf16 %v2596, %v2596
  %v2646 = vpack.c.bf16 %v2597, %v2597
  %v2647 = vpack.c.bf16 %v2598, %v2598
  %v2648 = vpack.c.bf16 %v2599, %v2599
  %v2649 = vpack.c.bf16 %v2600, %v2600
  %v2650 = vpack.c.bf16 %v2601, %v2601
  %v2651 = vpack.c.bf16 %v2602, %v2602
  %v2652 = vpack.c.bf16 %v2603, %v2603
  %v2653 = vpack.c.bf16 %v2604, %v2604
  %v2654 = vpack.c.bf16 %v2605, %v2605
  %v2655 = vpack.c.bf16 %v2606, %v2606
  %v2656 = vpack.c.bf16 %v2607, %v2607
  %v2657 = vpack.c.bf16 %v2608, %v2608
  %v2658 = vpack.c.bf16 %v2609, %v2609
  %v2659 = vpack.c.bf16 %v2610, %v2610
  %v2660 = vpack.c.bf16 %v2611, %v2611
  %v2661 = vpack.c.bf16 %v2612, %v2612
  %v2662 = vpack.c.bf16 %v2613, %v2613
  %v2663 = vpack.c.bf16 %v2614, %v2614
  %v2664 = vpack.c.bf16 %v2615, %v2615
  %v2665 = vpack.c.bf16 %v2616, %v2616
  %v2666 = vpack.c.bf16 %v2617, %v2617
  %v2667 = vpack.c.bf16 %v2618, %v2618
  %v2668 = vpack.c.bf16 %v2619, %v2619
  %v2669 = vpack.c.bf16 %v2620, %v2620
  %v2670 = vpack.c.bf16 %v2621, %v2621
  %v2671 = vpack.c.bf16 %v2622, %v2622
  %v2672 = vpack.c.bf16 %v2623, %v2623
  %v2673 = vpack.c.bf16 %v2624, %v2624
  %v2674 = vpack.c.bf16 %v2625, %v2625
  %v2675 = vpack.c.bf16 %v2626, %v2626
  %v2676 = vpack.c.bf16 %v2627, %v2627
  %v2677 = vpack.c.bf16 %v2628, %v2628
  %v2678 = vpack.c.bf16 %v2629, %v2629
  %v2679 = vpack.c.bf16 %v2630, %v2630
  %v2680 = vpack.c.bf16 %v2631, %v2631
  %v2681 = vpack.c.bf16 %v2632, %v2632
  %v2682 = vpack.c.bf16 %v2633, %v2633
  %v2683 = vpack.c.bf16 %v2634, %v2634
  %v2684 = vld [vmem:[%s6] sm:$0xf]
  %v2685 = vld [vmem:[%s6 + $0x4] sm:$0xf]
  %v2686 = vld [vmem:[%s6 + $0x8] sm:$0xf]
  %v2687 = vld [vmem:[%s6 + $0xc] sm:$0x7]
  %v2688 = vld [vmem:[%s6 + $0x10] sm:$0xf]
  %v2689 = vld [vmem:[%s6 + $0x14] sm:$0xf]
  %v2690 = vld [vmem:[%s6 + $0x18] sm:$0xf]
  %v2691 = vld [vmem:[%s6 + $0x1c] sm:$0x7]
  %v2692 = vld [vmem:[%s6 + $0x20] sm:$0xf]
  %v2693 = vld [vmem:[%s6 + $0x24] sm:$0xf]
  %v2694 = vld [vmem:[%s6 + $0x28] sm:$0xf]
  %v2695 = vld [vmem:[%s6 + $0x2c] sm:$0x7]
  %v2696 = vld [vmem:[%s6 + $0x30] sm:$0xf]
  %v2697 = vld [vmem:[%s6 + $0x34] sm:$0xf]
  %v2698 = vld [vmem:[%s6 + $0x38] sm:$0xf]
  %v2699 = vld [vmem:[%s6 + $0x3c] sm:$0x7]
  %v2700 = vld [vmem:[%s6 + $0x40] sm:$0xf]
  %v2701 = vld [vmem:[%s6 + $0x44] sm:$0xf]
  %v2702 = vld [vmem:[%s6 + $0x48] sm:$0xf]
  %v2703 = vld [vmem:[%s6 + $0x4c] sm:$0x7]
  %v2704 = vld [vmem:[%s6 + $0x50] sm:$0xf]
  %v2705 = vld [vmem:[%s6 + $0x54] sm:$0xf]
  %v2706 = vld [vmem:[%s6 + $0x58] sm:$0xf]
  %v2707 = vld [vmem:[%s6 + $0x5c] sm:$0x7]
  %v2708 = vld [vmem:[%s6 + $0x60] sm:$0xf]
  %v2709 = vld [vmem:[%s6 + $0x64] sm:$0xf]
  %v2710 = vld [vmem:[%s6 + $0x68] sm:$0xf]
  %v2711 = vld [vmem:[%s6 + $0x6c] sm:$0x7]
  %v2712 = vld [vmem:[%s6 + $0x70] sm:$0xf]
  %v2713 = vld [vmem:[%s6 + $0x74] sm:$0xf]
  %v2714 = vld [vmem:[%s6 + $0x78] sm:$0xf]
  %v2715 = vld [vmem:[%s6 + $0x7c] sm:$0x7]
  %v2716 = vld [vmem:[%s6 + $0x80] sm:$0xf]
  %v2717 = vld [vmem:[%s6 + $0x84] sm:$0xf]
  %v2718 = vld [vmem:[%s6 + $0x88] sm:$0xf]
  %v2719 = vld [vmem:[%s6 + $0x8c] sm:$0x7]
  %v2720 = vld [vmem:[%s6 + $0x90] sm:$0xf]
  %v2721 = vld [vmem:[%s6 + $0x94] sm:$0xf]
  %v2722 = vld [vmem:[%s6 + $0x98] sm:$0xf]
  %v2723 = vld [vmem:[%s6 + $0x9c] sm:$0x7]
  %v2724 = vld [vmem:[%s6 + $0xa0] sm:$0xf]
  %v2725 = vld [vmem:[%s6 + $0xa4] sm:$0xf]
  %v2726 = vld [vmem:[%s6 + $0xa8] sm:$0xf]
  %v2727 = vld [vmem:[%s6 + $0xac] sm:$0x7]
  %v2728 = vld [vmem:[%s6 + $0xb0] sm:$0xf]
  %v2729 = vld [vmem:[%s6 + $0xb4] sm:$0xf]
  %v2730 = vld [vmem:[%s6 + $0xb8] sm:$0xf]
  %v2731 = vld [vmem:[%s6 + $0xbc] sm:$0x7]
  %v2732 = vld [vmem:[%s6 + $0xc0] sm:$0xf]
  %v2733 = vld [vmem:[%s6 + $0xc4] sm:$0xf]
  %v2734 = vld [vmem:[%s6 + $0xc8] sm:$0xf]
  %v2735 = vld [vmem:[%s6 + $0xcc] sm:$0x7]
  %v2736 = vld [vmem:[%s6 + $0xd0] sm:$0xf]
  %v2737 = vld [vmem:[%s6 + $0xd4] sm:$0xf]
  %v2738 = vld [vmem:[%s6 + $0xd8] sm:$0xf]
  %v2739 = vld [vmem:[%s6 + $0xdc] sm:$0x7]
  %v2740 = vld [vmem:[%s6 + $0xe0] sm:$0xf]
  %v2741 = vld [vmem:[%s6 + $0xe4] sm:$0xf]
  %v2742 = vld [vmem:[%s6 + $0xe8] sm:$0xf]
  %v2743 = vld [vmem:[%s6 + $0xec] sm:$0x7]
  %v2744 = vld [vmem:[%s6 + $0xf0] sm:$0xf]
  %v2745 = vld [vmem:[%s6 + $0xf4] sm:$0xf]
  %v2746 = vld [vmem:[%s6 + $0xf8] sm:$0xf]
  %v2747 = vld [vmem:[%s6 + $0xfc] sm:$0x7]
  %v2748 = vld [vmem:[%s6 + $0x100] sm:$0xf]
  %v2749 = vld [vmem:[%s6 + $0x104] sm:$0xf]
  %v2750 = vld [vmem:[%s6 + $0x108] sm:$0xf]
  %v2751 = vld [vmem:[%s6 + $0x10c] sm:$0x7]
  %v2752 = vld [vmem:[%s6 + $0x110] sm:$0xf]
  %v2753 = vld [vmem:[%s6 + $0x114] sm:$0xf]
  %v2754 = vld [vmem:[%s6 + $0x118] sm:$0xf]
  %v2755 = vld [vmem:[%s6 + $0x11c] sm:$0x7]
  %v2756 = vld [vmem:[%s6 + $0x120] sm:$0xf]
  %v2757 = vld [vmem:[%s6 + $0x124] sm:$0xf]
  %v2758 = vld [vmem:[%s6 + $0x128] sm:$0xf]
  %v2759 = vld [vmem:[%s6 + $0x12c] sm:$0x7]
  %v2760 = vld [vmem:[%s6 + $0x130] sm:$0xf]
  %v2761 = vld [vmem:[%s6 + $0x134] sm:$0xf]
  %v2762 = vld [vmem:[%s6 + $0x138] sm:$0xf]
  %v2763 = vld [vmem:[%s6 + $0x13c] sm:$0x7]
  %v2764 = vld [vmem:[%s6 + $0x140] sm:$0xf]
  %v2765 = vld [vmem:[%s6 + $0x144] sm:$0xf]
  %v2766 = vld [vmem:[%s6 + $0x148] sm:$0xf]
  %v2767 = vld [vmem:[%s6 + $0x14c] sm:$0x7]
  %v2768 = vld [vmem:[%s6 + $0x150] sm:$0xf]
  %v2769 = vld [vmem:[%s6 + $0x154] sm:$0xf]
  %v2770 = vld [vmem:[%s6 + $0x158] sm:$0xf]
  %v2771 = vld [vmem:[%s6 + $0x15c] sm:$0x7]
  %v2772 = vld [vmem:[%s6 + $0x160] sm:$0xf]
  %v2773 = vld [vmem:[%s6 + $0x164] sm:$0xf]
  %v2774 = vld [vmem:[%s6 + $0x168] sm:$0xf]
  %v2775 = vld [vmem:[%s6 + $0x16c] sm:$0x7]
  %v2776 = vld [vmem:[%s6 + $0x170] sm:$0xf]
  %v2777 = vld [vmem:[%s6 + $0x174] sm:$0xf]
  %v2778 = vld [vmem:[%s6 + $0x178] sm:$0xf]
  %v2779 = vld [vmem:[%s6 + $0x17c] sm:$0x7]
  %v2780 = vld [vmem:[%s6 + $0x180] sm:$0xf]
  %v2781 = vld [vmem:[%s6 + $0x184] sm:$0xf]
  %v2782 = vld [vmem:[%s6 + $0x188] sm:$0xf]
  %v2783 = vld [vmem:[%s6 + $0x18c] sm:$0x7]
  %v2784 = vld [vmem:[%s6 + $0x190] sm:$0xf]
  %v2785 = vld [vmem:[%s6 + $0x194] sm:$0xf]
  %v2786 = vld [vmem:[%s6 + $0x198] sm:$0xf]
  %v2787 = vld [vmem:[%s6 + $0x19c] sm:$0x7]
  %v2788 = vld [vmem:[%s6 + $0x1a0] sm:$0xf]
  %v2789 = vld [vmem:[%s6 + $0x1a4] sm:$0xf]
  %v2790 = vld [vmem:[%s6 + $0x1a8] sm:$0xf]
  %v2791 = vld [vmem:[%s6 + $0x1ac] sm:$0x7]
  %v2792 = vld [vmem:[%s6 + $0x1b0] sm:$0xf]
  %v2793 = vld [vmem:[%s6 + $0x1b4] sm:$0xf]
  %v2794 = vld [vmem:[%s6 + $0x1b8] sm:$0xf]
  %v2795 = vld [vmem:[%s6 + $0x1bc] sm:$0x7]
  %v2796 = vld [vmem:[%s6 + $0x1c0] sm:$0xf]
  %v2797 = vld [vmem:[%s6 + $0x1c4] sm:$0xf]
  %v2798 = vld [vmem:[%s6 + $0x1c8] sm:$0xf]
  %v2799 = vld [vmem:[%s6 + $0x1cc] sm:$0x7]
  %v2800 = vld [vmem:[%s6 + $0x1d0] sm:$0xf]
  %v2801 = vld [vmem:[%s6 + $0x1d4] sm:$0xf]
  %v2802 = vld [vmem:[%s6 + $0x1d8] sm:$0xf]
  %v2803 = vld [vmem:[%s6 + $0x1dc] sm:$0x7]
  %v2804 = vld [vmem:[%s6 + $0x1e0] sm:$0xf]
  %v2805 = vld [vmem:[%s6 + $0x1e4] sm:$0xf]
  %v2806 = vld [vmem:[%s6 + $0x1e8] sm:$0xf]
  %v2807 = vld [vmem:[%s6 + $0x1ec] sm:$0x7]
  %v2808 = vld [vmem:[%s6 + $0x1f0] sm:$0xf]
  %v2809 = vld [vmem:[%s6 + $0x1f4] sm:$0xf]
  %v2810 = vld [vmem:[%s6 + $0x1f8] sm:$0xf]
  %v2811 = vld [vmem:[%s6 + $0x1fc] sm:$0x7]
  %v2812 = vld [vmem:[%s6 + $0x200] sm:$0xf]
  %v2813 = vld [vmem:[%s6 + $0x204] sm:$0xf]
  %v2814 = vld [vmem:[%s6 + $0x208] sm:$0xf]
  %v2815 = vld [vmem:[%s6 + $0x20c] sm:$0x7]
  %v2816 = vld [vmem:[%s6 + $0x210] sm:$0xf]
  %v2817 = vld [vmem:[%s6 + $0x214] sm:$0xf]
  %v2818 = vld [vmem:[%s6 + $0x218] sm:$0xf]
  %v2819 = vld [vmem:[%s6 + $0x21c] sm:$0x7]
  %v2820 = vld [vmem:[%s6 + $0x220] sm:$0xf]
  %v2821 = vld [vmem:[%s6 + $0x224] sm:$0xf]
  %v2822 = vld [vmem:[%s6 + $0x228] sm:$0xf]
  %v2823 = vld [vmem:[%s6 + $0x22c] sm:$0x7]
  %v2824 = vld [vmem:[%s6 + $0x230] sm:$0xf]
  %v2825 = vld [vmem:[%s6 + $0x234] sm:$0xf]
  %v2826 = vld [vmem:[%s6 + $0x238] sm:$0xf]
  %v2827 = vld [vmem:[%s6 + $0x23c] sm:$0x7]
  %v2828 = vld [vmem:[%s6 + $0x240] sm:$0xf]
  %v2829 = vld [vmem:[%s6 + $0x244] sm:$0xf]
  %v2830 = vld [vmem:[%s6 + $0x248] sm:$0xf]
  %v2831 = vld [vmem:[%s6 + $0x24c] sm:$0x7]
  %v2832 = vld [vmem:[%s6 + $0x250] sm:$0xf]
  %v2833 = vld [vmem:[%s6 + $0x254] sm:$0xf]
  %v2834 = vld [vmem:[%s6 + $0x258] sm:$0xf]
  %v2835 = vld [vmem:[%s6 + $0x25c] sm:$0x7]
  %v2836 = vld [vmem:[%s6 + $0x260] sm:$0xf]
  %v2837 = vld [vmem:[%s6 + $0x264] sm:$0xf]
  %v2838 = vld [vmem:[%s6 + $0x268] sm:$0xf]
  %v2839 = vld [vmem:[%s6 + $0x26c] sm:$0x7]
  %v2840 = vld [vmem:[%s6 + $0x270] sm:$0xf]
  %v2841 = vld [vmem:[%s6 + $0x274] sm:$0xf]
  %v2842 = vld [vmem:[%s6 + $0x278] sm:$0xf]
  %v2843 = vld [vmem:[%s6 + $0x27c] sm:$0x7]
  %v2844 = vld [vmem:[%s6 + $0x280] sm:$0xf]
  %v2845 = vld [vmem:[%s6 + $0x284] sm:$0xf]
  %v2846 = vld [vmem:[%s6 + $0x288] sm:$0xf]
  %v2847 = vld [vmem:[%s6 + $0x28c] sm:$0x7]
  %v2848 = vld [vmem:[%s6 + $0x290] sm:$0xf]
  %v2849 = vld [vmem:[%s6 + $0x294] sm:$0xf]
  %v2850 = vld [vmem:[%s6 + $0x298] sm:$0xf]
  %v2851 = vld [vmem:[%s6 + $0x29c] sm:$0x7]
  %v2852 = vld [vmem:[%s6 + $0x2a0] sm:$0xf]
  %v2853 = vld [vmem:[%s6 + $0x2a4] sm:$0xf]
  %v2854 = vld [vmem:[%s6 + $0x2a8] sm:$0xf]
  %v2855 = vld [vmem:[%s6 + $0x2ac] sm:$0x7]
  %v2856 = vld [vmem:[%s6 + $0x2b0] sm:$0xf]
  %v2857 = vld [vmem:[%s6 + $0x2b4] sm:$0xf]
  %v2858 = vld [vmem:[%s6 + $0x2b8] sm:$0xf]
  %v2859 = vld [vmem:[%s6 + $0x2bc] sm:$0x7]
  %v2860 = vld [vmem:[%s6 + $0x2c0] sm:$0xf]
  %v2861 = vld [vmem:[%s6 + $0x2c4] sm:$0xf]
  %v2862 = vld [vmem:[%s6 + $0x2c8] sm:$0xf]
  %v2863 = vld [vmem:[%s6 + $0x2cc] sm:$0x7]
  %v2864 = vld [vmem:[%s6 + $0x2d0] sm:$0xf]
  %v2865 = vld [vmem:[%s6 + $0x2d4] sm:$0xf]
  %v2866 = vld [vmem:[%s6 + $0x2d8] sm:$0xf]
  %v2867 = vld [vmem:[%s6 + $0x2dc] sm:$0x7]
  %v2868 = vld [vmem:[%s6 + $0x2e0] sm:$0xf]
  %v2869 = vld [vmem:[%s6 + $0x2e4] sm:$0xf]
  %v2870 = vld [vmem:[%s6 + $0x2e8] sm:$0xf]
  %v2871 = vld [vmem:[%s6 + $0x2ec] sm:$0x7]
  %v2872 = vld [vmem:[%s6 + $0x2f0] sm:$0xf]
  %v2873 = vld [vmem:[%s6 + $0x2f4] sm:$0xf]
  %v2874 = vld [vmem:[%s6 + $0x2f8] sm:$0xf]
  %v2875 = vld [vmem:[%s6 + $0x2fc] sm:$0x7]
  %v2876 = vld [vmem:[%s6 + $0x300] sm:$0xf]
  %v2877 = vld [vmem:[%s6 + $0x304] sm:$0xf]
  %v2878 = vld [vmem:[%s6 + $0x308] sm:$0xf]
  %v2879 = vld [vmem:[%s6 + $0x30c] sm:$0x7]
  %v2884 = vunpack.c.l.b16 %v2684
  %v2885 = vunpack.c.l.b16 %v2685
  %v2886 = vunpack.c.l.b16 %v2686
  %v2887 = vunpack.c.l.b16 %v2687
  %v2888 = vpack.c.b16 %v2885, %v2884
  %v2889 = vpack.c.b16 %v2887, %v2886
  %v2892 = vsel %vm1197, %v2635, 0
  %vm2894 = vcmask 1046528
  %v2896 = vsel %vm2894, %v2889, 0
  %2898 = vmatprep.subr.bf16.mxu0 0
  %2899 = vmatpush1.bf16.msra.mxu0 %v2888
  %2900 = vmatprep.subr.bf16.mxu0 0
  %2901 = vmatpush1.bf16.msra.mxu0 %v2896
  %2902 = vmatprep.subr.bf16.mxu0 0
  %2903 = vmatpush1.bf16.msra.mxu0 0
  %2904 = vmatprep.subr.bf16.mxu0 0
  %2905 = vmatpush1.bf16.msra.mxu0 0
  %2906 = vmatprep.subr.bf16.mxu0 0
  %2907 = vmatpush1.bf16.msra.mxu0 0
  %2908 = vmatprep.subr.bf16.mxu0 0
  %2909 = vmatpush1.bf16.msra.mxu0 0
  %2910 = vmatprep.subr.bf16.mxu0 0
  %2911 = vmatpush1.bf16.msra.mxu0 0
  %2912 = vmatprep.subr.bf16.mxu0 0
  %2913 = vmatpush1.bf16.msra.mxu0 0
  %2914 = vmatprep.subr.bf16.mxu0 0
  %2915 = vmatpush1.bf16.msra.mxu0 0
  %2916 = vmatprep.subr.bf16.mxu0 0
  %2917 = vmatpush1.bf16.msra.mxu0 0
  %2918 = vmatprep.subr.bf16.mxu0 0
  %2919 = vmatpush1.bf16.msra.mxu0 0
  %2920 = vmatprep.subr.bf16.mxu0 0
  %2921 = vmatpush1.bf16.msra.mxu0 0
  %2922 = vmatprep.subr.bf16.mxu0 0
  %2923 = vmatpush1.bf16.msra.mxu0 0
  %2924 = vmatprep.subr.bf16.mxu0 0
  %2925 = vmatpush1.bf16.msra.mxu0 0
  %2926 = vmatprep.subr.bf16.mxu0 0
  %2927 = vmatpush1.bf16.msra.mxu0 0
  %2928 = vmatprep.subr.bf16.mxu0 0
  %2929 = vmatpush1.bf16.msra.mxu0 0
  %2930 = vmatprep.mubr.bf16.mxu0 0
  %2931 = vmatmul.mubr.bf16.gmra.mrb[0].mxu0 %v2892
  %v2932 = vpop.f32.mrb[0].mxu0
  %v2933 = vadd.f32 0.0, %v2932
  %v2934 = vpop.f32.mrb[0].mxu0
  %v2935 = vpop.f32.mrb[0].mxu0
  %v2936 = vpop.f32.mrb[0].mxu0
  %2937 = vdwg.mxu0
  %v2942 = vunpack.c.l.b16 %v2688
  %v2943 = vunpack.c.l.b16 %v2689
  %v2944 = vunpack.c.l.b16 %v2690
  %v2945 = vunpack.c.l.b16 %v2691
  %v2946 = vpack.c.b16 %v2943, %v2942
  %v2947 = vpack.c.b16 %v2945, %v2944
  %v2950 = vsel %vm1197, %v2636, 0
  %v2953 = vsel %vm2894, %v2947, 0
  %2955 = vmatprep.subr.bf16.mxu0 0
  %2956 = vmatpush1.bf16.msra.mxu0 %v2946
  %2957 = vmatprep.subr.bf16.mxu0 0
  %2958 = vmatpush1.bf16.msra.mxu0 %v2953
  %2959 = vmatprep.subr.bf16.mxu0 0
  %2960 = vmatpush1.bf16.msra.mxu0 0
  %2961 = vmatprep.subr.bf16.mxu0 0
  %2962 = vmatpush1.bf16.msra.mxu0 0
  %2963 = vmatprep.subr.bf16.mxu0 0
  %2964 = vmatpush1.bf16.msra.mxu0 0
  %2965 = vmatprep.subr.bf16.mxu0 0
  %2966 = vmatpush1.bf16.msra.mxu0 0
  %2967 = vmatprep.subr.bf16.mxu0 0
  %2968 = vmatpush1.bf16.msra.mxu0 0
  %2969 = vmatprep.subr.bf16.mxu0 0
  %2970 = vmatpush1.bf16.msra.mxu0 0
  %2971 = vmatprep.subr.bf16.mxu0 0
  %2972 = vmatpush1.bf16.msra.mxu0 0
  %2973 = vmatprep.subr.bf16.mxu0 0
  %2974 = vmatpush1.bf16.msra.mxu0 0
  %2975 = vmatprep.subr.bf16.mxu0 0
  %2976 = vmatpush1.bf16.msra.mxu0 0
  %2977 = vmatprep.subr.bf16.mxu0 0
  %2978 = vmatpush1.bf16.msra.mxu0 0
  %2979 = vmatprep.subr.bf16.mxu0 0
  %2980 = vmatpush1.bf16.msra.mxu0 0
  %2981 = vmatprep.subr.bf16.mxu0 0
  %2982 = vmatpush1.bf16.msra.mxu0 0
  %2983 = vmatprep.subr.bf16.mxu0 0
  %2984 = vmatpush1.bf16.msra.mxu0 0
  %2985 = vmatprep.subr.bf16.mxu0 0
  %2986 = vmatpush1.bf16.msra.mxu0 0
  %2987 = vmatprep.mubr.bf16.mxu0 0
  %2988 = vmatmul.mubr.bf16.gmra.mrb[0].mxu0 %v2950
  %v2989 = vpop.f32.mrb[0].mxu0
  %v2990 = vadd.f32 0.0, %v2989
  %v2991 = vpop.f32.mrb[0].mxu0
  %v2992 = vpop.f32.mrb[0].mxu0
  %v2993 = vpop.f32.mrb[0].mxu0
  %2994 = vdwg.mxu0
  %v2999 = vunpack.c.l.b16 %v2692
  %v3000 = vunpack.c.l.b16 %v2693
  %v3001 = vunpack.c.l.b16 %v2694
  %v3002 = vunpack.c.l.b16 %v2695
  %v3003 = vpack.c.b16 %v3000, %v2999
  %v3004 = vpack.c.b16 %v3002, %v3001
  %v3007 = vsel %vm1197, %v2637, 0
  %v3010 = vsel %vm2894, %v3004, 0
  %3012 = vmatprep.subr.bf16.mxu0 0
  %3013 = vmatpush1.bf16.msra.mxu0 %v3003
  %3014 = vmatprep.subr.bf16.mxu0 0
  %3015 = vmatpush1.bf16.msra.mxu0 %v3010
  %3016 = vmatprep.subr.bf16.mxu0 0
  %3017 = vmatpush1.bf16.msra.mxu0 0
  %3018 = vmatprep.subr.bf16.mxu0 0
  %3019 = vmatpush1.bf16.msra.mxu0 0
  %3020 = vmatprep.subr.bf16.mxu0 0
  %3021 = vmatpush1.bf16.msra.mxu0 0
  %3022 = vmatprep.subr.bf16.mxu0 0
  %3023 = vmatpush1.bf16.msra.mxu0 0
  %3024 = vmatprep.subr.bf16.mxu0 0
  %3025 = vmatpush1.bf16.msra.mxu0 0
  %3026 = vmatprep.subr.bf16.mxu0 0
  %3027 = vmatpush1.bf16.msra.mxu0 0
  %3028 = vmatprep.subr.bf16.mxu0 0
  %3029 = vmatpush1.bf16.msra.mxu0 0
  %3030 = vmatprep.subr.bf16.mxu0 0
  %3031 = vmatpush1.bf16.msra.mxu0 0
  %3032 = vmatprep.subr.bf16.mxu0 0
  %3033 = vmatpush1.bf16.msra.mxu0 0
  %3034 = vmatprep.subr.bf16.mxu0 0
  %3035 = vmatpush1.bf16.msra.mxu0 0
  %3036 = vmatprep.subr.bf16.mxu0 0
  %3037 = vmatpush1.bf16.msra.mxu0 0
  %3038 = vmatprep.subr.bf16.mxu0 0
  %3039 = vmatpush1.bf16.msra.mxu0 0
  %3040 = vmatprep.subr.bf16.mxu0 0
  %3041 = vmatpush1.bf16.msra.mxu0 0
  %3042 = vmatprep.subr.bf16.mxu0 0
  %3043 = vmatpush1.bf16.msra.mxu0 0
  %3044 = vmatprep.mubr.bf16.mxu0 0
  %3045 = vmatmul.mubr.bf16.gmra.mrb[0].mxu0 %v3007
  %v3046 = vpop.f32.mrb[0].mxu0
  %v3047 = vadd.f32 0.0, %v3046
  %v3048 = vpop.f32.mrb[0].mxu0
  %v3049 = vpop.f32.mrb[0].mxu0
  %v3050 = vpop.f32.mrb[0].mxu0
  %3051 = vdwg.mxu0
  %v3056 = vunpack.c.l.b16 %v2696
  %v3057 = vunpack.c.l.b16 %v2697
  %v3058 = vunpack.c.l.b16 %v2698
  %v3059 = vunpack.c.l.b16 %v2699
  %v3060 = vpack.c.b16 %v3057, %v3056
  %v3061 = vpack.c.b16 %v3059, %v3058
  %v3064 = vsel %vm1197, %v2638, 0
  %v3067 = vsel %vm2894, %v3061, 0
  %3069 = vmatprep.subr.bf16.mxu0 0
  %3070 = vmatpush1.bf16.msra.mxu0 %v3060
  %3071 = vmatprep.subr.bf16.mxu0 0
  %3072 = vmatpush1.bf16.msra.mxu0 %v3067
  %3073 = vmatprep.subr.bf16.mxu0 0
  %3074 = vmatpush1.bf16.msra.mxu0 0
  %3075 = vmatprep.subr.bf16.mxu0 0
  %3076 = vmatpush1.bf16.msra.mxu0 0
  %3077 = vmatprep.subr.bf16.mxu0 0
  %3078 = vmatpush1.bf16.msra.mxu0 0
  %3079 = vmatprep.subr.bf16.mxu0 0
  %3080 = vmatpush1.bf16.msra.mxu0 0
  %3081 = vmatprep.subr.bf16.mxu0 0
  %3082 = vmatpush1.bf16.msra.mxu0 0
  %3083 = vmatprep.subr.bf16.mxu0 0
  %3084 = vmatpush1.bf16.msra.mxu0 0
  %3085 = vmatprep.subr.bf16.mxu0 0
  %3086 = vmatpush1.bf16.msra.mxu0 0
  %3087 = vmatprep.subr.bf16.mxu0 0
  %3088 = vmatpush1.bf16.msra.mxu0 0
  %3089 = vmatprep.subr.bf16.mxu0 0
  %3090 = vmatpush1.bf16.msra.mxu0 0
  %3091 = vmatprep.subr.bf16.mxu0 0
  %3092 = vmatpush1.bf16.msra.mxu0 0
  %3093 = vmatprep.subr.bf16.mxu0 0
  %3094 = vmatpush1.bf16.msra.mxu0 0
  %3095 = vmatprep.subr.bf16.mxu0 0
  %3096 = vmatpush1.bf16.msra.mxu0 0
  %3097 = vmatprep.subr.bf16.mxu0 0
  %3098 = vmatpush1.bf16.msra.mxu0 0
  %3099 = vmatprep.subr.bf16.mxu0 0
  %3100 = vmatpush1.bf16.msra.mxu0 0
  %3101 = vmatprep.mubr.bf16.mxu0 0
  %3102 = vmatmul.mubr.bf16.gmra.mrb[0].mxu0 %v3064
  %v3103 = vpop.f32.mrb[0].mxu0
  %v3104 = vadd.f32 0.0, %v3103
  %v3105 = vpop.f32.mrb[0].mxu0
  %v3106 = vpop.f32.mrb[0].mxu0
  %v3107 = vpop.f32.mrb[0].mxu0
  %3108 = vdwg.mxu0
  %v3113 = vunpack.c.l.b16 %v2700
  %v3114 = vunpack.c.l.b16 %v2701
  %v3115 = vunpack.c.l.b16 %v2702
  %v3116 = vunpack.c.l.b16 %v2703
  %v3117 = vpack.c.b16 %v3114, %v3113
  %v3118 = vpack.c.b16 %v3116, %v3115
  %v3121 = vsel %vm1197, %v2639, 0
  %v3124 = vsel %vm2894, %v3118, 0
  %3126 = vmatprep.subr.bf16.mxu0 0
  %3127 = vmatpush1.bf16.msra.mxu0 %v3117
  %3128 = vmatprep.subr.bf16.mxu0 0
  %3129 = vmatpush1.bf16.msra.mxu0 %v3124
  %3130 = vmatprep.subr.bf16.mxu0 0
  %3131 = vmatpush1.bf16.msra.mxu0 0
  %3132 = vmatprep.subr.bf16.mxu0 0
  %3133 = vmatpush1.bf16.msra.mxu0 0
  %3134 = vmatprep.subr.bf16.mxu0 0
  %3135 = vmatpush1.bf16.msra.mxu0 0
  %3136 = vmatprep.subr.bf16.mxu0 0
  %3137 = vmatpush1.bf16.msra.mxu0 0
  %3138 = vmatprep.subr.bf16.mxu0 0
  %3139 = vmatpush1.bf16.msra.mxu0 0
  %3140 = vmatprep.subr.bf16.mxu0 0
  %3141 = vmatpush1.bf16.msra.mxu0 0
  %3142 = vmatprep.subr.bf16.mxu0 0
  %3143 = vmatpush1.bf16.msra.mxu0 0
  %3144 = vmatprep.subr.bf16.mxu0 0
  %3145 = vmatpush1.bf16.msra.mxu0 0
  %3146 = vmatprep.subr.bf16.mxu0 0
  %3147 = vmatpush1.bf16.msra.mxu0 0
  %3148 = vmatprep.subr.bf16.mxu0 0
  %3149 = vmatpush1.bf16.msra.mxu0 0
  %3150 = vmatprep.subr.bf16.mxu0 0
  %3151 = vmatpush1.bf16.msra.mxu0 0
  %3152 = vmatprep.subr.bf16.mxu0 0
  %3153 = vmatpush1.bf16.msra.mxu0 0
  %3154 = vmatprep.subr.bf16.mxu0 0
  %3155 = vmatpush1.bf16.msra.mxu0 0
  %3156 = vmatprep.subr.bf16.mxu0 0
  %3157 = vmatpush1.bf16.msra.mxu0 0
  %3158 = vmatprep.mubr.bf16.mxu0 0
  %3159 = vmatmul.mubr.bf16.gmra.mrb[0].mxu0 %v3121
  %v3160 = vpop.f32.mrb[0].mxu0
  %v3161 = vadd.f32 0.0, %v3160
  %v3162 = vpop.f32.mrb[0].mxu0
  %v3163 = vpop.f32.mrb[0].mxu0
  %v3164 = vpop.f32.mrb[0].mxu0
  %3165 = vdwg.mxu0
  %v3170 = vunpack.c.l.b16 %v2704
  %v3171 = vunpack.c.l.b16 %v2705
  %v3172 = vunpack.c.l.b16 %v2706
  %v3173 = vunpack.c.l.b16 %v2707
  %v3174 = vpack.c.b16 %v3171, %v3170
  %v3175 = vpack.c.b16 %v3173, %v3172
  %v3178 = vsel %vm1197, %v2640, 0
  %v3181 = vsel %vm2894, %v3175, 0
  %3183 = vmatprep.subr.bf16.mxu0 0
  %3184 = vmatpush1.bf16.msra.mxu0 %v3174
  %3185 = vmatprep.subr.bf16.mxu0 0
  %3186 = vmatpush1.bf16.msra.mxu0 %v3181
  %3187 = vmatprep.subr.bf16.mxu0 0
  %3188 = vmatpush1.bf16.msra.mxu0 0
  %3189 = vmatprep.subr.bf16.mxu0 0
  %3190 = vmatpush1.bf16.msra.mxu0 0
  %3191 = vmatprep.subr.bf16.mxu0 0
  %3192 = vmatpush1.bf16.msra.mxu0 0
  %3193 = vmatprep.subr.bf16.mxu0 0
  %3194 = vmatpush1.bf16.msra.mxu0 0
  %3195 = vmatprep.subr.bf16.mxu0 0
  %3196 = vmatpush1.bf16.msra.mxu0 0
  %3197 = vmatprep.subr.bf16.mxu0 0
  %3198 = vmatpush1.bf16.msra.mxu0 0
  %3199 = vmatprep.subr.bf16.mxu0 0
  %3200 = vmatpush1.bf16.msra.mxu0 0
  %3201 = vmatprep.subr.bf16.mxu0 0
  %3202 = vmatpush1.bf16.msra.mxu0 0
  %3203 = vmatprep.subr.bf16.mxu0 0
  %3204 = vmatpush1.bf16.msra.mxu0 0
  %3205 = vmatprep.subr.bf16.mxu0 0
  %3206 = vmatpush1.bf16.msra.mxu0 0
  %3207 = vmatprep.subr.bf16.mxu0 0
  %3208 = vmatpush1.bf16.msra.mxu0 0
  %3209 = vmatprep.subr.bf16.mxu0 0
  %3210 = vmatpush1.bf16.msra.mxu0 0
  %3211 = vmatprep.subr.bf16.mxu0 0
  %3212 = vmatpush1.bf16.msra.mxu0 0
  %3213 = vmatprep.subr.bf16.mxu0 0
  %3214 = vmatpush1.bf16.msra.mxu0 0
  %3215 = vmatprep.mubr.bf16.mxu0 0
  %3216 = vmatmul.mubr.bf16.gmra.mrb[0].mxu0 %v3178
  %v3217 = vpop.f32.mrb[0].mxu0
  %v3218 = vadd.f32 0.0, %v3217
  %v3219 = vpop.f32.mrb[0].mxu0
  %v3220 = vpop.f32.mrb[0].mxu0
  %v3221 = vpop.f32.mrb[0].mxu0
  %3222 = vdwg.mxu0
  %v3227 = vunpack.c.l.b16 %v2708
  %v3228 = vunpack.c.l.b16 %v2709
  %v3229 = vunpack.c.l.b16 %v2710
  %v3230 = vunpack.c.l.b16 %v2711
  %v3231 = vpack.c.b16 %v3228, %v3227
  %v3232 = vpack.c.b16 %v3230, %v3229
  %v3235 = vsel %vm1197, %v2641, 0
  %v3238 = vsel %vm2894, %v3232, 0
  %3240 = vmatprep.subr.bf16.mxu0 0
  %3241 = vmatpush1.bf16.msra.mxu0 %v3231
  %3242 = vmatprep.subr.bf16.mxu0 0
  %3243 = vmatpush1.bf16.msra.mxu0 %v3238
  %3244 = vmatprep.subr.bf16.mxu0 0
  %3245 = vmatpush1.bf16.msra.mxu0 0
  %3246 = vmatprep.subr.bf16.mxu0 0
  %3247 = vmatpush1.bf16.msra.mxu0 0
  %3248 = vmatprep.subr.bf16.mxu0 0
  %3249 = vmatpush1.bf16.msra.mxu0 0
  %3250 = vmatprep.subr.bf16.mxu0 0
  %3251 = vmatpush1.bf16.msra.mxu0 0
  %3252 = vmatprep.subr.bf16.mxu0 0
  %3253 = vmatpush1.bf16.msra.mxu0 0
  %3254 = vmatprep.subr.bf16.mxu0 0
  %3255 = vmatpush1.bf16.msra.mxu0 0
  %3256 = vmatprep.subr.bf16.mxu0 0
  %3257 = vmatpush1.bf16.msra.mxu0 0
  %3258 = vmatprep.subr.bf16.mxu0 0
  %3259 = vmatpush1.bf16.msra.mxu0 0
  %3260 = vmatprep.subr.bf16.mxu0 0
  %3261 = vmatpush1.bf16.msra.mxu0 0
  %3262 = vmatprep.subr.bf16.mxu0 0
  %3263 = vmatpush1.bf16.msra.mxu0 0
  %3264 = vmatprep.subr.bf16.mxu0 0
  %3265 = vmatpush1.bf16.msra.mxu0 0
  %3266 = vmatprep.subr.bf16.mxu0 0
  %3267 = vmatpush1.bf16.msra.mxu0 0
  %3268 = vmatprep.subr.bf16.mxu0 0
  %3269 = vmatpush1.bf16.msra.mxu0 0
  %3270 = vmatprep.subr.bf16.mxu0 0
  %3271 = vmatpush1.bf16.msra.mxu0 0
  %3272 = vmatprep.mubr.bf16.mxu0 0
  %3273 = vmatmul.mubr.bf16.gmra.mrb[0].mxu0 %v3235
  %v3274 = vpop.f32.mrb[0].mxu0
  %v3275 = vadd.f32 0.0, %v3274
  %v3276 = vpop.f32.mrb[0].mxu0
  %v3277 = vpop.f32.mrb[0].mxu0
  %v3278 = vpop.f32.mrb[0].mxu0
  %3279 = vdwg.mxu0
  %v3284 = vunpack.c.l.b16 %v2712
  %v3285 = vunpack.c.l.b16 %v2713
  %v3286 = vunpack.c.l.b16 %v2714
  %v3287 = vunpack.c.l.b16 %v2715
  %v3288 = vpack.c.b16 %v3285, %v3284
  %v3289 = vpack.c.b16 %v3287, %v3286
  %v3292 = vsel %vm1197, %v2642, 0
  %v3295 = vsel %vm2894, %v3289, 0
  %3297 = vmatprep.subr.bf16.mxu0 0
  %3298 = vmatpush1.bf16.msra.mxu0 %v3288
  %3299 = vmatprep.subr.bf16.mxu0 0
  %3300 = vmatpush1.bf16.msra.mxu0 %v3295
  %3301 = vmatprep.subr.bf16.mxu0 0
  %3302 = vmatpush1.bf16.msra.mxu0 0
  %3303 = vmatprep.subr.bf16.mxu0 0
  %3304 = vmatpush1.bf16.msra.mxu0 0
  %3305 = vmatprep.subr.bf16.mxu0 0
  %3306 = vmatpush1.bf16.msra.mxu0 0
  %3307 = vmatprep.subr.bf16.mxu0 0
  %3308 = vmatpush1.bf16.msra.mxu0 0
  %3309 = vmatprep.subr.bf16.mxu0 0
  %3310 = vmatpush1.bf16.msra.mxu0 0
  %3311 = vmatprep.subr.bf16.mxu0 0
  %3312 = vmatpush1.bf16.msra.mxu0 0
  %3313 = vmatprep.subr.bf16.mxu0 0
  %3314 = vmatpush1.bf16.msra.mxu0 0
  %3315 = vmatprep.subr.bf16.mxu0 0
  %3316 = vmatpush1.bf16.msra.mxu0 0
  %3317 = vmatprep.subr.bf16.mxu0 0
  %3318 = vmatpush1.bf16.msra.mxu0 0
  %3319 = vmatprep.subr.bf16.mxu0 0
  %3320 = vmatpush1.bf16.msra.mxu0 0
  %3321 = vmatprep.subr.bf16.mxu0 0
  %3322 = vmatpush1.bf16.msra.mxu0 0
  %3323 = vmatprep.subr.bf16.mxu0 0
  %3324 = vmatpush1.bf16.msra.mxu0 0
  %3325 = vmatprep.subr.bf16.mxu0 0
  %3326 = vmatpush1.bf16.msra.mxu0 0
  %3327 = vmatprep.subr.bf16.mxu0 0
  %3328 = vmatpush1.bf16.msra.mxu0 0
  %3329 = vmatprep.mubr.bf16.mxu0 0
  %3330 = vmatmul.mubr.bf16.gmra.mrb[0].mxu0 %v3292
  %v3331 = vpop.f32.mrb[0].mxu0
  %v3332 = vadd.f32 0.0, %v3331
  %v3333 = vpop.f32.mrb[0].mxu0
  %v3334 = vpop.f32.mrb[0].mxu0
  %v3335 = vpop.f32.mrb[0].mxu0
  %3336 = vdwg.mxu0
  %v3341 = vunpack.c.l.b16 %v2716
  %v3342 = vunpack.c.l.b16 %v2717
  %v3343 = vunpack.c.l.b16 %v2718
  %v3344 = vunpack.c.l.b16 %v2719
  %v3345 = vpack.c.b16 %v3342, %v3341
  %v3346 = vpack.c.b16 %v3344, %v3343
  %v3349 = vsel %vm1197, %v2643, 0
  %v3352 = vsel %vm2894, %v3346, 0
  %3354 = vmatprep.subr.bf16.mxu0 0
  %3355 = vmatpush1.bf16.msra.mxu0 %v3345
  %3356 = vmatprep.subr.bf16.mxu0 0
  %3357 = vmatpush1.bf16.msra.mxu0 %v3352
  %3358 = vmatprep.subr.bf16.mxu0 0
  %3359 = vmatpush1.bf16.msra.mxu0 0
  %3360 = vmatprep.subr.bf16.mxu0 0
  %3361 = vmatpush1.bf16.msra.mxu0 0
  %3362 = vmatprep.subr.bf16.mxu0 0
  %3363 = vmatpush1.bf16.msra.mxu0 0
  %3364 = vmatprep.subr.bf16.mxu0 0
  %3365 = vmatpush1.bf16.msra.mxu0 0
  %3366 = vmatprep.subr.bf16.mxu0 0
  %3367 = vmatpush1.bf16.msra.mxu0 0
  %3368 = vmatprep.subr.bf16.mxu0 0
  %3369 = vmatpush1.bf16.msra.mxu0 0
  %3370 = vmatprep.subr.bf16.mxu0 0
  %3371 = vmatpush1.bf16.msra.mxu0 0
  %3372 = vmatprep.subr.bf16.mxu0 0
  %3373 = vmatpush1.bf16.msra.mxu0 0
  %3374 = vmatprep.subr.bf16.mxu0 0
  %3375 = vmatpush1.bf16.msra.mxu0 0
  %3376 = vmatprep.subr.bf16.mxu0 0
  %3377 = vmatpush1.bf16.msra.mxu0 0
  %3378 = vmatprep.subr.bf16.mxu0 0
  %3379 = vmatpush1.bf16.msra.mxu0 0
  %3380 = vmatprep.subr.bf16.mxu0 0
  %3381 = vmatpush1.bf16.msra.mxu0 0
  %3382 = vmatprep.subr.bf16.mxu0 0
  %3383 = vmatpush1.bf16.msra.mxu0 0
  %3384 = vmatprep.subr.bf16.mxu0 0
  %3385 = vmatpush1.bf16.msra.mxu0 0
  %3386 = vmatprep.mubr.bf16.mxu0 0
  %3387 = vmatmul.mubr.bf16.gmra.mrb[0].mxu0 %v3349
  %v3388 = vpop.f32.mrb[0].mxu0
  %v3389 = vadd.f32 0.0, %v3388
  %v3390 = vpop.f32.mrb[0].mxu0
  %v3391 = vpop.f32.mrb[0].mxu0
  %v3392 = vpop.f32.mrb[0].mxu0
  %3393 = vdwg.mxu0
  %v3398 = vunpack.c.l.b16 %v2720
  %v3399 = vunpack.c.l.b16 %v2721
  %v3400 = vunpack.c.l.b16 %v2722
  %v3401 = vunpack.c.l.b16 %v2723
  %v3402 = vpack.c.b16 %v3399, %v3398
  %v3403 = vpack.c.b16 %v3401, %v3400
  %v3406 = vsel %vm1197, %v2644, 0
  %v3409 = vsel %vm2894, %v3403, 0
  %3411 = vmatprep.subr.bf16.mxu0 0
  %3412 = vmatpush1.bf16.msra.mxu0 %v3402
  %3413 = vmatprep.subr.bf16.mxu0 0
  %3414 = vmatpush1.bf16.msra.mxu0 %v3409
  %3415 = vmatprep.subr.bf16.mxu0 0
  %3416 = vmatpush1.bf16.msra.mxu0 0
  %3417 = vmatprep.subr.bf16.mxu0 0
  %3418 = vmatpush1.bf16.msra.mxu0 0
  %3419 = vmatprep.subr.bf16.mxu0 0
  %3420 = vmatpush1.bf16.msra.mxu0 0
  %3421 = vmatprep.subr.bf16.mxu0 0
  %3422 = vmatpush1.bf16.msra.mxu0 0
  %3423 = vmatprep.subr.bf16.mxu0 0
  %3424 = vmatpush1.bf16.msra.mxu0 0
  %3425 = vmatprep.subr.bf16.mxu0 0
  %3426 = vmatpush1.bf16.msra.mxu0 0
  %3427 = vmatprep.subr.bf16.mxu0 0
  %3428 = vmatpush1.bf16.msra.mxu0 0
  %3429 = vmatprep.subr.bf16.mxu0 0
  %3430 = vmatpush1.bf16.msra.mxu0 0
  %3431 = vmatprep.subr.bf16.mxu0 0
  %3432 = vmatpush1.bf16.msra.mxu0 0
  %3433 = vmatprep.subr.bf16.mxu0 0
  %3434 = vmatpush1.bf16.msra.mxu0 0
  %3435 = vmatprep.subr.bf16.mxu0 0
  %3436 = vmatpush1.bf16.msra.mxu0 0
  %3437 = vmatprep.subr.bf16.mxu0 0
  %3438 = vmatpush1.bf16.msra.mxu0 0
  %3439 = vmatprep.subr.bf16.mxu0 0
  %3440 = vmatpush1.bf16.msra.mxu0 0
  %3441 = vmatprep.subr.bf16.mxu0 0
  %3442 = vmatpush1.bf16.msra.mxu0 0
  %3443 = vmatprep.mubr.bf16.mxu0 0
  %3444 = vmatmul.mubr.bf16.gmra.mrb[0].mxu0 %v3406
  %v3445 = vpop.f32.mrb[0].mxu0
  %v3446 = vadd.f32 0.0, %v3445
  %v3447 = vpop.f32.mrb[0].mxu0
  %v3448 = vpop.f32.mrb[0].mxu0
  %v3449 = vpop.f32.mrb[0].mxu0
  %3450 = vdwg.mxu0
  %v3455 = vunpack.c.l.b16 %v2724
  %v3456 = vunpack.c.l.b16 %v2725
  %v3457 = vunpack.c.l.b16 %v2726
  %v3458 = vunpack.c.l.b16 %v2727
  %v3459 = vpack.c.b16 %v3456, %v3455
  %v3460 = vpack.c.b16 %v3458, %v3457
  %v3463 = vsel %vm1197, %v2645, 0
  %v3466 = vsel %vm2894, %v3460, 0
  %3468 = vmatprep.subr.bf16.mxu0 0
  %3469 = vmatpush1.bf16.msra.mxu0 %v3459
  %3470 = vmatprep.subr.bf16.mxu0 0
  %3471 = vmatpush1.bf16.msra.mxu0 %v3466
  %3472 = vmatprep.subr.bf16.mxu0 0
  %3473 = vmatpush1.bf16.msra.mxu0 0
  %3474 = vmatprep.subr.bf16.mxu0 0
  %3475 = vmatpush1.bf16.msra.mxu0 0
  %3476 = vmatprep.subr.bf16.mxu0 0
  %3477 = vmatpush1.bf16.msra.mxu0 0
  %3478 = vmatprep.subr.bf16.mxu0 0
  %3479 = vmatpush1.bf16.msra.mxu0 0
  %3480 = vmatprep.subr.bf16.mxu0 0
  %3481 = vmatpush1.bf16.msra.mxu0 0
  %3482 = vmatprep.subr.bf16.mxu0 0
  %3483 = vmatpush1.bf16.msra.mxu0 0
  %3484 = vmatprep.subr.bf16.mxu0 0
  %3485 = vmatpush1.bf16.msra.mxu0 0
  %3486 = vmatprep.subr.bf16.mxu0 0
  %3487 = vmatpush1.bf16.msra.mxu0 0
  %3488 = vmatprep.subr.bf16.mxu0 0
  %3489 = vmatpush1.bf16.msra.mxu0 0
  %3490 = vmatprep.subr.bf16.mxu0 0
  %3491 = vmatpush1.bf16.msra.mxu0 0
  %3492 = vmatprep.subr.bf16.mxu0 0
  %3493 = vmatpush1.bf16.msra.mxu0 0
  %3494 = vmatprep.subr.bf16.mxu0 0
  %3495 = vmatpush1.bf16.msra.mxu0 0
  %3496 = vmatprep.subr.bf16.mxu0 0
  %3497 = vmatpush1.bf16.msra.mxu0 0
  %3498 = vmatprep.subr.bf16.mxu0 0
  %3499 = vmatpush1.bf16.msra.mxu0 0
  %3500 = vmatprep.mubr.bf16.mxu0 0
  %3501 = vmatmul.mubr.bf16.gmra.mrb[0].mxu0 %v3463
  %v3502 = vpop.f32.mrb[0].mxu0
  %v3503 = vadd.f32 0.0, %v3502
  %v3504 = vpop.f32.mrb[0].mxu0
  %v3505 = vpop.f32.mrb[0].mxu0
  %v3506 = vpop.f32.mrb[0].mxu0
  %3507 = vdwg.mxu0
  %v3512 = vunpack.c.l.b16 %v2728
  %v3513 = vunpack.c.l.b16 %v2729
  %v3514 = vunpack.c.l.b16 %v2730
  %v3515 = vunpack.c.l.b16 %v2731
  %v3516 = vpack.c.b16 %v3513, %v3512
  %v3517 = vpack.c.b16 %v3515, %v3514
  %v3520 = vsel %vm1197, %v2646, 0
  %v3523 = vsel %vm2894, %v3517, 0
  %3525 = vmatprep.subr.bf16.mxu0 0
  %3526 = vmatpush1.bf16.msra.mxu0 %v3516
  %3527 = vmatprep.subr.bf16.mxu0 0
  %3528 = vmatpush1.bf16.msra.mxu0 %v3523
  %3529 = vmatprep.subr.bf16.mxu0 0
  %3530 = vmatpush1.bf16.msra.mxu0 0
  %3531 = vmatprep.subr.bf16.mxu0 0
  %3532 = vmatpush1.bf16.msra.mxu0 0
  %3533 = vmatprep.subr.bf16.mxu0 0
  %3534 = vmatpush1.bf16.msra.mxu0 0
  %3535 = vmatprep.subr.bf16.mxu0 0
  %3536 = vmatpush1.bf16.msra.mxu0 0
  %3537 = vmatprep.subr.bf16.mxu0 0
  %3538 = vmatpush1.bf16.msra.mxu0 0
  %3539 = vmatprep.subr.bf16.mxu0 0
  %3540 = vmatpush1.bf16.msra.mxu0 0
  %3541 = vmatprep.subr.bf16.mxu0 0
  %3542 = vmatpush1.bf16.msra.mxu0 0
  %3543 = vmatprep.subr.bf16.mxu0 0
  %3544 = vmatpush1.bf16.msra.mxu0 0
  %3545 = vmatprep.subr.bf16.mxu0 0
  %3546 = vmatpush1.bf16.msra.mxu0 0
  %3547 = vmatprep.subr.bf16.mxu0 0
  %3548 = vmatpush1.bf16.msra.mxu0 0
  %3549 = vmatprep.subr.bf16.mxu0 0
  %3550 = vmatpush1.bf16.msra.mxu0 0
  %3551 = vmatprep.subr.bf16.mxu0 0
  %3552 = vmatpush1.bf16.msra.mxu0 0
  %3553 = vmatprep.subr.bf16.mxu0 0
  %3554 = vmatpush1.bf16.msra.mxu0 0
  %3555 = vmatprep.subr.bf16.mxu0 0
  %3556 = vmatpush1.bf16.msra.mxu0 0
  %3557 = vmatprep.mubr.bf16.mxu0 0
  %3558 = vmatmul.mubr.bf16.gmra.mrb[0].mxu0 %v3520
  %v3559 = vpop.f32.mrb[0].mxu0
  %v3560 = vadd.f32 0.0, %v3559
  %v3561 = vpop.f32.mrb[0].mxu0
  %v3562 = vpop.f32.mrb[0].mxu0
  %v3563 = vpop.f32.mrb[0].mxu0
  %3564 = vdwg.mxu0
  %v3569 = vunpack.c.l.b16 %v2732
  %v3570 = vunpack.c.l.b16 %v2733
  %v3571 = vunpack.c.l.b16 %v2734
  %v3572 = vunpack.c.l.b16 %v2735
  %v3573 = vpack.c.b16 %v3570, %v3569
  %v3574 = vpack.c.b16 %v3572, %v3571
  %v3577 = vsel %vm1197, %v2647, 0
  %v3580 = vsel %vm2894, %v3574, 0
  %3582 = vmatprep.subr.bf16.mxu0 0
  %3583 = vmatpush1.bf16.msra.mxu0 %v3573
  %3584 = vmatprep.subr.bf16.mxu0 0
  %3585 = vmatpush1.bf16.msra.mxu0 %v3580
  %3586 = vmatprep.subr.bf16.mxu0 0
  %3587 = vmatpush1.bf16.msra.mxu0 0
  %3588 = vmatprep.subr.bf16.mxu0 0
  %3589 = vmatpush1.bf16.msra.mxu0 0
  %3590 = vmatprep.subr.bf16.mxu0 0
  %3591 = vmatpush1.bf16.msra.mxu0 0
  %3592 = vmatprep.subr.bf16.mxu0 0
  %3593 = vmatpush1.bf16.msra.mxu0 0
  %3594 = vmatprep.subr.bf16.mxu0 0
  %3595 = vmatpush1.bf16.msra.mxu0 0
  %3596 = vmatprep.subr.bf16.mxu0 0
  %3597 = vmatpush1.bf16.msra.mxu0 0
  %3598 = vmatprep.subr.bf16.mxu0 0
  %3599 = vmatpush1.bf16.msra.mxu0 0
  %3600 = vmatprep.subr.bf16.mxu0 0
  %3601 = vmatpush1.bf16.msra.mxu0 0
  %3602 = vmatprep.subr.bf16.mxu0 0
  %3603 = vmatpush1.bf16.msra.mxu0 0
  %3604 = vmatprep.subr.bf16.mxu0 0
  %3605 = vmatpush1.bf16.msra.mxu0 0
  %3606 = vmatprep.subr.bf16.mxu0 0
  %3607 = vmatpush1.bf16.msra.mxu0 0
  %3608 = vmatprep.subr.bf16.mxu0 0
  %3609 = vmatpush1.bf16.msra.mxu0 0
  %3610 = vmatprep.subr.bf16.mxu0 0
  %3611 = vmatpush1.bf16.msra.mxu0 0
  %3612 = vmatprep.subr.bf16.mxu0 0
  %3613 = vmatpush1.bf16.msra.mxu0 0
  %3614 = vmatprep.mubr.bf16.mxu0 0
  %3615 = vmatmul.mubr.bf16.gmra.mrb[0].mxu0 %v3577
  %v3616 = vpop.f32.mrb[0].mxu0
  %v3617 = vadd.f32 0.0, %v3616
  %v3618 = vpop.f32.mrb[0].mxu0
  %v3619 = vpop.f32.mrb[0].mxu0
  %v3620 = vpop.f32.mrb[0].mxu0
  %3621 = vdwg.mxu0
  %v3626 = vunpack.c.l.b16 %v2736
  %v3627 = vunpack.c.l.b16 %v2737
  %v3628 = vunpack.c.l.b16 %v2738
  %v3629 = vunpack.c.l.b16 %v2739
  %v3630 = vpack.c.b16 %v3627, %v3626
  %v3631 = vpack.c.b16 %v3629, %v3628
  %v3634 = vsel %vm1197, %v2648, 0
  %v3637 = vsel %vm2894, %v3631, 0
  %3639 = vmatprep.subr.bf16.mxu0 0
  %3640 = vmatpush1.bf16.msra.mxu0 %v3630
  %3641 = vmatprep.subr.bf16.mxu0 0
  %3642 = vmatpush1.bf16.msra.mxu0 %v3637
  %3643 = vmatprep.subr.bf16.mxu0 0
  %3644 = vmatpush1.bf16.msra.mxu0 0
  %3645 = vmatprep.subr.bf16.mxu0 0
  %3646 = vmatpush1.bf16.msra.mxu0 0
  %3647 = vmatprep.subr.bf16.mxu0 0
  %3648 = vmatpush1.bf16.msra.mxu0 0
  %3649 = vmatprep.subr.bf16.mxu0 0
  %3650 = vmatpush1.bf16.msra.mxu0 0
  %3651 = vmatprep.subr.bf16.mxu0 0
  %3652 = vmatpush1.bf16.msra.mxu0 0
  %3653 = vmatprep.subr.bf16.mxu0 0
  %3654 = vmatpush1.bf16.msra.mxu0 0
  %3655 = vmatprep.subr.bf16.mxu0 0
  %3656 = vmatpush1.bf16.msra.mxu0 0
  %3657 = vmatprep.subr.bf16.mxu0 0
  %3658 = vmatpush1.bf16.msra.mxu0 0
  %3659 = vmatprep.subr.bf16.mxu0 0
  %3660 = vmatpush1.bf16.msra.mxu0 0
  %3661 = vmatprep.subr.bf16.mxu0 0
  %3662 = vmatpush1.bf16.msra.mxu0 0
  %3663 = vmatprep.subr.bf16.mxu0 0
  %3664 = vmatpush1.bf16.msra.mxu0 0
  %3665 = vmatprep.subr.bf16.mxu0 0
  %3666 = vmatpush1.bf16.msra.mxu0 0
  %3667 = vmatprep.subr.bf16.mxu0 0
  %3668 = vmatpush1.bf16.msra.mxu0 0
  %3669 = vmatprep.subr.bf16.mxu0 0
  %3670 = vmatpush1.bf16.msra.mxu0 0
  %3671 = vmatprep.mubr.bf16.mxu0 0
  %3672 = vmatmul.mubr.bf16.gmra.mrb[0].mxu0 %v3634
  %v3673 = vpop.f32.mrb[0].mxu0
  %v3674 = vadd.f32 0.0, %v3673
  %v3675 = vpop.f32.mrb[0].mxu0
  %v3676 = vpop.f32.mrb[0].mxu0
  %v3677 = vpop.f32.mrb[0].mxu0
  %3678 = vdwg.mxu0
  %v3683 = vunpack.c.l.b16 %v2740
  %v3684 = vunpack.c.l.b16 %v2741
  %v3685 = vunpack.c.l.b16 %v2742
  %v3686 = vunpack.c.l.b16 %v2743
  %v3687 = vpack.c.b16 %v3684, %v3683
  %v3688 = vpack.c.b16 %v3686, %v3685
  %v3691 = vsel %vm1197, %v2649, 0
  %v3694 = vsel %vm2894, %v3688, 0
  %3696 = vmatprep.subr.bf16.mxu0 0
  %3697 = vmatpush1.bf16.msra.mxu0 %v3687
  %3698 = vmatprep.subr.bf16.mxu0 0
  %3699 = vmatpush1.bf16.msra.mxu0 %v3694
  %3700 = vmatprep.subr.bf16.mxu0 0
  %3701 = vmatpush1.bf16.msra.mxu0 0
  %3702 = vmatprep.subr.bf16.mxu0 0
  %3703 = vmatpush1.bf16.msra.mxu0 0
  %3704 = vmatprep.subr.bf16.mxu0 0
  %3705 = vmatpush1.bf16.msra.mxu0 0
  %3706 = vmatprep.subr.bf16.mxu0 0
  %3707 = vmatpush1.bf16.msra.mxu0 0
  %3708 = vmatprep.subr.bf16.mxu0 0
  %3709 = vmatpush1.bf16.msra.mxu0 0
  %3710 = vmatprep.subr.bf16.mxu0 0
  %3711 = vmatpush1.bf16.msra.mxu0 0
  %3712 = vmatprep.subr.bf16.mxu0 0
  %3713 = vmatpush1.bf16.msra.mxu0 0
  %3714 = vmatprep.subr.bf16.mxu0 0
  %3715 = vmatpush1.bf16.msra.mxu0 0
  %3716 = vmatprep.subr.bf16.mxu0 0
  %3717 = vmatpush1.bf16.msra.mxu0 0
  %3718 = vmatprep.subr.bf16.mxu0 0
  %3719 = vmatpush1.bf16.msra.mxu0 0
  %3720 = vmatprep.subr.bf16.mxu0 0
  %3721 = vmatpush1.bf16.msra.mxu0 0
  %3722 = vmatprep.subr.bf16.mxu0 0
  %3723 = vmatpush1.bf16.msra.mxu0 0
  %3724 = vmatprep.subr.bf16.mxu0 0
  %3725 = vmatpush1.bf16.msra.mxu0 0
  %3726 = vmatprep.subr.bf16.mxu0 0
  %3727 = vmatpush1.bf16.msra.mxu0 0
  %3728 = vmatprep.mubr.bf16.mxu0 0
  %3729 = vmatmul.mubr.bf16.gmra.mrb[0].mxu0 %v3691
  %v3730 = vpop.f32.mrb[0].mxu0
  %v3731 = vadd.f32 0.0, %v3730
  %v3732 = vpop.f32.mrb[0].mxu0
  %v3733 = vpop.f32.mrb[0].mxu0
  %v3734 = vpop.f32.mrb[0].mxu0
  %3735 = vdwg.mxu0
  %v3740 = vunpack.c.l.b16 %v2744
  %v3741 = vunpack.c.l.b16 %v2745
  %v3742 = vunpack.c.l.b16 %v2746
  %v3743 = vunpack.c.l.b16 %v2747
  %v3744 = vpack.c.b16 %v3741, %v3740
  %v3745 = vpack.c.b16 %v3743, %v3742
  %v3748 = vsel %vm1197, %v2650, 0
  %v3751 = vsel %vm2894, %v3745, 0
  %3753 = vmatprep.subr.bf16.mxu0 0
  %3754 = vmatpush1.bf16.msra.mxu0 %v3744
  %3755 = vmatprep.subr.bf16.mxu0 0
  %3756 = vmatpush1.bf16.msra.mxu0 %v3751
  %3757 = vmatprep.subr.bf16.mxu0 0
  %3758 = vmatpush1.bf16.msra.mxu0 0
  %3759 = vmatprep.subr.bf16.mxu0 0
  %3760 = vmatpush1.bf16.msra.mxu0 0
  %3761 = vmatprep.subr.bf16.mxu0 0
  %3762 = vmatpush1.bf16.msra.mxu0 0
  %3763 = vmatprep.subr.bf16.mxu0 0
  %3764 = vmatpush1.bf16.msra.mxu0 0
  %3765 = vmatprep.subr.bf16.mxu0 0
  %3766 = vmatpush1.bf16.msra.mxu0 0
  %3767 = vmatprep.subr.bf16.mxu0 0
  %3768 = vmatpush1.bf16.msra.mxu0 0
  %3769 = vmatprep.subr.bf16.mxu0 0
  %3770 = vmatpush1.bf16.msra.mxu0 0
  %3771 = vmatprep.subr.bf16.mxu0 0
  %3772 = vmatpush1.bf16.msra.mxu0 0
  %3773 = vmatprep.subr.bf16.mxu0 0
  %3774 = vmatpush1.bf16.msra.mxu0 0
  %3775 = vmatprep.subr.bf16.mxu0 0
  %3776 = vmatpush1.bf16.msra.mxu0 0
  %3777 = vmatprep.subr.bf16.mxu0 0
  %3778 = vmatpush1.bf16.msra.mxu0 0
  %3779 = vmatprep.subr.bf16.mxu0 0
  %3780 = vmatpush1.bf16.msra.mxu0 0
  %3781 = vmatprep.subr.bf16.mxu0 0
  %3782 = vmatpush1.bf16.msra.mxu0 0
  %3783 = vmatprep.subr.bf16.mxu0 0
  %3784 = vmatpush1.bf16.msra.mxu0 0
  %3785 = vmatprep.mubr.bf16.mxu0 0
  %3786 = vmatmul.mubr.bf16.gmra.mrb[0].mxu0 %v3748
  %v3787 = vpop.f32.mrb[0].mxu0
  %v3788 = vadd.f32 0.0, %v3787
  %v3789 = vpop.f32.mrb[0].mxu0
  %v3790 = vpop.f32.mrb[0].mxu0
  %v3791 = vpop.f32.mrb[0].mxu0
  %3792 = vdwg.mxu0
  %v3797 = vunpack.c.l.b16 %v2748
  %v3798 = vunpack.c.l.b16 %v2749
  %v3799 = vunpack.c.l.b16 %v2750
  %v3800 = vunpack.c.l.b16 %v2751
  %v3801 = vpack.c.b16 %v3798, %v3797
  %v3802 = vpack.c.b16 %v3800, %v3799
  %v3805 = vsel %vm1197, %v2651, 0
  %v3808 = vsel %vm2894, %v3802, 0
  %3810 = vmatprep.subr.bf16.mxu0 0
  %3811 = vmatpush1.bf16.msra.mxu0 %v3801
  %3812 = vmatprep.subr.bf16.mxu0 0
  %3813 = vmatpush1.bf16.msra.mxu0 %v3808
  %3814 = vmatprep.subr.bf16.mxu0 0
  %3815 = vmatpush1.bf16.msra.mxu0 0
  %3816 = vmatprep.subr.bf16.mxu0 0
  %3817 = vmatpush1.bf16.msra.mxu0 0
  %3818 = vmatprep.subr.bf16.mxu0 0
  %3819 = vmatpush1.bf16.msra.mxu0 0
  %3820 = vmatprep.subr.bf16.mxu0 0
  %3821 = vmatpush1.bf16.msra.mxu0 0
  %3822 = vmatprep.subr.bf16.mxu0 0
  %3823 = vmatpush1.bf16.msra.mxu0 0
  %3824 = vmatprep.subr.bf16.mxu0 0
  %3825 = vmatpush1.bf16.msra.mxu0 0
  %3826 = vmatprep.subr.bf16.mxu0 0
  %3827 = vmatpush1.bf16.msra.mxu0 0
  %3828 = vmatprep.subr.bf16.mxu0 0
  %3829 = vmatpush1.bf16.msra.mxu0 0
  %3830 = vmatprep.subr.bf16.mxu0 0
  %3831 = vmatpush1.bf16.msra.mxu0 0
  %3832 = vmatprep.subr.bf16.mxu0 0
  %3833 = vmatpush1.bf16.msra.mxu0 0
  %3834 = vmatprep.subr.bf16.mxu0 0
  %3835 = vmatpush1.bf16.msra.mxu0 0
  %3836 = vmatprep.subr.bf16.mxu0 0
  %3837 = vmatpush1.bf16.msra.mxu0 0
  %3838 = vmatprep.subr.bf16.mxu0 0
  %3839 = vmatpush1.bf16.msra.mxu0 0
  %3840 = vmatprep.subr.bf16.mxu0 0
  %3841 = vmatpush1.bf16.msra.mxu0 0
  %3842 = vmatprep.mubr.bf16.mxu0 0
  %3843 = vmatmul.mubr.bf16.gmra.mrb[0].mxu0 %v3805
  %v3844 = vpop.f32.mrb[0].mxu0
  %v3845 = vadd.f32 0.0, %v3844
  %v3846 = vpop.f32.mrb[0].mxu0
  %v3847 = vpop.f32.mrb[0].mxu0
  %v3848 = vpop.f32.mrb[0].mxu0
  %3849 = vdwg.mxu0
  %v3854 = vunpack.c.l.b16 %v2752
  %v3855 = vunpack.c.l.b16 %v2753
  %v3856 = vunpack.c.l.b16 %v2754
  %v3857 = vunpack.c.l.b16 %v2755
  %v3858 = vpack.c.b16 %v3855, %v3854
  %v3859 = vpack.c.b16 %v3857, %v3856
  %v3862 = vsel %vm1197, %v2652, 0
  %v3865 = vsel %vm2894, %v3859, 0
  %3867 = vmatprep.subr.bf16.mxu0 0
  %3868 = vmatpush1.bf16.msra.mxu0 %v3858
  %3869 = vmatprep.subr.bf16.mxu0 0
  %3870 = vmatpush1.bf16.msra.mxu0 %v3865
  %3871 = vmatprep.subr.bf16.mxu0 0
  %3872 = vmatpush1.bf16.msra.mxu0 0
  %3873 = vmatprep.subr.bf16.mxu0 0
  %3874 = vmatpush1.bf16.msra.mxu0 0
  %3875 = vmatprep.subr.bf16.mxu0 0
  %3876 = vmatpush1.bf16.msra.mxu0 0
  %3877 = vmatprep.subr.bf16.mxu0 0
  %3878 = vmatpush1.bf16.msra.mxu0 0
  %3879 = vmatprep.subr.bf16.mxu0 0
  %3880 = vmatpush1.bf16.msra.mxu0 0
  %3881 = vmatprep.subr.bf16.mxu0 0
  %3882 = vmatpush1.bf16.msra.mxu0 0
  %3883 = vmatprep.subr.bf16.mxu0 0
  %3884 = vmatpush1.bf16.msra.mxu0 0
  %3885 = vmatprep.subr.bf16.mxu0 0
  %3886 = vmatpush1.bf16.msra.mxu0 0
  %3887 = vmatprep.subr.bf16.mxu0 0
  %3888 = vmatpush1.bf16.msra.mxu0 0
  %3889 = vmatprep.subr.bf16.mxu0 0
  %3890 = vmatpush1.bf16.msra.mxu0 0
  %3891 = vmatprep.subr.bf16.mxu0 0
  %3892 = vmatpush1.bf16.msra.mxu0 0
  %3893 = vmatprep.subr.bf16.mxu0 0
  %3894 = vmatpush1.bf16.msra.mxu0 0
  %3895 = vmatprep.subr.bf16.mxu0 0
  %3896 = vmatpush1.bf16.msra.mxu0 0
  %3897 = vmatprep.subr.bf16.mxu0 0
  %3898 = vmatpush1.bf16.msra.mxu0 0
  %3899 = vmatprep.mubr.bf16.mxu0 0
  %3900 = vmatmul.mubr.bf16.gmra.mrb[0].mxu0 %v3862
  %v3901 = vpop.f32.mrb[0].mxu0
  %v3902 = vadd.f32 0.0, %v3901
  %v3903 = vpop.f32.mrb[0].mxu0
  %v3904 = vpop.f32.mrb[0].mxu0
  %v3905 = vpop.f32.mrb[0].mxu0
  %3906 = vdwg.mxu0
  %v3911 = vunpack.c.l.b16 %v2756
  %v3912 = vunpack.c.l.b16 %v2757
  %v3913 = vunpack.c.l.b16 %v2758
  %v3914 = vunpack.c.l.b16 %v2759
  %v3915 = vpack.c.b16 %v3912, %v3911
  %v3916 = vpack.c.b16 %v3914, %v3913
  %v3919 = vsel %vm1197, %v2653, 0
  %v3922 = vsel %vm2894, %v3916, 0
  %3924 = vmatprep.subr.bf16.mxu0 0
  %3925 = vmatpush1.bf16.msra.mxu0 %v3915
  %3926 = vmatprep.subr.bf16.mxu0 0
  %3927 = vmatpush1.bf16.msra.mxu0 %v3922
  %3928 = vmatprep.subr.bf16.mxu0 0
  %3929 = vmatpush1.bf16.msra.mxu0 0
  %3930 = vmatprep.subr.bf16.mxu0 0
  %3931 = vmatpush1.bf16.msra.mxu0 0
  %3932 = vmatprep.subr.bf16.mxu0 0
  %3933 = vmatpush1.bf16.msra.mxu0 0
  %3934 = vmatprep.subr.bf16.mxu0 0
  %3935 = vmatpush1.bf16.msra.mxu0 0
  %3936 = vmatprep.subr.bf16.mxu0 0
  %3937 = vmatpush1.bf16.msra.mxu0 0
  %3938 = vmatprep.subr.bf16.mxu0 0
  %3939 = vmatpush1.bf16.msra.mxu0 0
  %3940 = vmatprep.subr.bf16.mxu0 0
  %3941 = vmatpush1.bf16.msra.mxu0 0
  %3942 = vmatprep.subr.bf16.mxu0 0
  %3943 = vmatpush1.bf16.msra.mxu0 0
  %3944 = vmatprep.subr.bf16.mxu0 0
  %3945 = vmatpush1.bf16.msra.mxu0 0
  %3946 = vmatprep.subr.bf16.mxu0 0
  %3947 = vmatpush1.bf16.msra.mxu0 0
  %3948 = vmatprep.subr.bf16.mxu0 0
  %3949 = vmatpush1.bf16.msra.mxu0 0
  %3950 = vmatprep.subr.bf16.mxu0 0
  %3951 = vmatpush1.bf16.msra.mxu0 0
  %3952 = vmatprep.subr.bf16.mxu0 0
  %3953 = vmatpush1.bf16.msra.mxu0 0
  %3954 = vmatprep.subr.bf16.mxu0 0
  %3955 = vmatpush1.bf16.msra.mxu0 0
  %3956 = vmatprep.mubr.bf16.mxu0 0
  %3957 = vmatmul.mubr.bf16.gmra.mrb[0].mxu0 %v3919
  %v3958 = vpop.f32.mrb[0].mxu0
  %v3959 = vadd.f32 0.0, %v3958
  %v3960 = vpop.f32.mrb[0].mxu0
  %v3961 = vpop.f32.mrb[0].mxu0
  %v3962 = vpop.f32.mrb[0].mxu0
  %3963 = vdwg.mxu0
  %v3968 = vunpack.c.l.b16 %v2760
  %v3969 = vunpack.c.l.b16 %v2761
  %v3970 = vunpack.c.l.b16 %v2762
  %v3971 = vunpack.c.l.b16 %v2763
  %v3972 = vpack.c.b16 %v3969, %v3968
  %v3973 = vpack.c.b16 %v3971, %v3970
  %v3976 = vsel %vm1197, %v2654, 0
  %v3979 = vsel %vm2894, %v3973, 0
  %3981 = vmatprep.subr.bf16.mxu0 0
  %3982 = vmatpush1.bf16.msra.mxu0 %v3972
  %3983 = vmatprep.subr.bf16.mxu0 0
  %3984 = vmatpush1.bf16.msra.mxu0 %v3979
  %3985 = vmatprep.subr.bf16.mxu0 0
  %3986 = vmatpush1.bf16.msra.mxu0 0
  %3987 = vmatprep.subr.bf16.mxu0 0
  %3988 = vmatpush1.bf16.msra.mxu0 0
  %3989 = vmatprep.subr.bf16.mxu0 0
  %3990 = vmatpush1.bf16.msra.mxu0 0
  %3991 = vmatprep.subr.bf16.mxu0 0
  %3992 = vmatpush1.bf16.msra.mxu0 0
  %3993 = vmatprep.subr.bf16.mxu0 0
  %3994 = vmatpush1.bf16.msra.mxu0 0
  %3995 = vmatprep.subr.bf16.mxu0 0
  %3996 = vmatpush1.bf16.msra.mxu0 0
  %3997 = vmatprep.subr.bf16.mxu0 0
  %3998 = vmatpush1.bf16.msra.mxu0 0
  %3999 = vmatprep.subr.bf16.mxu0 0
  %4000 = vmatpush1.bf16.msra.mxu0 0
  %4001 = vmatprep.subr.bf16.mxu0 0
  %4002 = vmatpush1.bf16.msra.mxu0 0
  %4003 = vmatprep.subr.bf16.mxu0 0
  %4004 = vmatpush1.bf16.msra.mxu0 0
  %4005 = vmatprep.subr.bf16.mxu0 0
  %4006 = vmatpush1.bf16.msra.mxu0 0
  %4007 = vmatprep.subr.bf16.mxu0 0
  %4008 = vmatpush1.bf16.msra.mxu0 0
  %4009 = vmatprep.subr.bf16.mxu0 0
  %4010 = vmatpush1.bf16.msra.mxu0 0
  %4011 = vmatprep.subr.bf16.mxu0 0
  %4012 = vmatpush1.bf16.msra.mxu0 0
  %4013 = vmatprep.mubr.bf16.mxu0 0
  %4014 = vmatmul.mubr.bf16.gmra.mrb[0].mxu0 %v3976
  %v4015 = vpop.f32.mrb[0].mxu0
  %v4016 = vadd.f32 0.0, %v4015
  %v4017 = vpop.f32.mrb[0].mxu0
  %v4018 = vpop.f32.mrb[0].mxu0
  %v4019 = vpop.f32.mrb[0].mxu0
  %4020 = vdwg.mxu0
  %v4025 = vunpack.c.l.b16 %v2764
  %v4026 = vunpack.c.l.b16 %v2765
  %v4027 = vunpack.c.l.b16 %v2766
  %v4028 = vunpack.c.l.b16 %v2767
  %v4029 = vpack.c.b16 %v4026, %v4025
  %v4030 = vpack.c.b16 %v4028, %v4027
  %v4033 = vsel %vm1197, %v2655, 0
  %v4036 = vsel %vm2894, %v4030, 0
  %4038 = vmatprep.subr.bf16.mxu0 0
  %4039 = vmatpush1.bf16.msra.mxu0 %v4029
  %4040 = vmatprep.subr.bf16.mxu0 0
  %4041 = vmatpush1.bf16.msra.mxu0 %v4036
  %4042 = vmatprep.subr.bf16.mxu0 0
  %4043 = vmatpush1.bf16.msra.mxu0 0
  %4044 = vmatprep.subr.bf16.mxu0 0
  %4045 = vmatpush1.bf16.msra.mxu0 0
  %4046 = vmatprep.subr.bf16.mxu0 0
  %4047 = vmatpush1.bf16.msra.mxu0 0
  %4048 = vmatprep.subr.bf16.mxu0 0
  %4049 = vmatpush1.bf16.msra.mxu0 0
  %4050 = vmatprep.subr.bf16.mxu0 0
  %4051 = vmatpush1.bf16.msra.mxu0 0
  %4052 = vmatprep.subr.bf16.mxu0 0
  %4053 = vmatpush1.bf16.msra.mxu0 0
  %4054 = vmatprep.subr.bf16.mxu0 0
  %4055 = vmatpush1.bf16.msra.mxu0 0
  %4056 = vmatprep.subr.bf16.mxu0 0
  %4057 = vmatpush1.bf16.msra.mxu0 0
  %4058 = vmatprep.subr.bf16.mxu0 0
  %4059 = vmatpush1.bf16.msra.mxu0 0
  %4060 = vmatprep.subr.bf16.mxu0 0
  %4061 = vmatpush1.bf16.msra.mxu0 0
  %4062 = vmatprep.subr.bf16.mxu0 0
  %4063 = vmatpush1.bf16.msra.mxu0 0
  %4064 = vmatprep.subr.bf16.mxu0 0
  %4065 = vmatpush1.bf16.msra.mxu0 0
  %4066 = vmatprep.subr.bf16.mxu0 0
  %4067 = vmatpush1.bf16.msra.mxu0 0
  %4068 = vmatprep.subr.bf16.mxu0 0
  %4069 = vmatpush1.bf16.msra.mxu0 0
  %4070 = vmatprep.mubr.bf16.mxu0 0
  %4071 = vmatmul.mubr.bf16.gmra.mrb[0].mxu0 %v4033
  %v4072 = vpop.f32.mrb[0].mxu0
  %v4073 = vadd.f32 0.0, %v4072
  %v4074 = vpop.f32.mrb[0].mxu0
  %v4075 = vpop.f32.mrb[0].mxu0
  %v4076 = vpop.f32.mrb[0].mxu0
  %4077 = vdwg.mxu0
  %v4082 = vunpack.c.l.b16 %v2768
  %v4083 = vunpack.c.l.b16 %v2769
  %v4084 = vunpack.c.l.b16 %v2770
  %v4085 = vunpack.c.l.b16 %v2771
  %v4086 = vpack.c.b16 %v4083, %v4082
  %v4087 = vpack.c.b16 %v4085, %v4084
  %v4090 = vsel %vm1197, %v2656, 0
  %v4093 = vsel %vm2894, %v4087, 0
  %4095 = vmatprep.subr.bf16.mxu0 0
  %4096 = vmatpush1.bf16.msra.mxu0 %v4086
  %4097 = vmatprep.subr.bf16.mxu0 0
  %4098 = vmatpush1.bf16.msra.mxu0 %v4093
  %4099 = vmatprep.subr.bf16.mxu0 0
  %4100 = vmatpush1.bf16.msra.mxu0 0
  %4101 = vmatprep.subr.bf16.mxu0 0
  %4102 = vmatpush1.bf16.msra.mxu0 0
  %4103 = vmatprep.subr.bf16.mxu0 0
  %4104 = vmatpush1.bf16.msra.mxu0 0
  %4105 = vmatprep.subr.bf16.mxu0 0
  %4106 = vmatpush1.bf16.msra.mxu0 0
  %4107 = vmatprep.subr.bf16.mxu0 0
  %4108 = vmatpush1.bf16.msra.mxu0 0
  %4109 = vmatprep.subr.bf16.mxu0 0
  %4110 = vmatpush1.bf16.msra.mxu0 0
  %4111 = vmatprep.subr.bf16.mxu0 0
  %4112 = vmatpush1.bf16.msra.mxu0 0
  %4113 = vmatprep.subr.bf16.mxu0 0
  %4114 = vmatpush1.bf16.msra.mxu0 0
  %4115 = vmatprep.subr.bf16.mxu0 0
  %4116 = vmatpush1.bf16.msra.mxu0 0
  %4117 = vmatprep.subr.bf16.mxu0 0
  %4118 = vmatpush1.bf16.msra.mxu0 0
  %4119 = vmatprep.subr.bf16.mxu0 0
  %4120 = vmatpush1.bf16.msra.mxu0 0
  %4121 = vmatprep.subr.bf16.mxu0 0
  %4122 = vmatpush1.bf16.msra.mxu0 0
  %4123 = vmatprep.subr.bf16.mxu0 0
  %4124 = vmatpush1.bf16.msra.mxu0 0
  %4125 = vmatprep.subr.bf16.mxu0 0
  %4126 = vmatpush1.bf16.msra.mxu0 0
  %4127 = vmatprep.mubr.bf16.mxu0 0
  %4128 = vmatmul.mubr.bf16.gmra.mrb[0].mxu0 %v4090
  %v4129 = vpop.f32.mrb[0].mxu0
  %v4130 = vadd.f32 0.0, %v4129
  %v4131 = vpop.f32.mrb[0].mxu0
  %v4132 = vpop.f32.mrb[0].mxu0
  %v4133 = vpop.f32.mrb[0].mxu0
  %4134 = vdwg.mxu0
  %v4139 = vunpack.c.l.b16 %v2772
  %v4140 = vunpack.c.l.b16 %v2773
  %v4141 = vunpack.c.l.b16 %v2774
  %v4142 = vunpack.c.l.b16 %v2775
  %v4143 = vpack.c.b16 %v4140, %v4139
  %v4144 = vpack.c.b16 %v4142, %v4141
  %v4147 = vsel %vm1197, %v2657, 0
  %v4150 = vsel %vm2894, %v4144, 0
  %4152 = vmatprep.subr.bf16.mxu0 0
  %4153 = vmatpush1.bf16.msra.mxu0 %v4143
  %4154 = vmatprep.subr.bf16.mxu0 0
  %4155 = vmatpush1.bf16.msra.mxu0 %v4150
  %4156 = vmatprep.subr.bf16.mxu0 0
  %4157 = vmatpush1.bf16.msra.mxu0 0
  %4158 = vmatprep.subr.bf16.mxu0 0
  %4159 = vmatpush1.bf16.msra.mxu0 0
  %4160 = vmatprep.subr.bf16.mxu0 0
  %4161 = vmatpush1.bf16.msra.mxu0 0
  %4162 = vmatprep.subr.bf16.mxu0 0
  %4163 = vmatpush1.bf16.msra.mxu0 0
  %4164 = vmatprep.subr.bf16.mxu0 0
  %4165 = vmatpush1.bf16.msra.mxu0 0
  %4166 = vmatprep.subr.bf16.mxu0 0
  %4167 = vmatpush1.bf16.msra.mxu0 0
  %4168 = vmatprep.subr.bf16.mxu0 0
  %4169 = vmatpush1.bf16.msra.mxu0 0
  %4170 = vmatprep.subr.bf16.mxu0 0
  %4171 = vmatpush1.bf16.msra.mxu0 0
  %4172 = vmatprep.subr.bf16.mxu0 0
  %4173 = vmatpush1.bf16.msra.mxu0 0
  %4174 = vmatprep.subr.bf16.mxu0 0
  %4175 = vmatpush1.bf16.msra.mxu0 0
  %4176 = vmatprep.subr.bf16.mxu0 0
  %4177 = vmatpush1.bf16.msra.mxu0 0
  %4178 = vmatprep.subr.bf16.mxu0 0
  %4179 = vmatpush1.bf16.msra.mxu0 0
  %4180 = vmatprep.subr.bf16.mxu0 0
  %4181 = vmatpush1.bf16.msra.mxu0 0
  %4182 = vmatprep.subr.bf16.mxu0 0
  %4183 = vmatpush1.bf16.msra.mxu0 0
  %4184 = vmatprep.mubr.bf16.mxu0 0
  %4185 = vmatmul.mubr.bf16.gmra.mrb[0].mxu0 %v4147
  %v4186 = vpop.f32.mrb[0].mxu0
  %v4187 = vadd.f32 0.0, %v4186
  %v4188 = vpop.f32.mrb[0].mxu0
  %v4189 = vpop.f32.mrb[0].mxu0
  %v4190 = vpop.f32.mrb[0].mxu0
  %4191 = vdwg.mxu0
  %v4196 = vunpack.c.l.b16 %v2776
  %v4197 = vunpack.c.l.b16 %v2777
  %v4198 = vunpack.c.l.b16 %v2778
  %v4199 = vunpack.c.l.b16 %v2779
  %v4200 = vpack.c.b16 %v4197, %v4196
  %v4201 = vpack.c.b16 %v4199, %v4198
  %v4204 = vsel %vm1197, %v2658, 0
  %v4207 = vsel %vm2894, %v4201, 0
  %4209 = vmatprep.subr.bf16.mxu0 0
  %4210 = vmatpush1.bf16.msra.mxu0 %v4200
  %4211 = vmatprep.subr.bf16.mxu0 0
  %4212 = vmatpush1.bf16.msra.mxu0 %v4207
  %4213 = vmatprep.subr.bf16.mxu0 0
  %4214 = vmatpush1.bf16.msra.mxu0 0
  %4215 = vmatprep.subr.bf16.mxu0 0
  %4216 = vmatpush1.bf16.msra.mxu0 0
  %4217 = vmatprep.subr.bf16.mxu0 0
  %4218 = vmatpush1.bf16.msra.mxu0 0
  %4219 = vmatprep.subr.bf16.mxu0 0
  %4220 = vmatpush1.bf16.msra.mxu0 0
  %4221 = vmatprep.subr.bf16.mxu0 0
  %4222 = vmatpush1.bf16.msra.mxu0 0
  %4223 = vmatprep.subr.bf16.mxu0 0
  %4224 = vmatpush1.bf16.msra.mxu0 0
  %4225 = vmatprep.subr.bf16.mxu0 0
  %4226 = vmatpush1.bf16.msra.mxu0 0
  %4227 = vmatprep.subr.bf16.mxu0 0
  %4228 = vmatpush1.bf16.msra.mxu0 0
  %4229 = vmatprep.subr.bf16.mxu0 0
  %4230 = vmatpush1.bf16.msra.mxu0 0
  %4231 = vmatprep.subr.bf16.mxu0 0
  %4232 = vmatpush1.bf16.msra.mxu0 0
  %4233 = vmatprep.subr.bf16.mxu0 0
  %4234 = vmatpush1.bf16.msra.mxu0 0
  %4235 = vmatprep.subr.bf16.mxu0 0
  %4236 = vmatpush1.bf16.msra.mxu0 0
  %4237 = vmatprep.subr.bf16.mxu0 0
  %4238 = vmatpush1.bf16.msra.mxu0 0
  %4239 = vmatprep.subr.bf16.mxu0 0
  %4240 = vmatpush1.bf16.msra.mxu0 0
  %4241 = vmatprep.mubr.bf16.mxu0 0
  %4242 = vmatmul.mubr.bf16.gmra.mrb[0].mxu0 %v4204
  %v4243 = vpop.f32.mrb[0].mxu0
  %v4244 = vadd.f32 0.0, %v4243
  %v4245 = vpop.f32.mrb[0].mxu0
  %v4246 = vpop.f32.mrb[0].mxu0
  %v4247 = vpop.f32.mrb[0].mxu0
  %4248 = vdwg.mxu0
  %v4253 = vunpack.c.l.b16 %v2780
  %v4254 = vunpack.c.l.b16 %v2781
  %v4255 = vunpack.c.l.b16 %v2782
  %v4256 = vunpack.c.l.b16 %v2783
  %v4257 = vpack.c.b16 %v4254, %v4253
  %v4258 = vpack.c.b16 %v4256, %v4255
  %v4261 = vsel %vm1197, %v2659, 0
  %v4264 = vsel %vm2894, %v4258, 0
  %4266 = vmatprep.subr.bf16.mxu0 0
  %4267 = vmatpush1.bf16.msra.mxu0 %v4257
  %4268 = vmatprep.subr.bf16.mxu0 0
  %4269 = vmatpush1.bf16.msra.mxu0 %v4264
  %4270 = vmatprep.subr.bf16.mxu0 0
  %4271 = vmatpush1.bf16.msra.mxu0 0
  %4272 = vmatprep.subr.bf16.mxu0 0
  %4273 = vmatpush1.bf16.msra.mxu0 0
  %4274 = vmatprep.subr.bf16.mxu0 0
  %4275 = vmatpush1.bf16.msra.mxu0 0
  %4276 = vmatprep.subr.bf16.mxu0 0
  %4277 = vmatpush1.bf16.msra.mxu0 0
  %4278 = vmatprep.subr.bf16.mxu0 0
  %4279 = vmatpush1.bf16.msra.mxu0 0
  %4280 = vmatprep.subr.bf16.mxu0 0
  %4281 = vmatpush1.bf16.msra.mxu0 0
  %4282 = vmatprep.subr.bf16.mxu0 0
  %4283 = vmatpush1.bf16.msra.mxu0 0
  %4284 = vmatprep.subr.bf16.mxu0 0
  %4285 = vmatpush1.bf16.msra.mxu0 0
  %4286 = vmatprep.subr.bf16.mxu0 0
  %4287 = vmatpush1.bf16.msra.mxu0 0
  %4288 = vmatprep.subr.bf16.mxu0 0
  %4289 = vmatpush1.bf16.msra.mxu0 0
  %4290 = vmatprep.subr.bf16.mxu0 0
  %4291 = vmatpush1.bf16.msra.mxu0 0
  %4292 = vmatprep.subr.bf16.mxu0 0
  %4293 = vmatpush1.bf16.msra.mxu0 0
  %4294 = vmatprep.subr.bf16.mxu0 0
  %4295 = vmatpush1.bf16.msra.mxu0 0
  %4296 = vmatprep.subr.bf16.mxu0 0
  %4297 = vmatpush1.bf16.msra.mxu0 0
  %4298 = vmatprep.mubr.bf16.mxu0 0
  %4299 = vmatmul.mubr.bf16.gmra.mrb[0].mxu0 %v4261
  %v4300 = vpop.f32.mrb[0].mxu0
  %v4301 = vadd.f32 0.0, %v4300
  %v4302 = vpop.f32.mrb[0].mxu0
  %v4303 = vpop.f32.mrb[0].mxu0
  %v4304 = vpop.f32.mrb[0].mxu0
  %4305 = vdwg.mxu0
  %v4310 = vunpack.c.l.b16 %v2784
  %v4311 = vunpack.c.l.b16 %v2785
  %v4312 = vunpack.c.l.b16 %v2786
  %v4313 = vunpack.c.l.b16 %v2787
  %v4314 = vpack.c.b16 %v4311, %v4310
  %v4315 = vpack.c.b16 %v4313, %v4312
  %v4318 = vsel %vm1197, %v2660, 0
  %v4321 = vsel %vm2894, %v4315, 0
  %4323 = vmatprep.subr.bf16.mxu0 0
  %4324 = vmatpush1.bf16.msra.mxu0 %v4314
  %4325 = vmatprep.subr.bf16.mxu0 0
  %4326 = vmatpush1.bf16.msra.mxu0 %v4321
  %4327 = vmatprep.subr.bf16.mxu0 0
  %4328 = vmatpush1.bf16.msra.mxu0 0
  %4329 = vmatprep.subr.bf16.mxu0 0
  %4330 = vmatpush1.bf16.msra.mxu0 0
  %4331 = vmatprep.subr.bf16.mxu0 0
  %4332 = vmatpush1.bf16.msra.mxu0 0
  %4333 = vmatprep.subr.bf16.mxu0 0
  %4334 = vmatpush1.bf16.msra.mxu0 0
  %4335 = vmatprep.subr.bf16.mxu0 0
  %4336 = vmatpush1.bf16.msra.mxu0 0
  %4337 = vmatprep.subr.bf16.mxu0 0
  %4338 = vmatpush1.bf16.msra.mxu0 0
  %4339 = vmatprep.subr.bf16.mxu0 0
  %4340 = vmatpush1.bf16.msra.mxu0 0
  %4341 = vmatprep.subr.bf16.mxu0 0
  %4342 = vmatpush1.bf16.msra.mxu0 0
  %4343 = vmatprep.subr.bf16.mxu0 0
  %4344 = vmatpush1.bf16.msra.mxu0 0
  %4345 = vmatprep.subr.bf16.mxu0 0
  %4346 = vmatpush1.bf16.msra.mxu0 0
  %4347 = vmatprep.subr.bf16.mxu0 0
  %4348 = vmatpush1.bf16.msra.mxu0 0
  %4349 = vmatprep.subr.bf16.mxu0 0
  %4350 = vmatpush1.bf16.msra.mxu0 0
  %4351 = vmatprep.subr.bf16.mxu0 0
  %4352 = vmatpush1.bf16.msra.mxu0 0
  %4353 = vmatprep.subr.bf16.mxu0 0
  %4354 = vmatpush1.bf16.msra.mxu0 0
  %4355 = vmatprep.mubr.bf16.mxu0 0
  %4356 = vmatmul.mubr.bf16.gmra.mrb[0].mxu0 %v4318
  %v4357 = vpop.f32.mrb[0].mxu0
  %v4358 = vadd.f32 0.0, %v4357
  %v4359 = vpop.f32.mrb[0].mxu0
  %v4360 = vpop.f32.mrb[0].mxu0
  %v4361 = vpop.f32.mrb[0].mxu0
  %4362 = vdwg.mxu0
  %v4367 = vunpack.c.l.b16 %v2788
  %v4368 = vunpack.c.l.b16 %v2789
  %v4369 = vunpack.c.l.b16 %v2790
  %v4370 = vunpack.c.l.b16 %v2791
  %v4371 = vpack.c.b16 %v4368, %v4367
  %v4372 = vpack.c.b16 %v4370, %v4369
  %v4375 = vsel %vm1197, %v2661, 0
  %v4378 = vsel %vm2894, %v4372, 0
  %4380 = vmatprep.subr.bf16.mxu0 0
  %4381 = vmatpush1.bf16.msra.mxu0 %v4371
  %4382 = vmatprep.subr.bf16.mxu0 0
  %4383 = vmatpush1.bf16.msra.mxu0 %v4378
  %4384 = vmatprep.subr.bf16.mxu0 0
  %4385 = vmatpush1.bf16.msra.mxu0 0
  %4386 = vmatprep.subr.bf16.mxu0 0
  %4387 = vmatpush1.bf16.msra.mxu0 0
  %4388 = vmatprep.subr.bf16.mxu0 0
  %4389 = vmatpush1.bf16.msra.mxu0 0
  %4390 = vmatprep.subr.bf16.mxu0 0
  %4391 = vmatpush1.bf16.msra.mxu0 0
  %4392 = vmatprep.subr.bf16.mxu0 0
  %4393 = vmatpush1.bf16.msra.mxu0 0
  %4394 = vmatprep.subr.bf16.mxu0 0
  %4395 = vmatpush1.bf16.msra.mxu0 0
  %4396 = vmatprep.subr.bf16.mxu0 0
  %4397 = vmatpush1.bf16.msra.mxu0 0
  %4398 = vmatprep.subr.bf16.mxu0 0
  %4399 = vmatpush1.bf16.msra.mxu0 0
  %4400 = vmatprep.subr.bf16.mxu0 0
  %4401 = vmatpush1.bf16.msra.mxu0 0
  %4402 = vmatprep.subr.bf16.mxu0 0
  %4403 = vmatpush1.bf16.msra.mxu0 0
  %4404 = vmatprep.subr.bf16.mxu0 0
  %4405 = vmatpush1.bf16.msra.mxu0 0
  %4406 = vmatprep.subr.bf16.mxu0 0
  %4407 = vmatpush1.bf16.msra.mxu0 0
  %4408 = vmatprep.subr.bf16.mxu0 0
  %4409 = vmatpush1.bf16.msra.mxu0 0
  %4410 = vmatprep.subr.bf16.mxu0 0
  %4411 = vmatpush1.bf16.msra.mxu0 0
  %4412 = vmatprep.mubr.bf16.mxu0 0
  %4413 = vmatmul.mubr.bf16.gmra.mrb[0].mxu0 %v4375
  %v4414 = vpop.f32.mrb[0].mxu0
  %v4415 = vadd.f32 0.0, %v4414
  %v4416 = vpop.f32.mrb[0].mxu0
  %v4417 = vpop.f32.mrb[0].mxu0
  %v4418 = vpop.f32.mrb[0].mxu0
  %4419 = vdwg.mxu0
  %v4424 = vunpack.c.l.b16 %v2792
  %v4425 = vunpack.c.l.b16 %v2793
  %v4426 = vunpack.c.l.b16 %v2794
  %v4427 = vunpack.c.l.b16 %v2795
  %v4428 = vpack.c.b16 %v4425, %v4424
  %v4429 = vpack.c.b16 %v4427, %v4426
  %v4432 = vsel %vm1197, %v2662, 0
  %v4435 = vsel %vm2894, %v4429, 0
  %4437 = vmatprep.subr.bf16.mxu0 0
  %4438 = vmatpush1.bf16.msra.mxu0 %v4428
  %4439 = vmatprep.subr.bf16.mxu0 0
  %4440 = vmatpush1.bf16.msra.mxu0 %v4435
  %4441 = vmatprep.subr.bf16.mxu0 0
  %4442 = vmatpush1.bf16.msra.mxu0 0
  %4443 = vmatprep.subr.bf16.mxu0 0
  %4444 = vmatpush1.bf16.msra.mxu0 0
  %4445 = vmatprep.subr.bf16.mxu0 0
  %4446 = vmatpush1.bf16.msra.mxu0 0
  %4447 = vmatprep.subr.bf16.mxu0 0
  %4448 = vmatpush1.bf16.msra.mxu0 0
  %4449 = vmatprep.subr.bf16.mxu0 0
  %4450 = vmatpush1.bf16.msra.mxu0 0
  %4451 = vmatprep.subr.bf16.mxu0 0
  %4452 = vmatpush1.bf16.msra.mxu0 0
  %4453 = vmatprep.subr.bf16.mxu0 0
  %4454 = vmatpush1.bf16.msra.mxu0 0
  %4455 = vmatprep.subr.bf16.mxu0 0
  %4456 = vmatpush1.bf16.msra.mxu0 0
  %4457 = vmatprep.subr.bf16.mxu0 0
  %4458 = vmatpush1.bf16.msra.mxu0 0
  %4459 = vmatprep.subr.bf16.mxu0 0
  %4460 = vmatpush1.bf16.msra.mxu0 0
  %4461 = vmatprep.subr.bf16.mxu0 0
  %4462 = vmatpush1.bf16.msra.mxu0 0
  %4463 = vmatprep.subr.bf16.mxu0 0
  %4464 = vmatpush1.bf16.msra.mxu0 0
  %4465 = vmatprep.subr.bf16.mxu0 0
  %4466 = vmatpush1.bf16.msra.mxu0 0
  %4467 = vmatprep.subr.bf16.mxu0 0
  %4468 = vmatpush1.bf16.msra.mxu0 0
  %4469 = vmatprep.mubr.bf16.mxu0 0
  %4470 = vmatmul.mubr.bf16.gmra.mrb[0].mxu0 %v4432
  %v4471 = vpop.f32.mrb[0].mxu0
  %v4472 = vadd.f32 0.0, %v4471
  %v4473 = vpop.f32.mrb[0].mxu0
  %v4474 = vpop.f32.mrb[0].mxu0
  %v4475 = vpop.f32.mrb[0].mxu0
  %4476 = vdwg.mxu0
  %v4481 = vunpack.c.l.b16 %v2796
  %v4482 = vunpack.c.l.b16 %v2797
  %v4483 = vunpack.c.l.b16 %v2798
  %v4484 = vunpack.c.l.b16 %v2799
  %v4485 = vpack.c.b16 %v4482, %v4481
  %v4486 = vpack.c.b16 %v4484, %v4483
  %v4489 = vsel %vm1197, %v2663, 0
  %v4492 = vsel %vm2894, %v4486, 0
  %4494 = vmatprep.subr.bf16.mxu0 0
  %4495 = vmatpush1.bf16.msra.mxu0 %v4485
  %4496 = vmatprep.subr.bf16.mxu0 0
  %4497 = vmatpush1.bf16.msra.mxu0 %v4492
  %4498 = vmatprep.subr.bf16.mxu0 0
  %4499 = vmatpush1.bf16.msra.mxu0 0
  %4500 = vmatprep.subr.bf16.mxu0 0
  %4501 = vmatpush1.bf16.msra.mxu0 0
  %4502 = vmatprep.subr.bf16.mxu0 0
  %4503 = vmatpush1.bf16.msra.mxu0 0
  %4504 = vmatprep.subr.bf16.mxu0 0
  %4505 = vmatpush1.bf16.msra.mxu0 0
  %4506 = vmatprep.subr.bf16.mxu0 0
  %4507 = vmatpush1.bf16.msra.mxu0 0
  %4508 = vmatprep.subr.bf16.mxu0 0
  %4509 = vmatpush1.bf16.msra.mxu0 0
  %4510 = vmatprep.subr.bf16.mxu0 0
  %4511 = vmatpush1.bf16.msra.mxu0 0
  %4512 = vmatprep.subr.bf16.mxu0 0
  %4513 = vmatpush1.bf16.msra.mxu0 0
  %4514 = vmatprep.subr.bf16.mxu0 0
  %4515 = vmatpush1.bf16.msra.mxu0 0
  %4516 = vmatprep.subr.bf16.mxu0 0
  %4517 = vmatpush1.bf16.msra.mxu0 0
  %4518 = vmatprep.subr.bf16.mxu0 0
  %4519 = vmatpush1.bf16.msra.mxu0 0
  %4520 = vmatprep.subr.bf16.mxu0 0
  %4521 = vmatpush1.bf16.msra.mxu0 0
  %4522 = vmatprep.subr.bf16.mxu0 0
  %4523 = vmatpush1.bf16.msra.mxu0 0
  %4524 = vmatprep.subr.bf16.mxu0 0
  %4525 = vmatpush1.bf16.msra.mxu0 0
  %4526 = vmatprep.mubr.bf16.mxu0 0
  %4527 = vmatmul.mubr.bf16.gmra.mrb[0].mxu0 %v4489
  %v4528 = vpop.f32.mrb[0].mxu0
  %v4529 = vadd.f32 0.0, %v4528
  %v4530 = vpop.f32.mrb[0].mxu0
  %v4531 = vpop.f32.mrb[0].mxu0
  %v4532 = vpop.f32.mrb[0].mxu0
  %4533 = vdwg.mxu0
  %v4538 = vunpack.c.l.b16 %v2800
  %v4539 = vunpack.c.l.b16 %v2801
  %v4540 = vunpack.c.l.b16 %v2802
  %v4541 = vunpack.c.l.b16 %v2803
  %v4542 = vpack.c.b16 %v4539, %v4538
  %v4543 = vpack.c.b16 %v4541, %v4540
  %v4546 = vsel %vm1197, %v2664, 0
  %v4549 = vsel %vm2894, %v4543, 0
  %4551 = vmatprep.subr.bf16.mxu0 0
  %4552 = vmatpush1.bf16.msra.mxu0 %v4542
  %4553 = vmatprep.subr.bf16.mxu0 0
  %4554 = vmatpush1.bf16.msra.mxu0 %v4549
  %4555 = vmatprep.subr.bf16.mxu0 0
  %4556 = vmatpush1.bf16.msra.mxu0 0
  %4557 = vmatprep.subr.bf16.mxu0 0
  %4558 = vmatpush1.bf16.msra.mxu0 0
  %4559 = vmatprep.subr.bf16.mxu0 0
  %4560 = vmatpush1.bf16.msra.mxu0 0
  %4561 = vmatprep.subr.bf16.mxu0 0
  %4562 = vmatpush1.bf16.msra.mxu0 0
  %4563 = vmatprep.subr.bf16.mxu0 0
  %4564 = vmatpush1.bf16.msra.mxu0 0
  %4565 = vmatprep.subr.bf16.mxu0 0
  %4566 = vmatpush1.bf16.msra.mxu0 0
  %4567 = vmatprep.subr.bf16.mxu0 0
  %4568 = vmatpush1.bf16.msra.mxu0 0
  %4569 = vmatprep.subr.bf16.mxu0 0
  %4570 = vmatpush1.bf16.msra.mxu0 0
  %4571 = vmatprep.subr.bf16.mxu0 0
  %4572 = vmatpush1.bf16.msra.mxu0 0
  %4573 = vmatprep.subr.bf16.mxu0 0
  %4574 = vmatpush1.bf16.msra.mxu0 0
  %4575 = vmatprep.subr.bf16.mxu0 0
  %4576 = vmatpush1.bf16.msra.mxu0 0
  %4577 = vmatprep.subr.bf16.mxu0 0
  %4578 = vmatpush1.bf16.msra.mxu0 0
  %4579 = vmatprep.subr.bf16.mxu0 0
  %4580 = vmatpush1.bf16.msra.mxu0 0
  %4581 = vmatprep.subr.bf16.mxu0 0
  %4582 = vmatpush1.bf16.msra.mxu0 0
  %4583 = vmatprep.mubr.bf16.mxu0 0
  %4584 = vmatmul.mubr.bf16.gmra.mrb[0].mxu0 %v4546
  %v4585 = vpop.f32.mrb[0].mxu0
  %v4586 = vadd.f32 0.0, %v4585
  %v4587 = vpop.f32.mrb[0].mxu0
  %v4588 = vpop.f32.mrb[0].mxu0
  %v4589 = vpop.f32.mrb[0].mxu0
  %4590 = vdwg.mxu0
  %v4595 = vunpack.c.l.b16 %v2804
  %v4596 = vunpack.c.l.b16 %v2805
  %v4597 = vunpack.c.l.b16 %v2806
  %v4598 = vunpack.c.l.b16 %v2807
  %v4599 = vpack.c.b16 %v4596, %v4595
  %v4600 = vpack.c.b16 %v4598, %v4597
  %v4603 = vsel %vm1197, %v2665, 0
  %v4606 = vsel %vm2894, %v4600, 0
  %4608 = vmatprep.subr.bf16.mxu0 0
  %4609 = vmatpush1.bf16.msra.mxu0 %v4599
  %4610 = vmatprep.subr.bf16.mxu0 0
  %4611 = vmatpush1.bf16.msra.mxu0 %v4606
  %4612 = vmatprep.subr.bf16.mxu0 0
  %4613 = vmatpush1.bf16.msra.mxu0 0
  %4614 = vmatprep.subr.bf16.mxu0 0
  %4615 = vmatpush1.bf16.msra.mxu0 0
  %4616 = vmatprep.subr.bf16.mxu0 0
  %4617 = vmatpush1.bf16.msra.mxu0 0
  %4618 = vmatprep.subr.bf16.mxu0 0
  %4619 = vmatpush1.bf16.msra.mxu0 0
  %4620 = vmatprep.subr.bf16.mxu0 0
  %4621 = vmatpush1.bf16.msra.mxu0 0
  %4622 = vmatprep.subr.bf16.mxu0 0
  %4623 = vmatpush1.bf16.msra.mxu0 0
  %4624 = vmatprep.subr.bf16.mxu0 0
  %4625 = vmatpush1.bf16.msra.mxu0 0
  %4626 = vmatprep.subr.bf16.mxu0 0
  %4627 = vmatpush1.bf16.msra.mxu0 0
  %4628 = vmatprep.subr.bf16.mxu0 0
  %4629 = vmatpush1.bf16.msra.mxu0 0
  %4630 = vmatprep.subr.bf16.mxu0 0
  %4631 = vmatpush1.bf16.msra.mxu0 0
  %4632 = vmatprep.subr.bf16.mxu0 0
  %4633 = vmatpush1.bf16.msra.mxu0 0
  %4634 = vmatprep.subr.bf16.mxu0 0
  %4635 = vmatpush1.bf16.msra.mxu0 0
  %4636 = vmatprep.subr.bf16.mxu0 0
  %4637 = vmatpush1.bf16.msra.mxu0 0
  %4638 = vmatprep.subr.bf16.mxu0 0
  %4639 = vmatpush1.bf16.msra.mxu0 0
  %4640 = vmatprep.mubr.bf16.mxu0 0
  %4641 = vmatmul.mubr.bf16.gmra.mrb[0].mxu0 %v4603
  %v4642 = vpop.f32.mrb[0].mxu0
  %v4643 = vadd.f32 0.0, %v4642
  %v4644 = vpop.f32.mrb[0].mxu0
  %v4645 = vpop.f32.mrb[0].mxu0
  %v4646 = vpop.f32.mrb[0].mxu0
  %4647 = vdwg.mxu0
  %v4652 = vunpack.c.l.b16 %v2808
  %v4653 = vunpack.c.l.b16 %v2809
  %v4654 = vunpack.c.l.b16 %v2810
  %v4655 = vunpack.c.l.b16 %v2811
  %v4656 = vpack.c.b16 %v4653, %v4652
  %v4657 = vpack.c.b16 %v4655, %v4654
  %v4660 = vsel %vm1197, %v2666, 0
  %v4663 = vsel %vm2894, %v4657, 0
  %4665 = vmatprep.subr.bf16.mxu0 0
  %4666 = vmatpush1.bf16.msra.mxu0 %v4656
  %4667 = vmatprep.subr.bf16.mxu0 0
  %4668 = vmatpush1.bf16.msra.mxu0 %v4663
  %4669 = vmatprep.subr.bf16.mxu0 0
  %4670 = vmatpush1.bf16.msra.mxu0 0
  %4671 = vmatprep.subr.bf16.mxu0 0
  %4672 = vmatpush1.bf16.msra.mxu0 0
  %4673 = vmatprep.subr.bf16.mxu0 0
  %4674 = vmatpush1.bf16.msra.mxu0 0
  %4675 = vmatprep.subr.bf16.mxu0 0
  %4676 = vmatpush1.bf16.msra.mxu0 0
  %4677 = vmatprep.subr.bf16.mxu0 0
  %4678 = vmatpush1.bf16.msra.mxu0 0
  %4679 = vmatprep.subr.bf16.mxu0 0
  %4680 = vmatpush1.bf16.msra.mxu0 0
  %4681 = vmatprep.subr.bf16.mxu0 0
  %4682 = vmatpush1.bf16.msra.mxu0 0
  %4683 = vmatprep.subr.bf16.mxu0 0
  %4684 = vmatpush1.bf16.msra.mxu0 0
  %4685 = vmatprep.subr.bf16.mxu0 0
  %4686 = vmatpush1.bf16.msra.mxu0 0
  %4687 = vmatprep.subr.bf16.mxu0 0
  %4688 = vmatpush1.bf16.msra.mxu0 0
  %4689 = vmatprep.subr.bf16.mxu0 0
  %4690 = vmatpush1.bf16.msra.mxu0 0
  %4691 = vmatprep.subr.bf16.mxu0 0
  %4692 = vmatpush1.bf16.msra.mxu0 0
  %4693 = vmatprep.subr.bf16.mxu0 0
  %4694 = vmatpush1.bf16.msra.mxu0 0
  %4695 = vmatprep.subr.bf16.mxu0 0
  %4696 = vmatpush1.bf16.msra.mxu0 0
  %4697 = vmatprep.mubr.bf16.mxu0 0
  %4698 = vmatmul.mubr.bf16.gmra.mrb[0].mxu0 %v4660
  %v4699 = vpop.f32.mrb[0].mxu0
  %v4700 = vadd.f32 0.0, %v4699
  %v4701 = vpop.f32.mrb[0].mxu0
  %v4702 = vpop.f32.mrb[0].mxu0
  %v4703 = vpop.f32.mrb[0].mxu0
  %4704 = vdwg.mxu0
  %v4709 = vunpack.c.l.b16 %v2812
  %v4710 = vunpack.c.l.b16 %v2813
  %v4711 = vunpack.c.l.b16 %v2814
  %v4712 = vunpack.c.l.b16 %v2815
  %v4713 = vpack.c.b16 %v4710, %v4709
  %v4714 = vpack.c.b16 %v4712, %v4711
  %v4717 = vsel %vm1197, %v2667, 0
  %v4720 = vsel %vm2894, %v4714, 0
  %4722 = vmatprep.subr.bf16.mxu0 0
  %4723 = vmatpush1.bf16.msra.mxu0 %v4713
  %4724 = vmatprep.subr.bf16.mxu0 0
  %4725 = vmatpush1.bf16.msra.mxu0 %v4720
  %4726 = vmatprep.subr.bf16.mxu0 0
  %4727 = vmatpush1.bf16.msra.mxu0 0
  %4728 = vmatprep.subr.bf16.mxu0 0
  %4729 = vmatpush1.bf16.msra.mxu0 0
  %4730 = vmatprep.subr.bf16.mxu0 0
  %4731 = vmatpush1.bf16.msra.mxu0 0
  %4732 = vmatprep.subr.bf16.mxu0 0
  %4733 = vmatpush1.bf16.msra.mxu0 0
  %4734 = vmatprep.subr.bf16.mxu0 0
  %4735 = vmatpush1.bf16.msra.mxu0 0
  %4736 = vmatprep.subr.bf16.mxu0 0
  %4737 = vmatpush1.bf16.msra.mxu0 0
  %4738 = vmatprep.subr.bf16.mxu0 0
  %4739 = vmatpush1.bf16.msra.mxu0 0
  %4740 = vmatprep.subr.bf16.mxu0 0
  %4741 = vmatpush1.bf16.msra.mxu0 0
  %4742 = vmatprep.subr.bf16.mxu0 0
  %4743 = vmatpush1.bf16.msra.mxu0 0
  %4744 = vmatprep.subr.bf16.mxu0 0
  %4745 = vmatpush1.bf16.msra.mxu0 0
  %4746 = vmatprep.subr.bf16.mxu0 0
  %4747 = vmatpush1.bf16.msra.mxu0 0
  %4748 = vmatprep.subr.bf16.mxu0 0
  %4749 = vmatpush1.bf16.msra.mxu0 0
  %4750 = vmatprep.subr.bf16.mxu0 0
  %4751 = vmatpush1.bf16.msra.mxu0 0
  %4752 = vmatprep.subr.bf16.mxu0 0
  %4753 = vmatpush1.bf16.msra.mxu0 0
  %4754 = vmatprep.mubr.bf16.mxu0 0
  %4755 = vmatmul.mubr.bf16.gmra.mrb[0].mxu0 %v4717
  %v4756 = vpop.f32.mrb[0].mxu0
  %v4757 = vadd.f32 0.0, %v4756
  %v4758 = vpop.f32.mrb[0].mxu0
  %v4759 = vpop.f32.mrb[0].mxu0
  %v4760 = vpop.f32.mrb[0].mxu0
  %4761 = vdwg.mxu0
  %v4766 = vunpack.c.l.b16 %v2816
  %v4767 = vunpack.c.l.b16 %v2817
  %v4768 = vunpack.c.l.b16 %v2818
  %v4769 = vunpack.c.l.b16 %v2819
  %v4770 = vpack.c.b16 %v4767, %v4766
  %v4771 = vpack.c.b16 %v4769, %v4768
  %v4774 = vsel %vm1197, %v2668, 0
  %v4777 = vsel %vm2894, %v4771, 0
  %4779 = vmatprep.subr.bf16.mxu0 0
  %4780 = vmatpush1.bf16.msra.mxu0 %v4770
  %4781 = vmatprep.subr.bf16.mxu0 0
  %4782 = vmatpush1.bf16.msra.mxu0 %v4777
  %4783 = vmatprep.subr.bf16.mxu0 0
  %4784 = vmatpush1.bf16.msra.mxu0 0
  %4785 = vmatprep.subr.bf16.mxu0 0
  %4786 = vmatpush1.bf16.msra.mxu0 0
  %4787 = vmatprep.subr.bf16.mxu0 0
  %4788 = vmatpush1.bf16.msra.mxu0 0
  %4789 = vmatprep.subr.bf16.mxu0 0
  %4790 = vmatpush1.bf16.msra.mxu0 0
  %4791 = vmatprep.subr.bf16.mxu0 0
  %4792 = vmatpush1.bf16.msra.mxu0 0
  %4793 = vmatprep.subr.bf16.mxu0 0
  %4794 = vmatpush1.bf16.msra.mxu0 0
  %4795 = vmatprep.subr.bf16.mxu0 0
  %4796 = vmatpush1.bf16.msra.mxu0 0
  %4797 = vmatprep.subr.bf16.mxu0 0
  %4798 = vmatpush1.bf16.msra.mxu0 0
  %4799 = vmatprep.subr.bf16.mxu0 0
  %4800 = vmatpush1.bf16.msra.mxu0 0
  %4801 = vmatprep.subr.bf16.mxu0 0
  %4802 = vmatpush1.bf16.msra.mxu0 0
  %4803 = vmatprep.subr.bf16.mxu0 0
  %4804 = vmatpush1.bf16.msra.mxu0 0
  %4805 = vmatprep.subr.bf16.mxu0 0
  %4806 = vmatpush1.bf16.msra.mxu0 0
  %4807 = vmatprep.subr.bf16.mxu0 0
  %4808 = vmatpush1.bf16.msra.mxu0 0
  %4809 = vmatprep.subr.bf16.mxu0 0
  %4810 = vmatpush1.bf16.msra.mxu0 0
  %4811 = vmatprep.mubr.bf16.mxu0 0
  %4812 = vmatmul.mubr.bf16.gmra.mrb[0].mxu0 %v4774
  %v4813 = vpop.f32.mrb[0].mxu0
  %v4814 = vadd.f32 0.0, %v4813
  %v4815 = vpop.f32.mrb[0].mxu0
  %v4816 = vpop.f32.mrb[0].mxu0
  %v4817 = vpop.f32.mrb[0].mxu0
  %4818 = vdwg.mxu0
  %v4823 = vunpack.c.l.b16 %v2820
  %v4824 = vunpack.c.l.b16 %v2821
  %v4825 = vunpack.c.l.b16 %v2822
  %v4826 = vunpack.c.l.b16 %v2823
  %v4827 = vpack.c.b16 %v4824, %v4823
  %v4828 = vpack.c.b16 %v4826, %v4825
  %v4831 = vsel %vm1197, %v2669, 0
  %v4834 = vsel %vm2894, %v4828, 0
  %4836 = vmatprep.subr.bf16.mxu0 0
  %4837 = vmatpush1.bf16.msra.mxu0 %v4827
  %4838 = vmatprep.subr.bf16.mxu0 0
  %4839 = vmatpush1.bf16.msra.mxu0 %v4834
  %4840 = vmatprep.subr.bf16.mxu0 0
  %4841 = vmatpush1.bf16.msra.mxu0 0
  %4842 = vmatprep.subr.bf16.mxu0 0
  %4843 = vmatpush1.bf16.msra.mxu0 0
  %4844 = vmatprep.subr.bf16.mxu0 0
  %4845 = vmatpush1.bf16.msra.mxu0 0
  %4846 = vmatprep.subr.bf16.mxu0 0
  %4847 = vmatpush1.bf16.msra.mxu0 0
  %4848 = vmatprep.subr.bf16.mxu0 0
  %4849 = vmatpush1.bf16.msra.mxu0 0
  %4850 = vmatprep.subr.bf16.mxu0 0
  %4851 = vmatpush1.bf16.msra.mxu0 0
  %4852 = vmatprep.subr.bf16.mxu0 0
  %4853 = vmatpush1.bf16.msra.mxu0 0
  %4854 = vmatprep.subr.bf16.mxu0 0
  %4855 = vmatpush1.bf16.msra.mxu0 0
  %4856 = vmatprep.subr.bf16.mxu0 0
  %4857 = vmatpush1.bf16.msra.mxu0 0
  %4858 = vmatprep.subr.bf16.mxu0 0
  %4859 = vmatpush1.bf16.msra.mxu0 0
  %4860 = vmatprep.subr.bf16.mxu0 0
  %4861 = vmatpush1.bf16.msra.mxu0 0
  %4862 = vmatprep.subr.bf16.mxu0 0
  %4863 = vmatpush1.bf16.msra.mxu0 0
  %4864 = vmatprep.subr.bf16.mxu0 0
  %4865 = vmatpush1.bf16.msra.mxu0 0
  %4866 = vmatprep.subr.bf16.mxu0 0
  %4867 = vmatpush1.bf16.msra.mxu0 0
  %4868 = vmatprep.mubr.bf16.mxu0 0
  %4869 = vmatmul.mubr.bf16.gmra.mrb[0].mxu0 %v4831
  %v4870 = vpop.f32.mrb[0].mxu0
  %v4871 = vadd.f32 0.0, %v4870
  %v4872 = vpop.f32.mrb[0].mxu0
  %v4873 = vpop.f32.mrb[0].mxu0
  %v4874 = vpop.f32.mrb[0].mxu0
  %4875 = vdwg.mxu0
  %v4880 = vunpack.c.l.b16 %v2824
  %v4881 = vunpack.c.l.b16 %v2825
  %v4882 = vunpack.c.l.b16 %v2826
  %v4883 = vunpack.c.l.b16 %v2827
  %v4884 = vpack.c.b16 %v4881, %v4880
  %v4885 = vpack.c.b16 %v4883, %v4882
  %v4888 = vsel %vm1197, %v2670, 0
  %v4891 = vsel %vm2894, %v4885, 0
  %4893 = vmatprep.subr.bf16.mxu0 0
  %4894 = vmatpush1.bf16.msra.mxu0 %v4884
  %4895 = vmatprep.subr.bf16.mxu0 0
  %4896 = vmatpush1.bf16.msra.mxu0 %v4891
  %4897 = vmatprep.subr.bf16.mxu0 0
  %4898 = vmatpush1.bf16.msra.mxu0 0
  %4899 = vmatprep.subr.bf16.mxu0 0
  %4900 = vmatpush1.bf16.msra.mxu0 0
  %4901 = vmatprep.subr.bf16.mxu0 0
  %4902 = vmatpush1.bf16.msra.mxu0 0
  %4903 = vmatprep.subr.bf16.mxu0 0
  %4904 = vmatpush1.bf16.msra.mxu0 0
  %4905 = vmatprep.subr.bf16.mxu0 0
  %4906 = vmatpush1.bf16.msra.mxu0 0
  %4907 = vmatprep.subr.bf16.mxu0 0
  %4908 = vmatpush1.bf16.msra.mxu0 0
  %4909 = vmatprep.subr.bf16.mxu0 0
  %4910 = vmatpush1.bf16.msra.mxu0 0
  %4911 = vmatprep.subr.bf16.mxu0 0
  %4912 = vmatpush1.bf16.msra.mxu0 0
  %4913 = vmatprep.subr.bf16.mxu0 0
  %4914 = vmatpush1.bf16.msra.mxu0 0
  %4915 = vmatprep.subr.bf16.mxu0 0
  %4916 = vmatpush1.bf16.msra.mxu0 0
  %4917 = vmatprep.subr.bf16.mxu0 0
  %4918 = vmatpush1.bf16.msra.mxu0 0
  %4919 = vmatprep.subr.bf16.mxu0 0
  %4920 = vmatpush1.bf16.msra.mxu0 0
  %4921 = vmatprep.subr.bf16.mxu0 0
  %4922 = vmatpush1.bf16.msra.mxu0 0
  %4923 = vmatprep.subr.bf16.mxu0 0
  %4924 = vmatpush1.bf16.msra.mxu0 0
  %4925 = vmatprep.mubr.bf16.mxu0 0
  %4926 = vmatmul.mubr.bf16.gmra.mrb[0].mxu0 %v4888
  %v4927 = vpop.f32.mrb[0].mxu0
  %v4928 = vadd.f32 0.0, %v4927
  %v4929 = vpop.f32.mrb[0].mxu0
  %v4930 = vpop.f32.mrb[0].mxu0
  %v4931 = vpop.f32.mrb[0].mxu0
  %4932 = vdwg.mxu0
  %v4937 = vunpack.c.l.b16 %v2828
  %v4938 = vunpack.c.l.b16 %v2829
  %v4939 = vunpack.c.l.b16 %v2830
  %v4940 = vunpack.c.l.b16 %v2831
  %v4941 = vpack.c.b16 %v4938, %v4937
  %v4942 = vpack.c.b16 %v4940, %v4939
  %v4945 = vsel %vm1197, %v2671, 0
  %v4948 = vsel %vm2894, %v4942, 0
  %4950 = vmatprep.subr.bf16.mxu0 0
  %4951 = vmatpush1.bf16.msra.mxu0 %v4941
  %4952 = vmatprep.subr.bf16.mxu0 0
  %4953 = vmatpush1.bf16.msra.mxu0 %v4948
  %4954 = vmatprep.subr.bf16.mxu0 0
  %4955 = vmatpush1.bf16.msra.mxu0 0
  %4956 = vmatprep.subr.bf16.mxu0 0
  %4957 = vmatpush1.bf16.msra.mxu0 0
  %4958 = vmatprep.subr.bf16.mxu0 0
  %4959 = vmatpush1.bf16.msra.mxu0 0
  %4960 = vmatprep.subr.bf16.mxu0 0
  %4961 = vmatpush1.bf16.msra.mxu0 0
  %4962 = vmatprep.subr.bf16.mxu0 0
  %4963 = vmatpush1.bf16.msra.mxu0 0
  %4964 = vmatprep.subr.bf16.mxu0 0
  %4965 = vmatpush1.bf16.msra.mxu0 0
  %4966 = vmatprep.subr.bf16.mxu0 0
  %4967 = vmatpush1.bf16.msra.mxu0 0
  %4968 = vmatprep.subr.bf16.mxu0 0
  %4969 = vmatpush1.bf16.msra.mxu0 0
  %4970 = vmatprep.subr.bf16.mxu0 0
  %4971 = vmatpush1.bf16.msra.mxu0 0
  %4972 = vmatprep.subr.bf16.mxu0 0
  %4973 = vmatpush1.bf16.msra.mxu0 0
  %4974 = vmatprep.subr.bf16.mxu0 0
  %4975 = vmatpush1.bf16.msra.mxu0 0
  %4976 = vmatprep.subr.bf16.mxu0 0
  %4977 = vmatpush1.bf16.msra.mxu0 0
  %4978 = vmatprep.subr.bf16.mxu0 0
  %4979 = vmatpush1.bf16.msra.mxu0 0
  %4980 = vmatprep.subr.bf16.mxu0 0
  %4981 = vmatpush1.bf16.msra.mxu0 0
  %4982 = vmatprep.mubr.bf16.mxu0 0
  %4983 = vmatmul.mubr.bf16.gmra.mrb[0].mxu0 %v4945
  %v4984 = vpop.f32.mrb[0].mxu0
  %v4985 = vadd.f32 0.0, %v4984
  %v4986 = vpop.f32.mrb[0].mxu0
  %v4987 = vpop.f32.mrb[0].mxu0
  %v4988 = vpop.f32.mrb[0].mxu0
  %4989 = vdwg.mxu0
  %v4994 = vunpack.c.l.b16 %v2832
  %v4995 = vunpack.c.l.b16 %v2833
  %v4996 = vunpack.c.l.b16 %v2834
  %v4997 = vunpack.c.l.b16 %v2835
  %v4998 = vpack.c.b16 %v4995, %v4994
  %v4999 = vpack.c.b16 %v4997, %v4996
  %v5002 = vsel %vm1197, %v2672, 0
  %v5005 = vsel %vm2894, %v4999, 0
  %5007 = vmatprep.subr.bf16.mxu0 0
  %5008 = vmatpush1.bf16.msra.mxu0 %v4998
  %5009 = vmatprep.subr.bf16.mxu0 0
  %5010 = vmatpush1.bf16.msra.mxu0 %v5005
  %5011 = vmatprep.subr.bf16.mxu0 0
  %5012 = vmatpush1.bf16.msra.mxu0 0
  %5013 = vmatprep.subr.bf16.mxu0 0
  %5014 = vmatpush1.bf16.msra.mxu0 0
  %5015 = vmatprep.subr.bf16.mxu0 0
  %5016 = vmatpush1.bf16.msra.mxu0 0
  %5017 = vmatprep.subr.bf16.mxu0 0
  %5018 = vmatpush1.bf16.msra.mxu0 0
  %5019 = vmatprep.subr.bf16.mxu0 0
  %5020 = vmatpush1.bf16.msra.mxu0 0
  %5021 = vmatprep.subr.bf16.mxu0 0
  %5022 = vmatpush1.bf16.msra.mxu0 0
  %5023 = vmatprep.subr.bf16.mxu0 0
  %5024 = vmatpush1.bf16.msra.mxu0 0
  %5025 = vmatprep.subr.bf16.mxu0 0
  %5026 = vmatpush1.bf16.msra.mxu0 0
  %5027 = vmatprep.subr.bf16.mxu0 0
  %5028 = vmatpush1.bf16.msra.mxu0 0
  %5029 = vmatprep.subr.bf16.mxu0 0
  %5030 = vmatpush1.bf16.msra.mxu0 0
  %5031 = vmatprep.subr.bf16.mxu0 0
  %5032 = vmatpush1.bf16.msra.mxu0 0
  %5033 = vmatprep.subr.bf16.mxu0 0
  %5034 = vmatpush1.bf16.msra.mxu0 0
  %5035 = vmatprep.subr.bf16.mxu0 0
  %5036 = vmatpush1.bf16.msra.mxu0 0
  %5037 = vmatprep.subr.bf16.mxu0 0
  %5038 = vmatpush1.bf16.msra.mxu0 0
  %5039 = vmatprep.mubr.bf16.mxu0 0
  %5040 = vmatmul.mubr.bf16.gmra.mrb[0].mxu0 %v5002
  %v5041 = vpop.f32.mrb[0].mxu0
  %v5042 = vadd.f32 0.0, %v5041
  %v5043 = vpop.f32.mrb[0].mxu0
  %v5044 = vpop.f32.mrb[0].mxu0
  %v5045 = vpop.f32.mrb[0].mxu0
  %5046 = vdwg.mxu0
  %v5051 = vunpack.c.l.b16 %v2836
  %v5052 = vunpack.c.l.b16 %v2837
  %v5053 = vunpack.c.l.b16 %v2838
  %v5054 = vunpack.c.l.b16 %v2839
  %v5055 = vpack.c.b16 %v5052, %v5051
  %v5056 = vpack.c.b16 %v5054, %v5053
  %v5059 = vsel %vm1197, %v2673, 0
  %v5062 = vsel %vm2894, %v5056, 0
  %5064 = vmatprep.subr.bf16.mxu0 0
  %5065 = vmatpush1.bf16.msra.mxu0 %v5055
  %5066 = vmatprep.subr.bf16.mxu0 0
  %5067 = vmatpush1.bf16.msra.mxu0 %v5062
  %5068 = vmatprep.subr.bf16.mxu0 0
  %5069 = vmatpush1.bf16.msra.mxu0 0
  %5070 = vmatprep.subr.bf16.mxu0 0
  %5071 = vmatpush1.bf16.msra.mxu0 0
  %5072 = vmatprep.subr.bf16.mxu0 0
  %5073 = vmatpush1.bf16.msra.mxu0 0
  %5074 = vmatprep.subr.bf16.mxu0 0
  %5075 = vmatpush1.bf16.msra.mxu0 0
  %5076 = vmatprep.subr.bf16.mxu0 0
  %5077 = vmatpush1.bf16.msra.mxu0 0
  %5078 = vmatprep.subr.bf16.mxu0 0
  %5079 = vmatpush1.bf16.msra.mxu0 0
  %5080 = vmatprep.subr.bf16.mxu0 0
  %5081 = vmatpush1.bf16.msra.mxu0 0
  %5082 = vmatprep.subr.bf16.mxu0 0
  %5083 = vmatpush1.bf16.msra.mxu0 0
  %5084 = vmatprep.subr.bf16.mxu0 0
  %5085 = vmatpush1.bf16.msra.mxu0 0
  %5086 = vmatprep.subr.bf16.mxu0 0
  %5087 = vmatpush1.bf16.msra.mxu0 0
  %5088 = vmatprep.subr.bf16.mxu0 0
  %5089 = vmatpush1.bf16.msra.mxu0 0
  %5090 = vmatprep.subr.bf16.mxu0 0
  %5091 = vmatpush1.bf16.msra.mxu0 0
  %5092 = vmatprep.subr.bf16.mxu0 0
  %5093 = vmatpush1.bf16.msra.mxu0 0
  %5094 = vmatprep.subr.bf16.mxu0 0
  %5095 = vmatpush1.bf16.msra.mxu0 0
  %5096 = vmatprep.mubr.bf16.mxu0 0
  %5097 = vmatmul.mubr.bf16.gmra.mrb[0].mxu0 %v5059
  %v5098 = vpop.f32.mrb[0].mxu0
  %v5099 = vadd.f32 0.0, %v5098
  %v5100 = vpop.f32.mrb[0].mxu0
  %v5101 = vpop.f32.mrb[0].mxu0
  %v5102 = vpop.f32.mrb[0].mxu0
  %5103 = vdwg.mxu0
  %v5108 = vunpack.c.l.b16 %v2840
  %v5109 = vunpack.c.l.b16 %v2841
  %v5110 = vunpack.c.l.b16 %v2842
  %v5111 = vunpack.c.l.b16 %v2843
  %v5112 = vpack.c.b16 %v5109, %v5108
  %v5113 = vpack.c.b16 %v5111, %v5110
  %v5116 = vsel %vm1197, %v2674, 0
  %v5119 = vsel %vm2894, %v5113, 0
  %5121 = vmatprep.subr.bf16.mxu0 0
  %5122 = vmatpush1.bf16.msra.mxu0 %v5112
  %5123 = vmatprep.subr.bf16.mxu0 0
  %5124 = vmatpush1.bf16.msra.mxu0 %v5119
  %5125 = vmatprep.subr.bf16.mxu0 0
  %5126 = vmatpush1.bf16.msra.mxu0 0
  %5127 = vmatprep.subr.bf16.mxu0 0
  %5128 = vmatpush1.bf16.msra.mxu0 0
  %5129 = vmatprep.subr.bf16.mxu0 0
  %5130 = vmatpush1.bf16.msra.mxu0 0
  %5131 = vmatprep.subr.bf16.mxu0 0
  %5132 = vmatpush1.bf16.msra.mxu0 0
  %5133 = vmatprep.subr.bf16.mxu0 0
  %5134 = vmatpush1.bf16.msra.mxu0 0
  %5135 = vmatprep.subr.bf16.mxu0 0
  %5136 = vmatpush1.bf16.msra.mxu0 0
  %5137 = vmatprep.subr.bf16.mxu0 0
  %5138 = vmatpush1.bf16.msra.mxu0 0
  %5139 = vmatprep.subr.bf16.mxu0 0
  %5140 = vmatpush1.bf16.msra.mxu0 0
  %5141 = vmatprep.subr.bf16.mxu0 0
  %5142 = vmatpush1.bf16.msra.mxu0 0
  %5143 = vmatprep.subr.bf16.mxu0 0
  %5144 = vmatpush1.bf16.msra.mxu0 0
  %5145 = vmatprep.subr.bf16.mxu0 0
  %5146 = vmatpush1.bf16.msra.mxu0 0
  %5147 = vmatprep.subr.bf16.mxu0 0
  %5148 = vmatpush1.bf16.msra.mxu0 0
  %5149 = vmatprep.subr.bf16.mxu0 0
  %5150 = vmatpush1.bf16.msra.mxu0 0
  %5151 = vmatprep.subr.bf16.mxu0 0
  %5152 = vmatpush1.bf16.msra.mxu0 0
  %5153 = vmatprep.mubr.bf16.mxu0 0
  %5154 = vmatmul.mubr.bf16.gmra.mrb[0].mxu0 %v5116
  %v5155 = vpop.f32.mrb[0].mxu0
  %v5156 = vadd.f32 0.0, %v5155
  %v5157 = vpop.f32.mrb[0].mxu0
  %v5158 = vpop.f32.mrb[0].mxu0
  %v5159 = vpop.f32.mrb[0].mxu0
  %5160 = vdwg.mxu0
  %v5165 = vunpack.c.l.b16 %v2844
  %v5166 = vunpack.c.l.b16 %v2845
  %v5167 = vunpack.c.l.b16 %v2846
  %v5168 = vunpack.c.l.b16 %v2847
  %v5169 = vpack.c.b16 %v5166, %v5165
  %v5170 = vpack.c.b16 %v5168, %v5167
  %v5173 = vsel %vm1197, %v2675, 0
  %v5176 = vsel %vm2894, %v5170, 0
  %5178 = vmatprep.subr.bf16.mxu0 0
  %5179 = vmatpush1.bf16.msra.mxu0 %v5169
  %5180 = vmatprep.subr.bf16.mxu0 0
  %5181 = vmatpush1.bf16.msra.mxu0 %v5176
  %5182 = vmatprep.subr.bf16.mxu0 0
  %5183 = vmatpush1.bf16.msra.mxu0 0
  %5184 = vmatprep.subr.bf16.mxu0 0
  %5185 = vmatpush1.bf16.msra.mxu0 0
  %5186 = vmatprep.subr.bf16.mxu0 0
  %5187 = vmatpush1.bf16.msra.mxu0 0
  %5188 = vmatprep.subr.bf16.mxu0 0
  %5189 = vmatpush1.bf16.msra.mxu0 0
  %5190 = vmatprep.subr.bf16.mxu0 0
  %5191 = vmatpush1.bf16.msra.mxu0 0
  %5192 = vmatprep.subr.bf16.mxu0 0
  %5193 = vmatpush1.bf16.msra.mxu0 0
  %5194 = vmatprep.subr.bf16.mxu0 0
  %5195 = vmatpush1.bf16.msra.mxu0 0
  %5196 = vmatprep.subr.bf16.mxu0 0
  %5197 = vmatpush1.bf16.msra.mxu0 0
  %5198 = vmatprep.subr.bf16.mxu0 0
  %5199 = vmatpush1.bf16.msra.mxu0 0
  %5200 = vmatprep.subr.bf16.mxu0 0
  %5201 = vmatpush1.bf16.msra.mxu0 0
  %5202 = vmatprep.subr.bf16.mxu0 0
  %5203 = vmatpush1.bf16.msra.mxu0 0
  %5204 = vmatprep.subr.bf16.mxu0 0
  %5205 = vmatpush1.bf16.msra.mxu0 0
  %5206 = vmatprep.subr.bf16.mxu0 0
  %5207 = vmatpush1.bf16.msra.mxu0 0
  %5208 = vmatprep.subr.bf16.mxu0 0
  %5209 = vmatpush1.bf16.msra.mxu0 0
  %5210 = vmatprep.mubr.bf16.mxu0 0
  %5211 = vmatmul.mubr.bf16.gmra.mrb[0].mxu0 %v5173
  %v5212 = vpop.f32.mrb[0].mxu0
  %v5213 = vadd.f32 0.0, %v5212
  %v5214 = vpop.f32.mrb[0].mxu0
  %v5215 = vpop.f32.mrb[0].mxu0
  %v5216 = vpop.f32.mrb[0].mxu0
  %5217 = vdwg.mxu0
  %v5222 = vunpack.c.l.b16 %v2848
  %v5223 = vunpack.c.l.b16 %v2849
  %v5224 = vunpack.c.l.b16 %v2850
  %v5225 = vunpack.c.l.b16 %v2851
  %v5226 = vpack.c.b16 %v5223, %v5222
  %v5227 = vpack.c.b16 %v5225, %v5224
  %v5230 = vsel %vm1197, %v2676, 0
  %v5233 = vsel %vm2894, %v5227, 0
  %5235 = vmatprep.subr.bf16.mxu0 0
  %5236 = vmatpush1.bf16.msra.mxu0 %v5226
  %5237 = vmatprep.subr.bf16.mxu0 0
  %5238 = vmatpush1.bf16.msra.mxu0 %v5233
  %5239 = vmatprep.subr.bf16.mxu0 0
  %5240 = vmatpush1.bf16.msra.mxu0 0
  %5241 = vmatprep.subr.bf16.mxu0 0
  %5242 = vmatpush1.bf16.msra.mxu0 0
  %5243 = vmatprep.subr.bf16.mxu0 0
  %5244 = vmatpush1.bf16.msra.mxu0 0
  %5245 = vmatprep.subr.bf16.mxu0 0
  %5246 = vmatpush1.bf16.msra.mxu0 0
  %5247 = vmatprep.subr.bf16.mxu0 0
  %5248 = vmatpush1.bf16.msra.mxu0 0
  %5249 = vmatprep.subr.bf16.mxu0 0
  %5250 = vmatpush1.bf16.msra.mxu0 0
  %5251 = vmatprep.subr.bf16.mxu0 0
  %5252 = vmatpush1.bf16.msra.mxu0 0
  %5253 = vmatprep.subr.bf16.mxu0 0
  %5254 = vmatpush1.bf16.msra.mxu0 0
  %5255 = vmatprep.subr.bf16.mxu0 0
  %5256 = vmatpush1.bf16.msra.mxu0 0
  %5257 = vmatprep.subr.bf16.mxu0 0
  %5258 = vmatpush1.bf16.msra.mxu0 0
  %5259 = vmatprep.subr.bf16.mxu0 0
  %5260 = vmatpush1.bf16.msra.mxu0 0
  %5261 = vmatprep.subr.bf16.mxu0 0
  %5262 = vmatpush1.bf16.msra.mxu0 0
  %5263 = vmatprep.subr.bf16.mxu0 0
  %5264 = vmatpush1.bf16.msra.mxu0 0
  %5265 = vmatprep.subr.bf16.mxu0 0
  %5266 = vmatpush1.bf16.msra.mxu0 0
  %5267 = vmatprep.mubr.bf16.mxu0 0
  %5268 = vmatmul.mubr.bf16.gmra.mrb[0].mxu0 %v5230
  %v5269 = vpop.f32.mrb[0].mxu0
  %v5270 = vadd.f32 0.0, %v5269
  %v5271 = vpop.f32.mrb[0].mxu0
  %v5272 = vpop.f32.mrb[0].mxu0
  %v5273 = vpop.f32.mrb[0].mxu0
  %5274 = vdwg.mxu0
  %v5279 = vunpack.c.l.b16 %v2852
  %v5280 = vunpack.c.l.b16 %v2853
  %v5281 = vunpack.c.l.b16 %v2854
  %v5282 = vunpack.c.l.b16 %v2855
  %v5283 = vpack.c.b16 %v5280, %v5279
  %v5284 = vpack.c.b16 %v5282, %v5281
  %v5287 = vsel %vm1197, %v2677, 0
  %v5290 = vsel %vm2894, %v5284, 0
  %5292 = vmatprep.subr.bf16.mxu0 0
  %5293 = vmatpush1.bf16.msra.mxu0 %v5283
  %5294 = vmatprep.subr.bf16.mxu0 0
  %5295 = vmatpush1.bf16.msra.mxu0 %v5290
  %5296 = vmatprep.subr.bf16.mxu0 0
  %5297 = vmatpush1.bf16.msra.mxu0 0
  %5298 = vmatprep.subr.bf16.mxu0 0
  %5299 = vmatpush1.bf16.msra.mxu0 0
  %5300 = vmatprep.subr.bf16.mxu0 0
  %5301 = vmatpush1.bf16.msra.mxu0 0
  %5302 = vmatprep.subr.bf16.mxu0 0
  %5303 = vmatpush1.bf16.msra.mxu0 0
  %5304 = vmatprep.subr.bf16.mxu0 0
  %5305 = vmatpush1.bf16.msra.mxu0 0
  %5306 = vmatprep.subr.bf16.mxu0 0
  %5307 = vmatpush1.bf16.msra.mxu0 0
  %5308 = vmatprep.subr.bf16.mxu0 0
  %5309 = vmatpush1.bf16.msra.mxu0 0
  %5310 = vmatprep.subr.bf16.mxu0 0
  %5311 = vmatpush1.bf16.msra.mxu0 0
  %5312 = vmatprep.subr.bf16.mxu0 0
  %5313 = vmatpush1.bf16.msra.mxu0 0
  %5314 = vmatprep.subr.bf16.mxu0 0
  %5315 = vmatpush1.bf16.msra.mxu0 0
  %5316 = vmatprep.subr.bf16.mxu0 0
  %5317 = vmatpush1.bf16.msra.mxu0 0
  %5318 = vmatprep.subr.bf16.mxu0 0
  %5319 = vmatpush1.bf16.msra.mxu0 0
  %5320 = vmatprep.subr.bf16.mxu0 0
  %5321 = vmatpush1.bf16.msra.mxu0 0
  %5322 = vmatprep.subr.bf16.mxu0 0
  %5323 = vmatpush1.bf16.msra.mxu0 0
  %5324 = vmatprep.mubr.bf16.mxu0 0
  %5325 = vmatmul.mubr.bf16.gmra.mrb[0].mxu0 %v5287
  %v5326 = vpop.f32.mrb[0].mxu0
  %v5327 = vadd.f32 0.0, %v5326
  %v5328 = vpop.f32.mrb[0].mxu0
  %v5329 = vpop.f32.mrb[0].mxu0
  %v5330 = vpop.f32.mrb[0].mxu0
  %5331 = vdwg.mxu0
  %v5336 = vunpack.c.l.b16 %v2856
  %v5337 = vunpack.c.l.b16 %v2857
  %v5338 = vunpack.c.l.b16 %v2858
  %v5339 = vunpack.c.l.b16 %v2859
  %v5340 = vpack.c.b16 %v5337, %v5336
  %v5341 = vpack.c.b16 %v5339, %v5338
  %v5344 = vsel %vm1197, %v2678, 0
  %v5347 = vsel %vm2894, %v5341, 0
  %5349 = vmatprep.subr.bf16.mxu0 0
  %5350 = vmatpush1.bf16.msra.mxu0 %v5340
  %5351 = vmatprep.subr.bf16.mxu0 0
  %5352 = vmatpush1.bf16.msra.mxu0 %v5347
  %5353 = vmatprep.subr.bf16.mxu0 0
  %5354 = vmatpush1.bf16.msra.mxu0 0
  %5355 = vmatprep.subr.bf16.mxu0 0
  %5356 = vmatpush1.bf16.msra.mxu0 0
  %5357 = vmatprep.subr.bf16.mxu0 0
  %5358 = vmatpush1.bf16.msra.mxu0 0
  %5359 = vmatprep.subr.bf16.mxu0 0
  %5360 = vmatpush1.bf16.msra.mxu0 0
  %5361 = vmatprep.subr.bf16.mxu0 0
  %5362 = vmatpush1.bf16.msra.mxu0 0
  %5363 = vmatprep.subr.bf16.mxu0 0
  %5364 = vmatpush1.bf16.msra.mxu0 0
  %5365 = vmatprep.subr.bf16.mxu0 0
  %5366 = vmatpush1.bf16.msra.mxu0 0
  %5367 = vmatprep.subr.bf16.mxu0 0
  %5368 = vmatpush1.bf16.msra.mxu0 0
  %5369 = vmatprep.subr.bf16.mxu0 0
  %5370 = vmatpush1.bf16.msra.mxu0 0
  %5371 = vmatprep.subr.bf16.mxu0 0
  %5372 = vmatpush1.bf16.msra.mxu0 0
  %5373 = vmatprep.subr.bf16.mxu0 0
  %5374 = vmatpush1.bf16.msra.mxu0 0
  %5375 = vmatprep.subr.bf16.mxu0 0
  %5376 = vmatpush1.bf16.msra.mxu0 0
  %5377 = vmatprep.subr.bf16.mxu0 0
  %5378 = vmatpush1.bf16.msra.mxu0 0
  %5379 = vmatprep.subr.bf16.mxu0 0
  %5380 = vmatpush1.bf16.msra.mxu0 0
  %5381 = vmatprep.mubr.bf16.mxu0 0
  %5382 = vmatmul.mubr.bf16.gmra.mrb[0].mxu0 %v5344
  %v5383 = vpop.f32.mrb[0].mxu0
  %v5384 = vadd.f32 0.0, %v5383
  %v5385 = vpop.f32.mrb[0].mxu0
  %v5386 = vpop.f32.mrb[0].mxu0
  %v5387 = vpop.f32.mrb[0].mxu0
  %5388 = vdwg.mxu0
  %v5393 = vunpack.c.l.b16 %v2860
  %v5394 = vunpack.c.l.b16 %v2861
  %v5395 = vunpack.c.l.b16 %v2862
  %v5396 = vunpack.c.l.b16 %v2863
  %v5397 = vpack.c.b16 %v5394, %v5393
  %v5398 = vpack.c.b16 %v5396, %v5395
  %v5401 = vsel %vm1197, %v2679, 0
  %v5404 = vsel %vm2894, %v5398, 0
  %5406 = vmatprep.subr.bf16.mxu0 0
  %5407 = vmatpush1.bf16.msra.mxu0 %v5397
  %5408 = vmatprep.subr.bf16.mxu0 0
  %5409 = vmatpush1.bf16.msra.mxu0 %v5404
  %5410 = vmatprep.subr.bf16.mxu0 0
  %5411 = vmatpush1.bf16.msra.mxu0 0
  %5412 = vmatprep.subr.bf16.mxu0 0
  %5413 = vmatpush1.bf16.msra.mxu0 0
  %5414 = vmatprep.subr.bf16.mxu0 0
  %5415 = vmatpush1.bf16.msra.mxu0 0
  %5416 = vmatprep.subr.bf16.mxu0 0
  %5417 = vmatpush1.bf16.msra.mxu0 0
  %5418 = vmatprep.subr.bf16.mxu0 0
  %5419 = vmatpush1.bf16.msra.mxu0 0
  %5420 = vmatprep.subr.bf16.mxu0 0
  %5421 = vmatpush1.bf16.msra.mxu0 0
  %5422 = vmatprep.subr.bf16.mxu0 0
  %5423 = vmatpush1.bf16.msra.mxu0 0
  %5424 = vmatprep.subr.bf16.mxu0 0
  %5425 = vmatpush1.bf16.msra.mxu0 0
  %5426 = vmatprep.subr.bf16.mxu0 0
  %5427 = vmatpush1.bf16.msra.mxu0 0
  %5428 = vmatprep.subr.bf16.mxu0 0
  %5429 = vmatpush1.bf16.msra.mxu0 0
  %5430 = vmatprep.subr.bf16.mxu0 0
  %5431 = vmatpush1.bf16.msra.mxu0 0
  %5432 = vmatprep.subr.bf16.mxu0 0
  %5433 = vmatpush1.bf16.msra.mxu0 0
  %5434 = vmatprep.subr.bf16.mxu0 0
  %5435 = vmatpush1.bf16.msra.mxu0 0
  %5436 = vmatprep.subr.bf16.mxu0 0
  %5437 = vmatpush1.bf16.msra.mxu0 0
  %5438 = vmatprep.mubr.bf16.mxu0 0
  %5439 = vmatmul.mubr.bf16.gmra.mrb[0].mxu0 %v5401
  %v5440 = vpop.f32.mrb[0].mxu0
  %v5441 = vadd.f32 0.0, %v5440
  %v5442 = vpop.f32.mrb[0].mxu0
  %v5443 = vpop.f32.mrb[0].mxu0
  %v5444 = vpop.f32.mrb[0].mxu0
  %5445 = vdwg.mxu0
  %v5450 = vunpack.c.l.b16 %v2864
  %v5451 = vunpack.c.l.b16 %v2865
  %v5452 = vunpack.c.l.b16 %v2866
  %v5453 = vunpack.c.l.b16 %v2867
  %v5454 = vpack.c.b16 %v5451, %v5450
  %v5455 = vpack.c.b16 %v5453, %v5452
  %v5458 = vsel %vm1197, %v2680, 0
  %v5461 = vsel %vm2894, %v5455, 0
  %5463 = vmatprep.subr.bf16.mxu0 0
  %5464 = vmatpush1.bf16.msra.mxu0 %v5454
  %5465 = vmatprep.subr.bf16.mxu0 0
  %5466 = vmatpush1.bf16.msra.mxu0 %v5461
  %5467 = vmatprep.subr.bf16.mxu0 0
  %5468 = vmatpush1.bf16.msra.mxu0 0
  %5469 = vmatprep.subr.bf16.mxu0 0
  %5470 = vmatpush1.bf16.msra.mxu0 0
  %5471 = vmatprep.subr.bf16.mxu0 0
  %5472 = vmatpush1.bf16.msra.mxu0 0
  %5473 = vmatprep.subr.bf16.mxu0 0
  %5474 = vmatpush1.bf16.msra.mxu0 0
  %5475 = vmatprep.subr.bf16.mxu0 0
  %5476 = vmatpush1.bf16.msra.mxu0 0
  %5477 = vmatprep.subr.bf16.mxu0 0
  %5478 = vmatpush1.bf16.msra.mxu0 0
  %5479 = vmatprep.subr.bf16.mxu0 0
  %5480 = vmatpush1.bf16.msra.mxu0 0
  %5481 = vmatprep.subr.bf16.mxu0 0
  %5482 = vmatpush1.bf16.msra.mxu0 0
  %5483 = vmatprep.subr.bf16.mxu0 0
  %5484 = vmatpush1.bf16.msra.mxu0 0
  %5485 = vmatprep.subr.bf16.mxu0 0
  %5486 = vmatpush1.bf16.msra.mxu0 0
  %5487 = vmatprep.subr.bf16.mxu0 0
  %5488 = vmatpush1.bf16.msra.mxu0 0
  %5489 = vmatprep.subr.bf16.mxu0 0
  %5490 = vmatpush1.bf16.msra.mxu0 0
  %5491 = vmatprep.subr.bf16.mxu0 0
  %5492 = vmatpush1.bf16.msra.mxu0 0
  %5493 = vmatprep.subr.bf16.mxu0 0
  %5494 = vmatpush1.bf16.msra.mxu0 0
  %5495 = vmatprep.mubr.bf16.mxu0 0
  %5496 = vmatmul.mubr.bf16.gmra.mrb[0].mxu0 %v5458
  %v5497 = vpop.f32.mrb[0].mxu0
  %v5498 = vadd.f32 0.0, %v5497
  %v5499 = vpop.f32.mrb[0].mxu0
  %v5500 = vpop.f32.mrb[0].mxu0
  %v5501 = vpop.f32.mrb[0].mxu0
  %5502 = vdwg.mxu0
  %v5507 = vunpack.c.l.b16 %v2868
  %v5508 = vunpack.c.l.b16 %v2869
  %v5509 = vunpack.c.l.b16 %v2870
  %v5510 = vunpack.c.l.b16 %v2871
  %v5511 = vpack.c.b16 %v5508, %v5507
  %v5512 = vpack.c.b16 %v5510, %v5509
  %v5515 = vsel %vm1197, %v2681, 0
  %v5518 = vsel %vm2894, %v5512, 0
  %5520 = vmatprep.subr.bf16.mxu0 0
  %5521 = vmatpush1.bf16.msra.mxu0 %v5511
  %5522 = vmatprep.subr.bf16.mxu0 0
  %5523 = vmatpush1.bf16.msra.mxu0 %v5518
  %5524 = vmatprep.subr.bf16.mxu0 0
  %5525 = vmatpush1.bf16.msra.mxu0 0
  %5526 = vmatprep.subr.bf16.mxu0 0
  %5527 = vmatpush1.bf16.msra.mxu0 0
  %5528 = vmatprep.subr.bf16.mxu0 0
  %5529 = vmatpush1.bf16.msra.mxu0 0
  %5530 = vmatprep.subr.bf16.mxu0 0
  %5531 = vmatpush1.bf16.msra.mxu0 0
  %5532 = vmatprep.subr.bf16.mxu0 0
  %5533 = vmatpush1.bf16.msra.mxu0 0
  %5534 = vmatprep.subr.bf16.mxu0 0
  %5535 = vmatpush1.bf16.msra.mxu0 0
  %5536 = vmatprep.subr.bf16.mxu0 0
  %5537 = vmatpush1.bf16.msra.mxu0 0
  %5538 = vmatprep.subr.bf16.mxu0 0
  %5539 = vmatpush1.bf16.msra.mxu0 0
  %5540 = vmatprep.subr.bf16.mxu0 0
  %5541 = vmatpush1.bf16.msra.mxu0 0
  %5542 = vmatprep.subr.bf16.mxu0 0
  %5543 = vmatpush1.bf16.msra.mxu0 0
  %5544 = vmatprep.subr.bf16.mxu0 0
  %5545 = vmatpush1.bf16.msra.mxu0 0
  %5546 = vmatprep.subr.bf16.mxu0 0
  %5547 = vmatpush1.bf16.msra.mxu0 0
  %5548 = vmatprep.subr.bf16.mxu0 0
  %5549 = vmatpush1.bf16.msra.mxu0 0
  %5550 = vmatprep.subr.bf16.mxu0 0
  %5551 = vmatpush1.bf16.msra.mxu0 0
  %5552 = vmatprep.mubr.bf16.mxu0 0
  %5553 = vmatmul.mubr.bf16.gmra.mrb[0].mxu0 %v5515
  %v5554 = vpop.f32.mrb[0].mxu0
  %v5555 = vadd.f32 0.0, %v5554
  %v5556 = vpop.f32.mrb[0].mxu0
  %v5557 = vpop.f32.mrb[0].mxu0
  %v5558 = vpop.f32.mrb[0].mxu0
  %5559 = vdwg.mxu0
  %v5564 = vunpack.c.l.b16 %v2872
  %v5565 = vunpack.c.l.b16 %v2873
  %v5566 = vunpack.c.l.b16 %v2874
  %v5567 = vunpack.c.l.b16 %v2875
  %v5568 = vpack.c.b16 %v5565, %v5564
  %v5569 = vpack.c.b16 %v5567, %v5566
  %v5572 = vsel %vm1197, %v2682, 0
  %v5575 = vsel %vm2894, %v5569, 0
  %5577 = vmatprep.subr.bf16.mxu0 0
  %5578 = vmatpush1.bf16.msra.mxu0 %v5568
  %5579 = vmatprep.subr.bf16.mxu0 0
  %5580 = vmatpush1.bf16.msra.mxu0 %v5575
  %5581 = vmatprep.subr.bf16.mxu0 0
  %5582 = vmatpush1.bf16.msra.mxu0 0
  %5583 = vmatprep.subr.bf16.mxu0 0
  %5584 = vmatpush1.bf16.msra.mxu0 0
  %5585 = vmatprep.subr.bf16.mxu0 0
  %5586 = vmatpush1.bf16.msra.mxu0 0
  %5587 = vmatprep.subr.bf16.mxu0 0
  %5588 = vmatpush1.bf16.msra.mxu0 0
  %5589 = vmatprep.subr.bf16.mxu0 0
  %5590 = vmatpush1.bf16.msra.mxu0 0
  %5591 = vmatprep.subr.bf16.mxu0 0
  %5592 = vmatpush1.bf16.msra.mxu0 0
  %5593 = vmatprep.subr.bf16.mxu0 0
  %5594 = vmatpush1.bf16.msra.mxu0 0
  %5595 = vmatprep.subr.bf16.mxu0 0
  %5596 = vmatpush1.bf16.msra.mxu0 0
  %5597 = vmatprep.subr.bf16.mxu0 0
  %5598 = vmatpush1.bf16.msra.mxu0 0
  %5599 = vmatprep.subr.bf16.mxu0 0
  %5600 = vmatpush1.bf16.msra.mxu0 0
  %5601 = vmatprep.subr.bf16.mxu0 0
  %5602 = vmatpush1.bf16.msra.mxu0 0
  %5603 = vmatprep.subr.bf16.mxu0 0
  %5604 = vmatpush1.bf16.msra.mxu0 0
  %5605 = vmatprep.subr.bf16.mxu0 0
  %5606 = vmatpush1.bf16.msra.mxu0 0
  %5607 = vmatprep.subr.bf16.mxu0 0
  %5608 = vmatpush1.bf16.msra.mxu0 0
  %5609 = vmatprep.mubr.bf16.mxu0 0
  %5610 = vmatmul.mubr.bf16.gmra.mrb[0].mxu0 %v5572
  %v5611 = vpop.f32.mrb[0].mxu0
  %v5612 = vadd.f32 0.0, %v5611
  %v5613 = vpop.f32.mrb[0].mxu0
  %v5614 = vpop.f32.mrb[0].mxu0
  %v5615 = vpop.f32.mrb[0].mxu0
  %5616 = vdwg.mxu0
  %v5621 = vunpack.c.l.b16 %v2876
  %v5622 = vunpack.c.l.b16 %v2877
  %v5623 = vunpack.c.l.b16 %v2878
  %v5624 = vunpack.c.l.b16 %v2879
  %v5625 = vpack.c.b16 %v5622, %v5621
  %v5626 = vpack.c.b16 %v5624, %v5623
  %v5629 = vsel %vm1197, %v2683, 0
  %v5632 = vsel %vm2894, %v5626, 0
  %5634 = vmatprep.subr.bf16.mxu0 0
  %5635 = vmatpush1.bf16.msra.mxu0 %v5625
  %5636 = vmatprep.subr.bf16.mxu0 0
  %5637 = vmatpush1.bf16.msra.mxu0 %v5632
  %5638 = vmatprep.subr.bf16.mxu0 0
  %5639 = vmatpush1.bf16.msra.mxu0 0
  %5640 = vmatprep.subr.bf16.mxu0 0
  %5641 = vmatpush1.bf16.msra.mxu0 0
  %5642 = vmatprep.subr.bf16.mxu0 0
  %5643 = vmatpush1.bf16.msra.mxu0 0
  %5644 = vmatprep.subr.bf16.mxu0 0
  %5645 = vmatpush1.bf16.msra.mxu0 0
  %5646 = vmatprep.subr.bf16.mxu0 0
  %5647 = vmatpush1.bf16.msra.mxu0 0
  %5648 = vmatprep.subr.bf16.mxu0 0
  %5649 = vmatpush1.bf16.msra.mxu0 0
  %5650 = vmatprep.subr.bf16.mxu0 0
  %5651 = vmatpush1.bf16.msra.mxu0 0
  %5652 = vmatprep.subr.bf16.mxu0 0
  %5653 = vmatpush1.bf16.msra.mxu0 0
  %5654 = vmatprep.subr.bf16.mxu0 0
  %5655 = vmatpush1.bf16.msra.mxu0 0
  %5656 = vmatprep.subr.bf16.mxu0 0
  %5657 = vmatpush1.bf16.msra.mxu0 0
  %5658 = vmatprep.subr.bf16.mxu0 0
  %5659 = vmatpush1.bf16.msra.mxu0 0
  %5660 = vmatprep.subr.bf16.mxu0 0
  %5661 = vmatpush1.bf16.msra.mxu0 0
  %5662 = vmatprep.subr.bf16.mxu0 0
  %5663 = vmatpush1.bf16.msra.mxu0 0
  %5664 = vmatprep.subr.bf16.mxu0 0
  %5665 = vmatpush1.bf16.msra.mxu0 0
  %5666 = vmatprep.mubr.bf16.mxu0 0
  %5667 = vmatmul.mubr.bf16.gmra.mrb[0].mxu0 %v5629
  %v5668 = vpop.f32.mrb[0].mxu0
  %v5669 = vadd.f32 0.0, %v5668
  %v5670 = vpop.f32.mrb[0].mxu0
  %v5671 = vpop.f32.mrb[0].mxu0
  %v5672 = vpop.f32.mrb[0].mxu0
  %5673 = vdwg.mxu0
  %v5674 = vsel %vm267, %v2933, 0.0
  %v5675 = vsel %vm267, %v2990, 0.0
  %v5676 = vadd.f32 %v5674, %v5675
  %v5677 = vsel %vm267, %v3047, 0.0
  %v5678 = vadd.f32 %v5676, %v5677
  %v5679 = vsel %vm267, %v3104, 0.0
  %v5680 = vadd.f32 %v5678, %v5679
  %v5681 = vsel %vm267, %v3161, 0.0
  %v5682 = vadd.f32 %v5680, %v5681
  %v5683 = vsel %vm267, %v3218, 0.0
  %v5684 = vadd.f32 %v5682, %v5683
  %v5685 = vsel %vm267, %v3275, 0.0
  %v5686 = vadd.f32 %v5684, %v5685
  %v5687 = vsel %vm267, %v3332, 0.0
  %v5688 = vadd.f32 %v5686, %v5687
  %v5689 = vsel %vm267, %v3389, 0.0
  %v5690 = vadd.f32 %v5688, %v5689
  %v5691 = vsel %vm267, %v3446, 0.0
  %v5692 = vadd.f32 %v5690, %v5691
  %v5693 = vsel %vm267, %v3503, 0.0
  %v5694 = vadd.f32 %v5692, %v5693
  %v5695 = vsel %vm267, %v3560, 0.0
  %v5696 = vadd.f32 %v5694, %v5695
  %v5697 = vsel %vm267, %v3617, 0.0
  %v5698 = vadd.f32 %v5696, %v5697
  %v5699 = vsel %vm267, %v3674, 0.0
  %v5700 = vadd.f32 %v5698, %v5699
  %v5701 = vsel %vm267, %v3731, 0.0
  %v5702 = vadd.f32 %v5700, %v5701
  %v5703 = vsel %vm267, %v3788, 0.0
  %v5704 = vadd.f32 %v5702, %v5703
  %v5705 = vsel %vm267, %v3845, 0.0
  %v5706 = vadd.f32 %v5704, %v5705
  %v5707 = vsel %vm267, %v3902, 0.0
  %v5708 = vadd.f32 %v5706, %v5707
  %v5709 = vsel %vm267, %v3959, 0.0
  %v5710 = vadd.f32 %v5708, %v5709
  %v5711 = vsel %vm267, %v4016, 0.0
  %v5712 = vadd.f32 %v5710, %v5711
  %v5713 = vsel %vm267, %v4073, 0.0
  %v5714 = vadd.f32 %v5712, %v5713
  %v5715 = vsel %vm267, %v4130, 0.0
  %v5716 = vadd.f32 %v5714, %v5715
  %v5717 = vsel %vm267, %v4187, 0.0
  %v5718 = vadd.f32 %v5716, %v5717
  %v5719 = vsel %vm267, %v4244, 0.0
  %v5720 = vadd.f32 %v5718, %v5719
  %v5721 = vsel %vm267, %v4301, 0.0
  %v5722 = vadd.f32 %v5720, %v5721
  %v5723 = vsel %vm267, %v4358, 0.0
  %v5724 = vadd.f32 %v5722, %v5723
  %v5725 = vsel %vm267, %v4415, 0.0
  %v5726 = vadd.f32 %v5724, %v5725
  %v5727 = vsel %vm267, %v4472, 0.0
  %v5728 = vadd.f32 %v5726, %v5727
  %v5729 = vsel %vm267, %v4529, 0.0
  %v5730 = vadd.f32 %v5728, %v5729
  %v5731 = vsel %vm267, %v4586, 0.0
  %v5732 = vadd.f32 %v5730, %v5731
  %v5733 = vsel %vm267, %v4643, 0.0
  %v5734 = vadd.f32 %v5732, %v5733
  %v5735 = vsel %vm267, %v4700, 0.0
  %v5736 = vadd.f32 %v5734, %v5735
  %v5737 = vsel %vm267, %v4757, 0.0
  %v5738 = vadd.f32 %v5736, %v5737
  %v5739 = vsel %vm267, %v4814, 0.0
  %v5740 = vadd.f32 %v5738, %v5739
  %v5741 = vsel %vm267, %v4871, 0.0
  %v5742 = vadd.f32 %v5740, %v5741
  %v5743 = vsel %vm267, %v4928, 0.0
  %v5744 = vadd.f32 %v5742, %v5743
  %v5745 = vsel %vm267, %v4985, 0.0
  %v5746 = vadd.f32 %v5744, %v5745
  %v5747 = vsel %vm267, %v5042, 0.0
  %v5748 = vadd.f32 %v5746, %v5747
  %v5749 = vsel %vm267, %v5099, 0.0
  %v5750 = vadd.f32 %v5748, %v5749
  %v5751 = vsel %vm267, %v5156, 0.0
  %v5752 = vadd.f32 %v5750, %v5751
  %v5753 = vsel %vm267, %v5213, 0.0
  %v5754 = vadd.f32 %v5752, %v5753
  %v5755 = vsel %vm267, %v5270, 0.0
  %v5756 = vadd.f32 %v5754, %v5755
  %v5757 = vsel %vm267, %v5327, 0.0
  %v5758 = vadd.f32 %v5756, %v5757
  %v5759 = vsel %vm267, %v5384, 0.0
  %v5760 = vadd.f32 %v5758, %v5759
  %v5761 = vsel %vm267, %v5441, 0.0
  %v5762 = vadd.f32 %v5760, %v5761
  %v5763 = vsel %vm267, %v5498, 0.0
  %v5764 = vadd.f32 %v5762, %v5763
  %v5765 = vsel %vm267, %v5555, 0.0
  %v5766 = vadd.f32 %v5764, %v5765
  %v5767 = vsel %vm267, %v5612, 0.0
  %v5768 = vadd.f32 %v5766, %v5767
  %v5769 = vsel %vm267, %v5669, 0.0
  %v5770 = vadd.f32 %v5768, %v5769
  %v5771 = vld [vmem:[%s7] sm:$0x1]
  %v5773 = vlaneseq
  %v5774 = vshrl.u32 %v5773, 7
  %v5775 = vsub.s32 0, %v5774
  %v5776 = vrot.slane %v5771, %v5775
  %v5778 = vadd.f32 %v5770, %v5776
  %vm5779 = vcmp.gt.f32.partialorder %v5778, 0.0
  %v5780 = vmul.f32 %v5778, 0.001
  %v5781 = vsel %vm5779, %v5778, %v5780
  %v5782 = vpack.c.bf16 %v5781, %v5781
  %v5783 = vld [vmem:[%s8] sm:$0xf]
  %v5784 = vld [vmem:[%s8 + $0x4] sm:$0xf]
  %v5785 = vld [vmem:[%s8 + $0x8] sm:$0xf]
  %v5786 = vld [vmem:[%s8 + $0xc] sm:$0xf]
  %v5787 = vld [vmem:[%s8 + $0x10] sm:$0xf]
  %v5788 = vld [vmem:[%s8 + $0x14] sm:$0xf]
  %v5789 = vld [vmem:[%s8 + $0x18] sm:$0xf]
  %v5790 = vld [vmem:[%s8 + $0x1c] sm:$0xf]
  %v5791 = vld [vmem:[%s8 + $0x20] sm:$0xf]
  %v5792 = vld [vmem:[%s8 + $0x24] sm:$0xf]
  %v5793 = vld [vmem:[%s8 + $0x28] sm:$0xf]
  %v5794 = vld [vmem:[%s8 + $0x2c] sm:$0xf]
  %v5795 = vld [vmem:[%s8 + $0x30] sm:$0x3]
  %v5796 = vld [vmem:[%s9] sm:$0x1]
  %v5798 = vlaneseq
  %v5799 = vshrl.u32 %v5798, 7
  %v5800 = vsub.s32 0, %v5799
  %v5801 = vrot.slane %v5796, %v5800
  %v5816 = vunpack.c.l.b16 %v5783
  %v5817 = vunpack.c.l.b16 %v5784
  %v5818 = vunpack.c.l.b16 %v5785
  %v5819 = vunpack.c.l.b16 %v5786
  %v5820 = vunpack.c.l.b16 %v5787
  %v5821 = vunpack.c.l.b16 %v5788
  %v5822 = vunpack.c.l.b16 %v5789
  %v5823 = vunpack.c.l.b16 %v5790
  %v5824 = vunpack.c.l.b16 %v5791
  %v5825 = vunpack.c.l.b16 %v5792
  %v5826 = vunpack.c.l.b16 %v5793
  %v5827 = vunpack.c.l.b16 %v5794
  %v5828 = vunpack.c.l.b16 %v5795
  %v5829 = vpack.c.b16 %v5817, %v5816
  %v5830 = vpack.c.b16 %v5819, %v5818
  %v5831 = vpack.c.b16 %v5821, %v5820
  %v5832 = vpack.c.b16 %v5823, %v5822
  %v5833 = vpack.c.b16 %v5825, %v5824
  %v5834 = vpack.c.b16 %v5827, %v5826
  %v5835 = vpack.c.b16 %v5828, %v5828
  %v5843 = vsel %vm267, %v5782, 0
  %v5846 = vsel %vm343, %v5835, 0
  %5848 = vmatprep.subr.bf16.mxu0 0
  %5849 = vmatpush1.bf16.msra.mxu0 %v5829
  %5850 = vmatprep.subr.bf16.mxu0 0
  %5851 = vmatpush1.bf16.msra.mxu0 %v5830
  %5852 = vmatprep.subr.bf16.mxu0 0
  %5853 = vmatpush1.bf16.msra.mxu0 %v5831
  %5854 = vmatprep.subr.bf16.mxu0 0
  %5855 = vmatpush1.bf16.msra.mxu0 %v5832
  %5856 = vmatprep.subr.bf16.mxu0 0
  %5857 = vmatpush1.bf16.msra.mxu0 %v5833
  %5858 = vmatprep.subr.bf16.mxu0 0
  %5859 = vmatpush1.bf16.msra.mxu0 %v5834
  %5860 = vmatprep.subr.bf16.mxu0 0
  %5861 = vmatpush1.bf16.msra.mxu0 %v5846
  %5862 = vmatprep.subr.bf16.mxu0 0
  %5863 = vmatpush1.bf16.msra.mxu0 0
  %5864 = vmatprep.subr.bf16.mxu0 0
  %5865 = vmatpush1.bf16.msra.mxu0 0
  %5866 = vmatprep.subr.bf16.mxu0 0
  %5867 = vmatpush1.bf16.msra.mxu0 0
  %5868 = vmatprep.subr.bf16.mxu0 0
  %5869 = vmatpush1.bf16.msra.mxu0 0
  %5870 = vmatprep.subr.bf16.mxu0 0
  %5871 = vmatpush1.bf16.msra.mxu0 0
  %5872 = vmatprep.subr.bf16.mxu0 0
  %5873 = vmatpush1.bf16.msra.mxu0 0
  %5874 = vmatprep.subr.bf16.mxu0 0
  %5875 = vmatpush1.bf16.msra.mxu0 0
  %5876 = vmatprep.subr.bf16.mxu0 0
  %5877 = vmatpush1.bf16.msra.mxu0 0
  %5878 = vmatprep.subr.bf16.mxu0 0
  %5879 = vmatpush1.bf16.msra.mxu0 0
  %5880 = vmatprep.mubr.bf16.mxu0 0
  %5881 = vmatmul.mubr.bf16.gmra.mrb[0].mxu0 %v5843
  %v5882 = vpop.f32.mrb[0].mxu0
  %v5883 = vadd.f32 %v5801, %v5882
  %v5884 = vpop.f32.mrb[0].mxu0
  %v5885 = vpop.f32.mrb[0].mxu0
  %v5886 = vpop.f32.mrb[0].mxu0
  %5887 = vdwg.mxu0
  %vm5888 = vcmask 80896
  %v5889 = vsel %vm5888, %v5883, -inf
  %5890 = vmax.xlane.f32.xlu0 %v5889
  %v5891 = vpop.xlane.xlu0 %5890
  %v5892 = vsub.f32 %v5883, %v5891
  %v5893 = vmul.f32 %v5892, 1.442695
  %v5894 = vpow.pop %v5893
  %v5895 = vsel %vm5888, %v5894, 0.0
  %5896 = vadd.xlane.f32.xlu0 %v5895
  %v5897 = vpop.xlane.xlu0 %5896
  %v5898 = vrcp.pop %v5897
  %v5899 = vmul.f32 %v5894, %v5898
  %5900 = vst.msk [vmem:[%s10] sm:$0xff] %vm5888, %v5899
  // Predicated region
  $region42: #{simple_model_forward.1} parent=0 // pred_check
    _
  $region43: #{simple_model_forward.1} parent=0 // pred_check_branch
    %5902 = sbr.rel (0) target = $region45
  $region44: #{simple_model_forward.1} parent=0 // pred_region
    _
  $region45: #{simple_model_forward.1} parent=0 // pred_fallthru
    _
  // Predicated region
  $region46: #{simple_model_forward.1} parent=0 // pred_check
    _
  $region47: #{simple_model_forward.1} parent=0 // pred_check_branch
    %5904 = sbr.rel (0) target = $region49
  $region48: #{simple_model_forward.1} parent=0 // pred_region
    _
  $region49: #{simple_model_forward.1} parent=0 // pred_fallthru
    _

</llo_original>
